<compile_context>
chip_gen: v7x
topology: tpu7x:2x2x1
jax: 0.10.0
libtpu: 0.0.40
codegen_flags: <defaults>
</compile_context>

<pallas_src>
import functools

import jax
import jax.numpy as jnp
from jax.experimental import pallas as pl
from jax.experimental.pallas import tpu as pltpu


# ----------------------------------------------------------------------------
# Per-chip tiling / VMEM budget
# ----------------------------------------------------------------------------
def _tpu_vmem_bytes():
    try:
        info = pltpu.get_tpu_info()
        v = getattr(info, "vmem_capacity_bytes", None)
        if v:
            return int(v)
    except Exception:
        pass
    return 64 * 1024 * 1024          # conservative (v7x-sized) fallback


_PHYS_VMEM = _tpu_vmem_bytes()
if _PHYS_VMEM >= 100 * 1024 * 1024:  # v5e / v6e: 128 MiB physical VMEM
    _ROW_TILE = 512
    _VMEM_LIMIT = 64 * 1024 * 1024
else:                                # v7x-class: 64 MiB physical VMEM
    _ROW_TILE = 256
    _VMEM_LIMIT = 48 * 1024 * 1024


def _row_block(m):
    return m if m <= _ROW_TILE else _ROW_TILE


def _cparams(n_parallel):
    return pltpu.CompilerParams(
        dimension_semantics=("parallel",) * n_parallel,
        vmem_limit_bytes=_VMEM_LIMIT)


# ----------------------------------------------------------------------------
# In-kernel math helpers
# ----------------------------------------------------------------------------
_GELU_C = 0.7978845608028654          # sqrt(2/pi)


def _gelu(x):
    # tanh-approx GELU: ~7 VALU ops + 1 EUP tanh per element (vs ~20 VALU ops
    # for the erf polynomial).  Tiny deviation from torch's exact-erf GELU.
    return 0.5 * x * (1.0 + jnp.tanh(_GELU_C * (x + 0.044715 * (x * x * x))))


# ----------------------------------------------------------------------------
# Pallas kernels
# ----------------------------------------------------------------------------
def _linear_kernel(x_ref, w_ref, b_ref, o_ref):
    y = jnp.dot(x_ref[...].astype(jnp.bfloat16), w_ref[...],
                preferred_element_type=jnp.float32) + b_ref[...]
    o_ref[...] = y.astype(o_ref.dtype)


def pallas_linear(x, w, b, out_dtype=jnp.float32):
    M, K = x.shape
    N = w.shape[1]
    tm = _row_block(M)
    return pl.pallas_call(
        _linear_kernel,
        out_shape=jax.ShapeDtypeStruct((M, N), out_dtype),
        grid=(pl.cdiv(M, tm),),
        in_specs=[
            pl.BlockSpec((tm, K), lambda i: (i, 0)),
            pl.BlockSpec((K, N), lambda i: (0, 0)),
            pl.BlockSpec((1, N), lambda i: (0, 0)),
        ],
        out_specs=pl.BlockSpec((tm, N), lambda i: (i, 0)),
        compiler_params=_cparams(1),
    )(x, w, b.reshape(1, N))


def _ln_linear_kernel(x_ref, g_ref, bb_ref, w_ref, wb_ref, o_ref, *, eps):
    x = x_ref[...]                                     # f32 [tm, K]
    mu = jnp.mean(x, axis=-1, keepdims=True)
    xc = x - mu
    var = jnp.mean(xc * xc, axis=-1, keepdims=True)
    h = (xc * jax.lax.rsqrt(var + eps)) * g_ref[...] + bb_ref[...]
    y = jnp.dot(h.astype(jnp.bfloat16), w_ref[...],
                preferred_element_type=jnp.float32) + wb_ref[...]
    o_ref[...] = y.astype(o_ref.dtype)


def pallas_ln_linear(x, gamma, beta, w, b, eps=1e-6, out_dtype=jnp.float32):
    # NOTE: eps=1e-6 matches timm/DINO ViT LayerNorm (torch default is 1e-5).
    M, K = x.shape
    N = w.shape[1]
    tm = _row_block(M)
    return pl.pallas_call(
        functools.partial(_ln_linear_kernel, eps=eps),
        out_shape=jax.ShapeDtypeStruct((M, N), out_dtype),
        grid=(pl.cdiv(M, tm),),
        in_specs=[
            pl.BlockSpec((tm, K), lambda i: (i, 0)),
            pl.BlockSpec((1, K), lambda i: (0, 0)),
            pl.BlockSpec((1, K), lambda i: (0, 0)),
            pl.BlockSpec((K, N), lambda i: (0, 0)),
            pl.BlockSpec((1, N), lambda i: (0, 0)),
        ],
        out_specs=pl.BlockSpec((tm, N), lambda i: (i, 0)),
        compiler_params=_cparams(1),
    )(x, gamma.reshape(1, K), beta.reshape(1, K), w, b.reshape(1, N))


def _proj_res_ln_fc1_kernel(a_ref, res_ref, pw_ref, pb_ref, g_ref, bb_ref,
                            w1_ref, b1_ref, x_ref, h_ref, *, eps):
    # attn-out @ proj_w + proj_b, residual add (f32), LN2, FC1, GELU — fused.
    y = jnp.dot(a_ref[...].astype(jnp.bfloat16), pw_ref[...],
                preferred_element_type=jnp.float32) + pb_ref[...]
    xn = res_ref[...] + y                              # residual stream (f32)
    x_ref[...] = xn
    mu = jnp.mean(xn, axis=-1, keepdims=True)
    xc = xn - mu
    var = jnp.mean(xc * xc, axis=-1, keepdims=True)
    nrm = (xc * jax.lax.rsqrt(var + eps)) * g_ref[...] + bb_ref[...]
    hh = jnp.dot(nrm.astype(jnp.bfloat16), w1_ref[...],
                 preferred_element_type=jnp.float32) + b1_ref[...]
    h_ref[...] = _gelu(hh).astype(h_ref.dtype)         # bf16 writeback


def pallas_proj_res_ln_fc1(attn_out, res, pw, pb, gamma, beta, w1, b1,
                           eps=1e-6):
    M, D = res.shape
    H = w1.shape[1]
    tm = _row_block(M)
    row = lambda i: (i, 0)
    const = lambda i: (0, 0)
    return pl.pallas_call(
        functools.partial(_proj_res_ln_fc1_kernel, eps=eps),
        out_shape=(jax.ShapeDtypeStruct((M, D), jnp.float32),
                   jax.ShapeDtypeStruct((M, H), jnp.bfloat16)),
        grid=(pl.cdiv(M, tm),),
        in_specs=[
            pl.BlockSpec((tm, D), row),     # attention output (bf16)
            pl.BlockSpec((tm, D), row),     # residual stream (f32)
            pl.BlockSpec((D, D), const),    # proj_w
            pl.BlockSpec((1, D), const),    # proj_b
            pl.BlockSpec((1, D), const),    # ln2 gamma
            pl.BlockSpec((1, D), const),    # ln2 beta
            pl.BlockSpec((D, H), const),    # fc1_w
            pl.BlockSpec((1, H), const),    # fc1_b
        ],
        out_specs=(pl.BlockSpec((tm, D), row),
                   pl.BlockSpec((tm, H), row)),
        compiler_params=_cparams(1),
    )(attn_out, res, pw, pb.reshape(1, D), gamma.reshape(1, D),
      beta.reshape(1, D), w1, b1.reshape(1, H))


def _linear_residual_kernel(x_ref, res_ref, w_ref, b_ref, o_ref):
    y = jnp.dot(x_ref[...].astype(jnp.bfloat16), w_ref[...],
                preferred_element_type=jnp.float32) + b_ref[...]
    o_ref[...] = res_ref[...] + y          # residual add stays in f32


def pallas_linear_residual(x, res, w, b):
    M, K = x.shape
    N = w.shape[1]
    tm = _row_block(M)
    return pl.pallas_call(
        _linear_residual_kernel,
        out_shape=jax.ShapeDtypeStruct((M, N), jnp.float32),
        grid=(pl.cdiv(M, tm),),
        in_specs=[
            pl.BlockSpec((tm, K), lambda i: (i, 0)),
            pl.BlockSpec((tm, N), lambda i: (i, 0)),
            pl.BlockSpec((K, N), lambda i: (0, 0)),
            pl.BlockSpec((1, N), lambda i: (0, 0)),
        ],
        out_specs=pl.BlockSpec((tm, N), lambda i: (i, 0)),
        compiler_params=_cparams(1),
    )(x, res, w, b.reshape(1, N))


def _layernorm_kernel(x_ref, g_ref, b_ref, o_ref, *, eps):
    x = x_ref[...]
    mu = jnp.mean(x, axis=-1, keepdims=True)
    xc = x - mu
    var = jnp.mean(xc * xc, axis=-1, keepdims=True)
    o_ref[...] = xc * jax.lax.rsqrt(var + eps) * g_ref[...] + b_ref[...]


def pallas_layernorm(x, gamma, beta, eps=1e-6):
    M, D = x.shape
    tm = _row_block(M)
    return pl.pallas_call(
        functools.partial(_layernorm_kernel, eps=eps),
        out_shape=jax.ShapeDtypeStruct((M, D), jnp.float32),
        grid=(pl.cdiv(M, tm),),
        in_specs=[
            pl.BlockSpec((tm, D), lambda i: (i, 0)),
            pl.BlockSpec((1, D), lambda i: (0, 0)),
            pl.BlockSpec((1, D), lambda i: (0, 0)),
        ],
        out_specs=pl.BlockSpec((tm, D), lambda i: (i, 0)),
        compiler_params=_cparams(1),
    )(x, gamma.reshape(1, D), beta.reshape(1, D))


def _mha_body(qkv_ref, o_ref, a_ref, *, heads, scale):
    d3 = qkv_ref.shape[-1]
    d = d3 // 3
    hd = d // heads
    cls_acc = None
    for h in range(heads):
        # scale folded into q (S*hd multiplies instead of S^2 on the scores)
        q = qkv_ref[0, :, h * hd:(h + 1) * hd] * scale              # bf16
        k = qkv_ref[0, :, d + h * hd:d + (h + 1) * hd]              # bf16
        v = qkv_ref[0, :, 2 * d + h * hd:2 * d + (h + 1) * hd]      # bf16
        # q @ k^T via dot_general (no explicit in-VMEM transpose)
        s = jax.lax.dot_general(q, k, (((1,), (1,)), ((), ())),
                                preferred_element_type=jnp.float32)
        s = s - jnp.max(s, axis=-1, keepdims=True)
        e = jnp.exp(s)
        p = e * pl.reciprocal(jnp.sum(e, axis=-1, keepdims=True), approx=True)
        pv = jax.lax.dot_general(p.astype(jnp.bfloat16), v,
                                 (((1,), (0,)), ((), ())),
                                 preferred_element_type=jnp.float32)
        # store each head directly into its lane slice (no concat, no long
        # live ranges across heads)
        o_ref[0, :, h * hd:(h + 1) * hd] = pv.astype(o_ref.dtype)
        if a_ref is not None:
            row = p[0:1, 1:]                       # cls -> patch probs [1, N]
            cls_acc = row if cls_acc is None else cls_acc + row
    if a_ref is not None:
        a_ref[0] = cls_acc * (1.0 / heads)


def _mha_kernel(qkv_ref, o_ref, *, heads, scale):
    _mha_body(qkv_ref, o_ref, None, heads=heads, scale=scale)


def _mha_cls_kernel(qkv_ref, o_ref, a_ref, *, heads, scale):
    _mha_body(qkv_ref, o_ref, a_ref, heads=heads, scale=scale)


def pallas_attention(qkv, heads, scale, want_cls_attn=False):
    """qkv: [B, S, 3D] bf16 (straight from the fused LN+QKV matmul)."""
    B, S, D3 = qkv.shape
    D = D3 // 3
    N = S - 1
    in_specs = [pl.BlockSpec((1, S, D3), lambda b: (b, 0, 0))]
    o_spec = pl.BlockSpec((1, S, D), lambda b: (b, 0, 0))
    if want_cls_attn:
        out, cls_attn = pl.pallas_call(
            functools.partial(_mha_cls_kernel, heads=heads, scale=scale),
            out_shape=(jax.ShapeDtypeStruct((B, S, D), jnp.bfloat16),
                       jax.ShapeDtypeStruct((B, 1, N), jnp.float32)),
            grid=(B,),
            in_specs=in_specs,
            out_specs=(o_spec, pl.BlockSpec((1, 1, N), lambda b: (b, 0, 0))),
            compiler_params=_cparams(1),
        )(qkv)
        return out, cls_attn[:, 0, :]
    out = pl.pallas_call(
        functools.partial(_mha_kernel, heads=heads, scale=scale),
        out_shape=jax.ShapeDtypeStruct((B, S, D), jnp.bfloat16),
        grid=(B,),
        in_specs=in_specs,
        out_specs=o_spec,
        compiler_params=_cparams(1),
    )(qkv)
    return out, None


def _dino_head_kernel(x_ref, w1_ref, b1_ref, w2_ref, b2_ref, w3_ref, b3_ref,
                      lw_ref, proj_ref, logit_ref):
    x = x_ref[...]                                                  # f32 [tm, D]
    h = _gelu(jnp.dot(x.astype(jnp.bfloat16), w1_ref[...],
                      preferred_element_type=jnp.float32) + b1_ref[...])
    h = _gelu(jnp.dot(h.astype(jnp.bfloat16), w2_ref[...],
                      preferred_element_type=jnp.float32) + b2_ref[...])
    proj_ref[...] = jnp.dot(h.astype(jnp.bfloat16), w3_ref[...],
                            preferred_element_type=jnp.float32) + b3_ref[...]
    # logits = weight_norm(g=1) linear applied to l2-normalized input feature
    nrm = jnp.sqrt(jnp.sum(x * x, axis=-1, keepdims=True))
    xn = x / jnp.maximum(nrm, 1e-12)
    logit_ref[...] = jnp.dot(xn.astype(jnp.bfloat16), lw_ref[...],
                             preferred_element_type=jnp.float32)


def pallas_dino_head(x, head):
    M, D = x.shape
    hh = head["w1"].shape[1]
    hb = head["w3"].shape[1]
    nc = head["last_w"].shape[1]
    tm = _row_block(M)
    row = lambda i: (i, 0)
    const = lambda i: (0, 0)
    return pl.pallas_call(
        _dino_head_kernel,
        out_shape=(jax.ShapeDtypeStruct((M, hb), jnp.float32),
                   jax.ShapeDtypeStruct((M, nc), jnp.float32)),
        grid=(pl.cdiv(M, tm),),
        in_specs=[
            pl.BlockSpec((tm, D), row),
            pl.BlockSpec((D, hh), const), pl.BlockSpec((1, hh), const),
            pl.BlockSpec((hh, hh), const), pl.BlockSpec((1, hh), const),
            pl.BlockSpec((hh, hb), const), pl.BlockSpec((1, hb), const),
            pl.BlockSpec((D, nc), const),
        ],
        out_specs=(pl.BlockSpec((tm, hb), row),
                   pl.BlockSpec((tm, nc), row)),
        compiler_params=_cparams(1),
    )(x, head["w1"], head["b1"].reshape(1, hh),
      head["w2"], head["b2"].reshape(1, hh),
      head["w3"], head["b3"].reshape(1, hb),
      head["last_w"])


# ----------------------------------------------------------------------------
# Model glue (plain JAX: reshapes / parameter plumbing only)
# ----------------------------------------------------------------------------
def patch_embed(backbone, cfg, mixture):
    B, C, H, W = mixture.shape
    P = cfg["patch_size"]
    Hp, Wp = H // P, W // P
    # NCHW -> [B*N, C*P*P]; flatten order (c, p, q) matches conv weight layout.
    # TODO(synk): this XLA re-tiling transpose is one extra HBM pass over the
    # image batch; a Pallas-side re-tile needs P to be sublane-aligned (P>=8).
    x = mixture.reshape(B, C, Hp, P, Wp, P)
    x = x.transpose(0, 2, 4, 1, 3, 5).reshape(B * Hp * Wp, C * P * P)
    tok = pallas_linear(x, backbone["patch_w"], backbone["patch_b"])
    return tok.reshape(B, Hp * Wp, -1)


def backbone_forward_features(backbone, cfg, tokens):
    # tokens: [B, N, D] (already patch-embedded -> the `patch=True` path)
    B, N, D = tokens.shape
    heads = cfg["num_heads"]
    hd = D // heads
    scale = hd ** -0.5
    cls = jnp.broadcast_to(backbone["cls_token"], (B, 1, D))
    x = jnp.concatenate([cls, tokens], axis=1) + backbone["pos_embed"]
    S = N + 1
    x = x.reshape(B * S, D)

    mixed_attn = None
    n_blocks = len(backbone["blocks"])
    for li, blk in enumerate(backbone["blocks"]):
        # fused LN1 + QKV projection (bf16 output halves HBM traffic)
        qkv = pallas_ln_linear(x, blk["ln1_g"], blk["ln1_b"],
                               blk["qkv_w"], blk["qkv_b"],
                               out_dtype=jnp.bfloat16)              # [B*S, 3D]
        # multi-head attention reading qkv directly (no host transpose);
        # only the last block emits the head-averaged cls->patch row
        attn_out, cls_attn = pallas_attention(
            qkv.reshape(B, S, 3 * D), heads, scale,
            want_cls_attn=(li == n_blocks - 1))
        # fused: attn-proj + residual add + LN2 + FC1 + GELU
        x, h = pallas_proj_res_ln_fc1(
            attn_out.reshape(B * S, D), x,
            blk["proj_w"], blk["proj_b"],
            blk["ln2_g"], blk["ln2_b"],
            blk["fc1_w"], blk["fc1_b"])
        # FC2 fused with the residual add (h is bf16)
        x = pallas_linear_residual(h, x, blk["fc2_w"], blk["fc2_b"])
        if cls_attn is not None:
            mixed_attn = cls_attn

    # Final LayerNorm is per-row: apply it only to the CLS rows.
    cls_feats = x.reshape(B, S, D)[:, 0]                            # [B, D]
    feats = pallas_layernorm(cls_feats, backbone["ln_f_g"], backbone["ln_f_b"])
    return feats, mixed_attn


def dino_head_forward(head, x):
    # x_proj = mlp(x);  logits = weight_norm_linear(l2_normalize(x))
    return pallas_dino_head(x, head)


def pmtrans_forward(cfg, params, mixture):
    """Eval-mode PMTrans.forward -> (student_proj, student_out)."""
    tokens = patch_embed(params["backbone"], cfg, mixture)
    feats, _mixed_attn = backbone_forward_features(params["backbone"], cfg,
                                                   tokens)
    student_proj, student_out = dino_head_forward(params["sem_head"], feats)
    return student_proj, student_out


# ----------------------------------------------------------------------------
# Deterministic parameter initialisation (synthetic "vit-small-ish" + DINOHead)
# ----------------------------------------------------------------------------
def init_params(key, cfg):
    C, P, D = cfg["in_chans"], cfg["patch_size"], cfg["embed_dim"]
    N = (cfg["img_size"] // P) ** 2
    S = N + 1
    depth = cfg["depth"]
    mlp_hidden = cfg["mlp_hidden"]
    hh, hb, nc = cfg["head_hidden"], cfg["head_bottleneck"], cfg["num_classes"]

    def nrm(k, shape, std=0.02):
        return (std * jax.random.normal(k, shape)).astype(jnp.float32)

    keys = iter(jax.random.split(key, 16 + 8 * depth))

    # conv weight [D, C, P, P] flattened (c,p,q) -> [C*P*P, D] (bf16 MXU weight)
    patch_w = nrm(next(keys), (D, C * P * P)).T
    backbone = {
        "patch_w": patch_w.astype(jnp.bfloat16),
        "patch_b": jnp.zeros((D,), jnp.float32),
        "cls_token": nrm(next(keys), (1, 1, D)),
        "pos_embed": nrm(next(keys), (1, S, D)),
        "ln_f_g": jnp.ones((D,), jnp.float32),
        "ln_f_b": jnp.zeros((D,), jnp.float32),
        "blocks": [],
    }
    for _ in range(depth):
        backbone["blocks"].append({
            "ln1_g": jnp.ones((D,), jnp.float32),
            "ln1_b": jnp.zeros((D,), jnp.float32),
            "qkv_w": nrm(next(keys), (D, 3 * D)).astype(jnp.bfloat16),
            "qkv_b": jnp.zeros((3 * D,), jnp.float32),
            "proj_w": nrm(next(keys), (D, D)).astype(jnp.bfloat16),
            "proj_b": jnp.zeros((D,), jnp.float32),
            "ln2_g": jnp.ones((D,), jnp.float32),
            "ln2_b": jnp.zeros((D,), jnp.float32),
            "fc1_w": nrm(next(keys), (D, mlp_hidden)).astype(jnp.bfloat16),
            "fc1_b": jnp.zeros((mlp_hidden,), jnp.float32),
            "fc2_w": nrm(next(keys), (mlp_hidden, D)).astype(jnp.bfloat16),
            "fc2_b": jnp.zeros((D,), jnp.float32),
        })

    # DINOHead: 3-layer MLP (in->hidden, hidden->hidden, hidden->bottleneck),
    # plus weight-normed last layer (in_dim -> num_classes, weight_g == 1).
    last_v = nrm(next(keys), (nc, D))                               # [out, in]
    last_v = last_v / jnp.maximum(
        jnp.sqrt(jnp.sum(last_v * last_v, axis=1, keepdims=True)), 1e-12)
    sem_head = {
        "w1": nrm(next(keys), (D, hh)).astype(jnp.bfloat16),
        "b1": jnp.zeros((hh,), jnp.float32),
        "w2": nrm(next(keys), (hh, hh)).astype(jnp.bfloat16),
        "b2": jnp.zeros((hh,), jnp.float32),
        "w3": nrm(next(keys), (hh, hb)).astype(jnp.bfloat16),
        "b3": jnp.zeros((hb,), jnp.float32),
        "last_w": last_v.T.astype(jnp.bfloat16),                    # [in, out]
    }

    # PMTrans scalar parameters (only used by the training branch).
    extras = {
        "s_dist_alpha": jnp.array([1.0], jnp.float32),
        "s_dist_beta": jnp.array([1.0], jnp.float32),
        "super_ratio": jnp.array([-2.0], jnp.float32),
        "unsuper_ratio": jnp.array([-2.0], jnp.float32),
    }
    return {"backbone": backbone, "sem_head": sem_head, "extras": extras}


# ----------------------------------------------------------------------------
if __name__ == "__main__":
    cfg = dict(
        img_size=16, patch_size=4, in_chans=3,
        embed_dim=32, depth=2, num_heads=4, mlp_hidden=128,
        head_hidden=48, head_bottleneck=24, num_classes=10,
    )
    key = jax.random.PRNGKey(0)
    kp, kx = jax.random.split(key)
    params = init_params(kp, cfg)
    mixture = jax.random.normal(kx, (2, cfg["in_chans"], cfg["img_size"],
                                     cfg["img_size"]), jnp.float32)  # NCHW

    fwd = jax.jit(functools.partial(pmtrans_forward, cfg))
    student_proj, student_out = fwd(params, mixture)
    jax.block_until_ready((student_proj, student_out))
    assert student_proj.shape == (2, cfg["head_bottleneck"])
    assert student_out.shape == (2, cfg["num_classes"])
    assert bool(jnp.all(jnp.isfinite(student_proj))) and bool(
        jnp.all(jnp.isfinite(student_out)))
    print("KERNEL_OK")
</pallas_src>

<mosaic_0001>
module attributes {stable_mosaic.version = 11 : i64} {
  func.func @_linear_kernel(%arg0: i32, %arg1: memref<32x48xf32, #tpu.memory_space<vmem>>, %arg2: memref<48x32xbf16, #tpu.memory_space<vmem>>, %arg3: memref<1x32xf32, #tpu.memory_space<vmem>>, %arg4: memref<32x32xf32, #tpu.memory_space<vmem>>) attributes {dimension_semantics = [#tpu.dimension_semantics<parallel>], iteration_bounds = array<i64: 1>, scalar_prefetch = 0 : i64, scratch_operands = 0 : i64, tpu.core_type = #tpu.core_type<tc>, window_params = [{transform_indices = @transform_0, window_bounds = array<i64: 32, 48>}, {pipeline_mode = #tpu.pipeline_mode<synchronous>, transform_indices = @transform_1, window_bounds = array<i64: 48, 32>}, {pipeline_mode = #tpu.pipeline_mode<synchronous>, transform_indices = @transform_2, window_bounds = array<i64: 1, 32>}, {transform_indices = @transform_3, window_bounds = array<i64: 32, 32>}]} {
    %c0 = arith.constant 0 : index
    %c0_0 = arith.constant 0 : index
    %0 = vector.load %arg1[%c0, %c0_0] : memref<32x48xf32, #tpu.memory_space<vmem>>, vector<32x48xf32>
    %1 = arith.truncf %0 : vector<32x48xf32> to vector<32x48xbf16>
    %c0_1 = arith.constant 0 : index
    %c0_2 = arith.constant 0 : index
    %2 = vector.load %arg2[%c0_1, %c0_2] : memref<48x32xbf16, #tpu.memory_space<vmem>>, vector<48x32xbf16>
    %cst = arith.constant dense<0.000000e+00> : vector<32x32xf32>
    %3 = tpu.matmul %1, %2, %cst {dimension_numbers = #tpu.dot_dimension_numbers<[1], [0], [0], [1], [0, 0, 1, 1], [], []>} : vector<32x48xbf16>, vector<48x32xbf16>, vector<32x32xf32> -> vector<32x32xf32>
    %c0_3 = arith.constant 0 : index
    %c0_4 = arith.constant 0 : index
    %4 = vector.load %arg3[%c0_3, %c0_4] : memref<1x32xf32, #tpu.memory_space<vmem>>, vector<1x32xf32>
    %5 = vector.broadcast %4 : vector<1x32xf32> to vector<32x32xf32>
    %6 = arith.addf %3, %5 : vector<32x32xf32>
    %c0_5 = arith.constant 0 : index
    %c0_6 = arith.constant 0 : index
    %7 = vector.load %arg4[%c0_5, %c0_6] : memref<32x32xf32, #tpu.memory_space<vmem>>, vector<32x32xf32>
    tpu.vector_store %arg4[%c0_5, %c0_6], %6 {strides = array<i32>} : memref<32x32xf32, #tpu.memory_space<vmem>>, vector<32x32xf32>,
    return
  }
  func.func @transform_0(%arg0: i32) -> (i32, i32) {
    %c0_i32 = arith.constant 0 : i32
    %c0_i32_0 = arith.constant 0 : i32
    return %arg0, %c0_i32 : i32, i32
  }
  func.func @transform_1(%arg0: i32) -> (i32, i32) {
    %c0_i32 = arith.constant 0 : i32
    %c0_i32_0 = arith.constant 0 : i32
    %c0_i32_1 = arith.constant 0 : i32
    return %c0_i32, %c0_i32_0 : i32, i32
  }
  func.func @transform_2(%arg0: i32) -> (i32, i32) {
    %c0_i32 = arith.constant 0 : i32
    %c0_i32_0 = arith.constant 0 : i32
    %c0_i32_1 = arith.constant 0 : i32
    return %c0_i32, %c0_i32_0 : i32, i32
  }
  func.func @transform_3(%arg0: i32) -> (i32, i32) {
    %c0_i32 = arith.constant 0 : i32
    %c0_i32_0 = arith.constant 0 : i32
    return %arg0, %c0_i32 : i32, i32
  }
}

module attributes {stable_mosaic.version = 11 : i64} {
  func.func @_mha_kernel(%arg0: i32, %arg1: memref<1x17x96xbf16, #tpu.memory_space<vmem>>, %arg2: memref<1x17x32xbf16, #tpu.memory_space<vmem>>) attributes {dimension_semantics = [#tpu.dimension_semantics<parallel>], iteration_bounds = array<i64: 2>, scalar_prefetch = 0 : i64, scratch_operands = 0 : i64, tpu.core_type = #tpu.core_type<tc>, window_params = [{transform_indices = @transform_0, window_bounds = array<i64: 1, 17, 96>}, {transform_indices = @transform_1, window_bounds = array<i64: 1, 17, 32>}]} {
    %c0 = arith.constant 0 : index
    %c0_0 = arith.constant 0 : index
    %c0_1 = arith.constant 0 : index
    %0 = vector.load %arg1[%c0, %c0_0, %c0_1] : memref<1x17x96xbf16, #tpu.memory_space<vmem>>, vector<1x17x8xbf16>
    %1 = vector.shape_cast %0 : vector<1x17x8xbf16> to vector<17x8xbf16>
    %cst = arith.constant 3.535160e-01 : bf16
    %2 = vector.broadcast %cst : bf16 to vector<17x8xbf16>
    %3 = arith.mulf %1, %2 : vector<17x8xbf16>
    %c0_2 = arith.constant 0 : index
    %c0_3 = arith.constant 0 : index
    %c32 = arith.constant 32 : index
    %4 = vector.load %arg1[%c0_2, %c0_3, %c32] : memref<1x17x96xbf16, #tpu.memory_space<vmem>>, vector<1x17x8xbf16>
    %5 = vector.shape_cast %4 : vector<1x17x8xbf16> to vector<17x8xbf16>
    %c0_4 = arith.constant 0 : index
    %c0_5 = arith.constant 0 : index
    %c64 = arith.constant 64 : index
    %6 = vector.load %arg1[%c0_4, %c0_5, %c64] : memref<1x17x96xbf16, #tpu.memory_space<vmem>>, vector<1x17x8xbf16>
    %7 = vector.shape_cast %6 : vector<1x17x8xbf16> to vector<17x8xbf16>
    %cst_6 = arith.constant dense<0.000000e+00> : vector<17x17xf32>
    %8 = tpu.matmul %3, %5, %cst_6 {dimension_numbers = #tpu.dot_dimension_numbers<[1], [1], [0], [0], [0, 0, 1, 0], [], []>} : vector<17x8xbf16>, vector<17x8xbf16>, vector<17x17xf32> -> vector<17x17xf32>
    %cst_7 = arith.constant dense<0xFF800000> : vector<17xf32>
    %9 = vector.multi_reduction <maximumf>, %8, %cst_7 [1] : vector<17x17xf32> to vector<17xf32>
    %10 = vector.shape_cast %9 : vector<17xf32> to vector<17x1xf32>
    %11 = vector.broadcast %10 : vector<17x1xf32> to vector<17x17xf32>
    %12 = arith.subf %8, %11 : vector<17x17xf32>
    %13 = math.exp %12 : vector<17x17xf32>
    %cst_8 = arith.constant dense<0.000000e+00> : vector<17xf32>
    %14 = vector.multi_reduction <add>, %13, %cst_8 [1] : vector<17x17xf32> to vector<17xf32>
    %15 = vector.shape_cast %14 : vector<17xf32> to vector<17x1xf32>
    %16 = tpu.reciprocal %15 {approx = true} : vector<17x1xf32> -> vector<17x1xf32>
    %17 = vector.broadcast %16 : vector<17x1xf32> to vector<17x17xf32>
    %18 = arith.mulf %13, %17 : vector<17x17xf32>
    %19 = arith.truncf %18 : vector<17x17xf32> to vector<17x17xbf16>
    %cst_9 = arith.constant dense<0.000000e+00> : vector<17x8xf32>
    %20 = tpu.matmul %19, %7, %cst_9 {dimension_numbers = #tpu.dot_dimension_numbers<[1], [0], [0], [1], [0, 0, 1, 1], [], []>} : vector<17x17xbf16>, vector<17x8xbf16>, vector<17x8xf32> -> vector<17x8xf32>
    %21 = arith.truncf %20 : vector<17x8xf32> to vector<17x8xbf16>
    %c0_10 = arith.constant 0 : index
    %c0_11 = arith.constant 0 : index
    %c0_12 = arith.constant 0 : index
    %22 = vector.load %arg2[%c0_10, %c0_11, %c0_12] : memref<1x17x32xbf16, #tpu.memory_space<vmem>>, vector<1x17x8xbf16>
    %23 = vector.shape_cast %22 : vector<1x17x8xbf16> to vector<17x8xbf16>
    %24 = vector.shape_cast %21 : vector<17x8xbf16> to vector<1x17x8xbf16>
    tpu.vector_store %arg2[%c0_10, %c0_11, %c0_12], %24 {strides = array<i32>} : memref<1x17x32xbf16, #tpu.memory_space<vmem>>, vector<1x17x8xbf16>,
    %c0_13 = arith.constant 0 : index
    %c0_14 = arith.constant 0 : index
    %c8 = arith.constant 8 : index
    %25 = vector.load %arg1[%c0_13, %c0_14, %c8] : memref<1x17x96xbf16, #tpu.memory_space<vmem>>, vector<1x17x8xbf16>
    %26 = vector.shape_cast %25 : vector<1x17x8xbf16> to vector<17x8xbf16>
    %cst_15 = arith.constant 3.535160e-01 : bf16
    %27 = vector.broadcast %cst_15 : bf16 to vector<17x8xbf16>
    %28 = arith.mulf %26, %27 : vector<17x8xbf16>
    %c0_16 = arith.constant 0 : index
    %c0_17 = arith.constant 0 : index
    %c40 = arith.constant 40 : index
    %29 = vector.load %arg1[%c0_16, %c0_17, %c40] : memref<1x17x96xbf16, #tpu.memory_space<vmem>>, vector<1x17x8xbf16>
    %30 = vector.shape_cast %29 : vector<1x17x8xbf16> to vector<17x8xbf16>
    %c0_18 = arith.constant 0 : index
    %c0_19 = arith.constant 0 : index
    %c72 = arith.constant 72 : index
    %31 = vector.load %arg1[%c0_18, %c0_19, %c72] : memref<1x17x96xbf16, #tpu.memory_space<vmem>>, vector<1x17x8xbf16>
    %32 = vector.shape_cast %31 : vector<1x17x8xbf16> to vector<17x8xbf16>
    %cst_20 = arith.constant dense<0.000000e+00> : vector<17x17xf32>
    %33 = tpu.matmul %28, %30, %cst_20 {dimension_numbers = #tpu.dot_dimension_numbers<[1], [1], [0], [0], [0, 0, 1, 0], [], []>} : vector<17x8xbf16>, vector<17x8xbf16>, vector<17x17xf32> -> vector<17x17xf32>
    %cst_21 = arith.constant dense<0xFF800000> : vector<17xf32>
    %34 = vector.multi_reduction <maximumf>, %33, %cst_21 [1] : vector<17x17xf32> to vector<17xf32>
    %35 = vector.shape_cast %34 : vector<17xf32> to vector<17x1xf32>
    %36 = vector.broadcast %35 : vector<17x1xf32> to vector<17x17xf32>
    %37 = arith.subf %33, %36 : vector<17x17xf32>
    %38 = math.exp %37 : vector<17x17xf32>
    %cst_22 = arith.constant dense<0.000000e+00> : vector<17xf32>
    %39 = vector.multi_reduction <add>, %38, %cst_22 [1] : vector<17x17xf32> to vector<17xf32>
    %40 = vector.shape_cast %39 : vector<17xf32> to vector<17x1xf32>
    %41 = tpu.reciprocal %40 {approx = true} : vector<17x1xf32> -> vector<17x1xf32>
    %42 = vector.broadcast %41 : vector<17x1xf32> to vector<17x17xf32>
    %43 = arith.mulf %38, %42 : vector<17x17xf32>
    %44 = arith.truncf %43 : vector<17x17xf32> to vector<17x17xbf16>
    %cst_23 = arith.constant dense<0.000000e+00> : vector<17x8xf32>
    %45 = tpu.matmul %44, %32, %cst_23 {dimension_numbers = #tpu.dot_dimension_numbers<[1], [0], [0], [1], [0, 0, 1, 1], [], []>} : vector<17x17xbf16>, vector<17x8xbf16>, vector<17x8xf32> -> vector<17x8xf32>
    %46 = arith.truncf %45 : vector<17x8xf32> to vector<17x8xbf16>
    %c0_24 = arith.constant 0 : index
    %c0_25 = arith.constant 0 : index
    %c8_26 = arith.constant 8 : index
    %47 = vector.load %arg2[%c0_24, %c0_25, %c8_26] : memref<1x17x32xbf16, #tpu.memory_space<vmem>>, vector<1x17x8xbf16>
    %48 = vector.shape_cast %47 : vector<1x17x8xbf16> to vector<17x8xbf16>
    %49 = vector.shape_cast %46 : vector<17x8xbf16> to vector<1x17x8xbf16>
    tpu.vector_store %arg2[%c0_24, %c0_25, %c8_26], %49 {strides = array<i32>} : memref<1x17x32xbf16, #tpu.memory_space<vmem>>, vector<1x17x8xbf16>,
    %c0_27 = arith.constant 0 : index
    %c0_28 = arith.constant 0 : index
    %c16 = arith.constant 16 : index
    %50 = vector.load %arg1[%c0_27, %c0_28, %c16] : memref<1x17x96xbf16, #tpu.memory_space<vmem>>, vector<1x17x8xbf16>
    %51 = vector.shape_cast %50 : vector<1x17x8xbf16> to vector<17x8xbf16>
    %cst_29 = arith.constant 3.535160e-01 : bf16
    %52 = vector.broadcast %cst_29 : bf16 to vector<17x8xbf16>
    %53 = arith.mulf %51, %52 : vector<17x8xbf16>
    %c0_30 = arith.constant 0 : index
    %c0_31 = arith.constant 0 : index
    %c48 = arith.constant 48 : index
    %54 = vector.load %arg1[%c0_30, %c0_31, %c48] : memref<1x17x96xbf16, #tpu.memory_space<vmem>>, vector<1x17x8xbf16>
    %55 = vector.shape_cast %54 : vector<1x17x8xbf16> to vector<17x8xbf16>
    %c0_32 = arith.constant 0 : index
    %c0_33 = arith.constant 0 : index
    %c80 = arith.constant 80 : index
    %56 = vector.load %arg1[%c0_32, %c0_33, %c80] : memref<1x17x96xbf16, #tpu.memory_space<vmem>>, vector<1x17x8xbf16>
    %57 = vector.shape_cast %56 : vector<1x17x8xbf16> to vector<17x8xbf16>
    %cst_34 = arith.constant dense<0.000000e+00> : vector<17x17xf32>
    %58 = tpu.matmul %53, %55, %cst_34 {dimension_numbers = #tpu.dot_dimension_numbers<[1], [1], [0], [0], [0, 0, 1, 0], [], []>} : vector<17x8xbf16>, vector<17x8xbf16>, vector<17x17xf32> -> vector<17x17xf32>
    %cst_35 = arith.constant dense<0xFF800000> : vector<17xf32>
    %59 = vector.multi_reduction <maximumf>, %58, %cst_35 [1] : vector<17x17xf32> to vector<17xf32>
    %60 = vector.shape_cast %59 : vector<17xf32> to vector<17x1xf32>
    %61 = vector.broadcast %60 : vector<17x1xf32> to vector<17x17xf32>
    %62 = arith.subf %58, %61 : vector<17x17xf32>
    %63 = math.exp %62 : vector<17x17xf32>
    %cst_36 = arith.constant dense<0.000000e+00> : vector<17xf32>
    %64 = vector.multi_reduction <add>, %63, %cst_36 [1] : vector<17x17xf32> to vector<17xf32>
    %65 = vector.shape_cast %64 : vector<17xf32> to vector<17x1xf32>
    %66 = tpu.reciprocal %65 {approx = true} : vector<17x1xf32> -> vector<17x1xf32>
    %67 = vector.broadcast %66 : vector<17x1xf32> to vector<17x17xf32>
    %68 = arith.mulf %63, %67 : vector<17x17xf32>
    %69 = arith.truncf %68 : vector<17x17xf32> to vector<17x17xbf16>
    %cst_37 = arith.constant dense<0.000000e+00> : vector<17x8xf32>
    %70 = tpu.matmul %69, %57, %cst_37 {dimension_numbers = #tpu.dot_dimension_numbers<[1], [0], [0], [1], [0, 0, 1, 1], [], []>} : vector<17x17xbf16>, vector<17x8xbf16>, vector<17x8xf32> -> vector<17x8xf32>
    %71 = arith.truncf %70 : vector<17x8xf32> to vector<17x8xbf16>
    %c0_38 = arith.constant 0 : index
    %c0_39 = arith.constant 0 : index
    %c16_40 = arith.constant 16 : index
    %72 = vector.load %arg2[%c0_38, %c0_39, %c16_40] : memref<1x17x32xbf16, #tpu.memory_space<vmem>>, vector<1x17x8xbf16>
    %73 = vector.shape_cast %72 : vector<1x17x8xbf16> to vector<17x8xbf16>
    %74 = vector.shape_cast %71 : vector<17x8xbf16> to vector<1x17x8xbf16>
    tpu.vector_store %arg2[%c0_38, %c0_39, %c16_40], %74 {strides = array<i32>} : memref<1x17x32xbf16, #tpu.memory_space<vmem>>, vector<1x17x8xbf16>,
    %c0_41 = arith.constant 0 : index
    %c0_42 = arith.constant 0 : index
    %c24 = arith.constant 24 : index
    %75 = vector.load %arg1[%c0_41, %c0_42, %c24] : memref<1x17x96xbf16, #tpu.memory_space<vmem>>, vector<1x17x8xbf16>
    %76 = vector.shape_cast %75 : vector<1x17x8xbf16> to vector<17x8xbf16>
    %cst_43 = arith.constant 3.535160e-01 : bf16
    %77 = vector.broadcast %cst_43 : bf16 to vector<17x8xbf16>
    %78 = arith.mulf %76, %77 : vector<17x8xbf16>
    %c0_44 = arith.constant 0 : index
    %c0_45 = arith.constant 0 : index
    %c56 = arith.constant 56 : index
    %79 = vector.load %arg1[%c0_44, %c0_45, %c56] : memref<1x17x96xbf16, #tpu.memory_space<vmem>>, vector<1x17x8xbf16>
    %80 = vector.shape_cast %79 : vector<1x17x8xbf16> to vector<17x8xbf16>
    %c0_46 = arith.constant 0 : index
    %c0_47 = arith.constant 0 : index
    %c88 = arith.constant 88 : index
    %81 = vector.load %arg1[%c0_46, %c0_47, %c88] : memref<1x17x96xbf16, #tpu.memory_space<vmem>>, vector<1x17x8xbf16>
    %82 = vector.shape_cast %81 : vector<1x17x8xbf16> to vector<17x8xbf16>
    %cst_48 = arith.constant dense<0.000000e+00> : vector<17x17xf32>
    %83 = tpu.matmul %78, %80, %cst_48 {dimension_numbers = #tpu.dot_dimension_numbers<[1], [1], [0], [0], [0, 0, 1, 0], [], []>} : vector<17x8xbf16>, vector<17x8xbf16>, vector<17x17xf32> -> vector<17x17xf32>
    %cst_49 = arith.constant dense<0xFF800000> : vector<17xf32>
    %84 = vector.multi_reduction <maximumf>, %83, %cst_49 [1] : vector<17x17xf32> to vector<17xf32>
    %85 = vector.shape_cast %84 : vector<17xf32> to vector<17x1xf32>
    %86 = vector.broadcast %85 : vector<17x1xf32> to vector<17x17xf32>
    %87 = arith.subf %83, %86 : vector<17x17xf32>
    %88 = math.exp %87 : vector<17x17xf32>
    %cst_50 = arith.constant dense<0.000000e+00> : vector<17xf32>
    %89 = vector.multi_reduction <add>, %88, %cst_50 [1] : vector<17x17xf32> to vector<17xf32>
    %90 = vector.shape_cast %89 : vector<17xf32> to vector<17x1xf32>
    %91 = tpu.reciprocal %90 {approx = true} : vector<17x1xf32> -> vector<17x1xf32>
    %92 = vector.broadcast %91 : vector<17x1xf32> to vector<17x17xf32>
    %93 = arith.mulf %88, %92 : vector<17x17xf32>
    %94 = arith.truncf %93 : vector<17x17xf32> to vector<17x17xbf16>
    %cst_51 = arith.constant dense<0.000000e+00> : vector<17x8xf32>
    %95 = tpu.matmul %94, %82, %cst_51 {dimension_numbers = #tpu.dot_dimension_numbers<[1], [0], [0], [1], [0, 0, 1, 1], [], []>} : vector<17x17xbf16>, vector<17x8xbf16>, vector<17x8xf32> -> vector<17x8xf32>
    %96 = arith.truncf %95 : vector<17x8xf32> to vector<17x8xbf16>
    %c0_52 = arith.constant 0 : index
    %c0_53 = arith.constant 0 : index
    %c24_54 = arith.constant 24 : index
    %97 = vector.load %arg2[%c0_52, %c0_53, %c24_54] : memref<1x17x32xbf16, #tpu.memory_space<vmem>>, vector<1x17x8xbf16>
    %98 = vector.shape_cast %97 : vector<1x17x8xbf16> to vector<17x8xbf16>
    %99 = vector.shape_cast %96 : vector<17x8xbf16> to vector<1x17x8xbf16>
    tpu.vector_store %arg2[%c0_52, %c0_53, %c24_54], %99 {strides = array<i32>} : memref<1x17x32xbf16, #tpu.memory_space<vmem>>, vector<1x17x8xbf16>,
    return
  }
  func.func @transform_0(%arg0: i32) -> (i32, i32, i32) {
    %c0_i32 = arith.constant 0 : i32
    %c0_i32_0 = arith.constant 0 : i32
    %c0_i32_1 = arith.constant 0 : i32
    return %arg0, %c0_i32, %c0_i32_0 : i32, i32, i32
  }
  func.func @transform_1(%arg0: i32) -> (i32, i32, i32) {
    %c0_i32 = arith.constant 0 : i32
    %c0_i32_0 = arith.constant 0 : i32
    %c0_i32_1 = arith.constant 0 : i32
    return %arg0, %c0_i32, %c0_i32_0 : i32, i32, i32
  }
}

module attributes {stable_mosaic.version = 11 : i64} {
  func.func @_ln_linear_kernel(%arg0: i32, %arg1: memref<34x32xf32, #tpu.memory_space<vmem>>, %arg2: memref<1x32xf32, #tpu.memory_space<vmem>>, %arg3: memref<1x32xf32, #tpu.memory_space<vmem>>, %arg4: memref<32x96xbf16, #tpu.memory_space<vmem>>, %arg5: memref<1x96xf32, #tpu.memory_space<vmem>>, %arg6: memref<34x96xbf16, #tpu.memory_space<vmem>>) attributes {dimension_semantics = [#tpu.dimension_semantics<parallel>], iteration_bounds = array<i64: 1>, scalar_prefetch = 0 : i64, scratch_operands = 0 : i64, tpu.core_type = #tpu.core_type<tc>, window_params = [{transform_indices = @transform_0, window_bounds = array<i64: 34, 32>}, {pipeline_mode = #tpu.pipeline_mode<synchronous>, transform_indices = @transform_1, window_bounds = array<i64: 1, 32>}, {pipeline_mode = #tpu.pipeline_mode<synchronous>, transform_indices = @transform_2, window_bounds = array<i64: 1, 32>}, {pipeline_mode = #tpu.pipeline_mode<synchronous>, transform_indices = @transform_3, window_bounds = array<i64: 32, 96>}, {pipeline_mode = #tpu.pipeline_mode<synchronous>, transform_indices = @transform_4, window_bounds = array<i64: 1, 96>}, {transform_indices = @transform_5, window_bounds = array<i64: 34, 96>}]} {
    %c0 = arith.constant 0 : index
    %c0_0 = arith.constant 0 : index
    %0 = vector.load %arg1[%c0, %c0_0] : memref<34x32xf32, #tpu.memory_space<vmem>>, vector<34x32xf32>
    %cst = arith.constant dense<0.000000e+00> : vector<34xf32>
    %1 = vector.multi_reduction <add>, %0, %cst [1] : vector<34x32xf32> to vector<34xf32>
    %2 = vector.shape_cast %1 : vector<34xf32> to vector<34x1xf32>
    %cst_1 = arith.constant 3.200000e+01 : f32
    %3 = vector.broadcast %cst_1 : f32 to vector<34x1xf32>
    %4 = arith.divf %2, %3 : vector<34x1xf32>
    %5 = vector.broadcast %4 : vector<34x1xf32> to vector<34x32xf32>
    %6 = arith.subf %0, %5 : vector<34x32xf32>
    %7 = arith.mulf %6, %6 : vector<34x32xf32>
    %cst_2 = arith.constant dense<0.000000e+00> : vector<34xf32>
    %8 = vector.multi_reduction <add>, %7, %cst_2 [1] : vector<34x32xf32> to vector<34xf32>
    %9 = vector.shape_cast %8 : vector<34xf32> to vector<34x1xf32>
    %cst_3 = arith.constant 3.200000e+01 : f32
    %10 = vector.broadcast %cst_3 : f32 to vector<34x1xf32>
    %11 = arith.divf %9, %10 : vector<34x1xf32>
    %cst_4 = arith.constant 9.99999997E-7 : f32
    %12 = vector.broadcast %cst_4 : f32 to vector<34x1xf32>
    %13 = arith.addf %11, %12 : vector<34x1xf32>
    %14 = math.rsqrt %13 : vector<34x1xf32>
    %15 = vector.broadcast %14 : vector<34x1xf32> to vector<34x32xf32>
    %16 = arith.mulf %6, %15 : vector<34x32xf32>
    %c0_5 = arith.constant 0 : index
    %c0_6 = arith.constant 0 : index
    %17 = vector.load %arg2[%c0_5, %c0_6] : memref<1x32xf32, #tpu.memory_space<vmem>>, vector<1x32xf32>
    %18 = vector.broadcast %17 : vector<1x32xf32> to vector<34x32xf32>
    %19 = arith.mulf %16, %18 : vector<34x32xf32>
    %c0_7 = arith.constant 0 : index
    %c0_8 = arith.constant 0 : index
    %20 = vector.load %arg3[%c0_7, %c0_8] : memref<1x32xf32, #tpu.memory_space<vmem>>, vector<1x32xf32>
    %21 = vector.broadcast %20 : vector<1x32xf32> to vector<34x32xf32>
    %22 = arith.addf %19, %21 : vector<34x32xf32>
    %23 = arith.truncf %22 : vector<34x32xf32> to vector<34x32xbf16>
    %c0_9 = arith.constant 0 : index
    %c0_10 = arith.constant 0 : index
    %24 = vector.load %arg4[%c0_9, %c0_10] : memref<32x96xbf16, #tpu.memory_space<vmem>>, vector<32x96xbf16>
    %cst_11 = arith.constant dense<0.000000e+00> : vector<34x96xf32>
    %25 = tpu.matmul %23, %24, %cst_11 {dimension_numbers = #tpu.dot_dimension_numbers<[1], [0], [0], [1], [0, 0, 1, 1], [], []>} : vector<34x32xbf16>, vector<32x96xbf16>, vector<34x96xf32> -> vector<34x96xf32>
    %c0_12 = arith.constant 0 : index
    %c0_13 = arith.constant 0 : index
    %26 = vector.load %arg5[%c0_12, %c0_13] : memref<1x96xf32, #tpu.memory_space<vmem>>, vector<1x96xf32>
    %27 = vector.broadcast %26 : vector<1x96xf32> to vector<34x96xf32>
    %28 = arith.addf %25, %27 : vector<34x96xf32>
    %29 = arith.truncf %28 : vector<34x96xf32> to vector<34x96xbf16>
    %c0_14 = arith.constant 0 : index
    %c0_15 = arith.constant 0 : index
    %30 = vector.load %arg6[%c0_14, %c0_15] : memref<34x96xbf16, #tpu.memory_space<vmem>>, vector<34x96xbf16>
    tpu.vector_store %arg6[%c0_14, %c0_15], %29 {strides = array<i32>} : memref<34x96xbf16, #tpu.memory_space<vmem>>, vector<34x96xbf16>,
    return
  }
  func.func @transform_0(%arg0: i32) -> (i32, i32) {
    %c0_i32 = arith.constant 0 : i32
    %c0_i32_0 = arith.constant 0 : i32
    return %arg0, %c0_i32 : i32, i32
  }
  func.func @transform_1(%arg0: i32) -> (i32, i32) {
    %c0_i32 = arith.constant 0 : i32
    %c0_i32_0 = arith.constant 0 : i32
    %c0_i32_1 = arith.constant 0 : i32
    return %c0_i32, %c0_i32_0 : i32, i32
  }
  func.func @transform_2(%arg0: i32) -> (i32, i32) {
    %c0_i32 = arith.constant 0 : i32
    %c0_i32_0 = arith.constant 0 : i32
    %c0_i32_1 = arith.constant 0 : i32
    return %c0_i32, %c0_i32_0 : i32, i32
  }
  func.func @transform_3(%arg0: i32) -> (i32, i32) {
    %c0_i32 = arith.constant 0 : i32
    %c0_i32_0 = arith.constant 0 : i32
    %c0_i32_1 = arith.constant 0 : i32
    return %c0_i32, %c0_i32_0 : i32, i32
  }
  func.func @transform_4(%arg0: i32) -> (i32, i32) {
    %c0_i32 = arith.constant 0 : i32
    %c0_i32_0 = arith.constant 0 : i32
    %c0_i32_1 = arith.constant 0 : i32
    return %c0_i32, %c0_i32_0 : i32, i32
  }
  func.func @transform_5(%arg0: i32) -> (i32, i32) {
    %c0_i32 = arith.constant 0 : i32
    %c0_i32_0 = arith.constant 0 : i32
    return %arg0, %c0_i32 : i32, i32
  }
}

module attributes {stable_mosaic.version = 11 : i64} {
  func.func @_proj_res_ln_fc1_kernel(%arg0: i32, %arg1: memref<34x32xbf16, #tpu.memory_space<vmem>>, %arg2: memref<34x32xf32, #tpu.memory_space<vmem>>, %arg3: memref<32x32xbf16, #tpu.memory_space<vmem>>, %arg4: memref<1x32xf32, #tpu.memory_space<vmem>>, %arg5: memref<1x32xf32, #tpu.memory_space<vmem>>, %arg6: memref<1x32xf32, #tpu.memory_space<vmem>>, %arg7: memref<32x128xbf16, #tpu.memory_space<vmem>>, %arg8: memref<1x128xf32, #tpu.memory_space<vmem>>, %arg9: memref<34x32xf32, #tpu.memory_space<vmem>>, %arg10: memref<34x128xbf16, #tpu.memory_space<vmem>>) attributes {dimension_semantics = [#tpu.dimension_semantics<parallel>], iteration_bounds = array<i64: 1>, scalar_prefetch = 0 : i64, scratch_operands = 0 : i64, tpu.core_type = #tpu.core_type<tc>, window_params = [{transform_indices = @transform_0, window_bounds = array<i64: 34, 32>}, {transform_indices = @transform_1, window_bounds = array<i64: 34, 32>}, {pipeline_mode = #tpu.pipeline_mode<synchronous>, transform_indices = @transform_2, window_bounds = array<i64: 32, 32>}, {pipeline_mode = #tpu.pipeline_mode<synchronous>, transform_indices = @transform_3, window_bounds = array<i64: 1, 32>}, {pipeline_mode = #tpu.pipeline_mode<synchronous>, transform_indices = @transform_4, window_bounds = array<i64: 1, 32>}, {pipeline_mode = #tpu.pipeline_mode<synchronous>, transform_indices = @transform_5, window_bounds = array<i64: 1, 32>}, {pipeline_mode = #tpu.pipeline_mode<synchronous>, transform_indices = @transform_6, window_bounds = array<i64: 32, 128>}, {pipeline_mode = #tpu.pipeline_mode<synchronous>, transform_indices = @transform_7, window_bounds = array<i64: 1, 128>}, {transform_indices = @transform_8, window_bounds = array<i64: 34, 32>}, {transform_indices = @transform_9, window_bounds = array<i64: 34, 128>}]} {
    %c0 = arith.constant 0 : index
    %c0_0 = arith.constant 0 : index
    %0 = vector.load %arg1[%c0, %c0_0] : memref<34x32xbf16, #tpu.memory_space<vmem>>, vector<34x32xbf16>
    %c0_1 = arith.constant 0 : index
    %c0_2 = arith.constant 0 : index
    %1 = vector.load %arg3[%c0_1, %c0_2] : memref<32x32xbf16, #tpu.memory_space<vmem>>, vector<32x32xbf16>
    %cst = arith.constant dense<0.000000e+00> : vector<34x32xf32>
    %2 = tpu.matmul %0, %1, %cst {dimension_numbers = #tpu.dot_dimension_numbers<[1], [0], [0], [1], [0, 0, 1, 1], [], []>} : vector<34x32xbf16>, vector<32x32xbf16>, vector<34x32xf32> -> vector<34x32xf32>
    %c0_3 = arith.constant 0 : index
    %c0_4 = arith.constant 0 : index
    %3 = vector.load %arg4[%c0_3, %c0_4] : memref<1x32xf32, #tpu.memory_space<vmem>>, vector<1x32xf32>
    %4 = vector.broadcast %3 : vector<1x32xf32> to vector<34x32xf32>
    %5 = arith.addf %2, %4 : vector<34x32xf32>
    %c0_5 = arith.constant 0 : index
    %c0_6 = arith.constant 0 : index
    %6 = vector.load %arg2[%c0_5, %c0_6] : memref<34x32xf32, #tpu.memory_space<vmem>>, vector<34x32xf32>
    %7 = arith.addf %6, %5 : vector<34x32xf32>
    %c0_7 = arith.constant 0 : index
    %c0_8 = arith.constant 0 : index
    %8 = vector.load %arg9[%c0_7, %c0_8] : memref<34x32xf32, #tpu.memory_space<vmem>>, vector<34x32xf32>
    tpu.vector_store %arg9[%c0_7, %c0_8], %7 {strides = array<i32>} : memref<34x32xf32, #tpu.memory_space<vmem>>, vector<34x32xf32>,
    %cst_9 = arith.constant dense<0.000000e+00> : vector<34xf32>
    %9 = vector.multi_reduction <add>, %7, %cst_9 [1] : vector<34x32xf32> to vector<34xf32>
    %10 = vector.shape_cast %9 : vector<34xf32> to vector<34x1xf32>
    %cst_10 = arith.constant 3.200000e+01 : f32
    %11 = vector.broadcast %cst_10 : f32 to vector<34x1xf32>
    %12 = arith.divf %10, %11 : vector<34x1xf32>
    %13 = vector.broadcast %12 : vector<34x1xf32> to vector<34x32xf32>
    %14 = arith.subf %7, %13 : vector<34x32xf32>
    %15 = arith.mulf %14, %14 : vector<34x32xf32>
    %cst_11 = arith.constant dense<0.000000e+00> : vector<34xf32>
    %16 = vector.multi_reduction <add>, %15, %cst_11 [1] : vector<34x32xf32> to vector<34xf32>
    %17 = vector.shape_cast %16 : vector<34xf32> to vector<34x1xf32>
    %cst_12 = arith.constant 3.200000e+01 : f32
    %18 = vector.broadcast %cst_12 : f32 to vector<34x1xf32>
    %19 = arith.divf %17, %18 : vector<34x1xf32>
    %cst_13 = arith.constant 9.99999997E-7 : f32
    %20 = vector.broadcast %cst_13 : f32 to vector<34x1xf32>
    %21 = arith.addf %19, %20 : vector<34x1xf32>
    %22 = math.rsqrt %21 : vector<34x1xf32>
    %23 = vector.broadcast %22 : vector<34x1xf32> to vector<34x32xf32>
    %24 = arith.mulf %14, %23 : vector<34x32xf32>
    %c0_14 = arith.constant 0 : index
    %c0_15 = arith.constant 0 : index
    %25 = vector.load %arg5[%c0_14, %c0_15] : memref<1x32xf32, #tpu.memory_space<vmem>>, vector<1x32xf32>
    %26 = vector.broadcast %25 : vector<1x32xf32> to vector<34x32xf32>
    %27 = arith.mulf %24, %26 : vector<34x32xf32>
    %c0_16 = arith.constant 0 : index
    %c0_17 = arith.constant 0 : index
    %28 = vector.load %arg6[%c0_16, %c0_17] : memref<1x32xf32, #tpu.memory_space<vmem>>, vector<1x32xf32>
    %29 = vector.broadcast %28 : vector<1x32xf32> to vector<34x32xf32>
    %30 = arith.addf %27, %29 : vector<34x32xf32>
    %31 = arith.truncf %30 : vector<34x32xf32> to vector<34x32xbf16>
    %c0_18 = arith.constant 0 : index
    %c0_19 = arith.constant 0 : index
    %32 = vector.load %arg7[%c0_18, %c0_19] : memref<32x128xbf16, #tpu.memory_space<vmem>>, vector<32x128xbf16>
    %cst_20 = arith.constant dense<0.000000e+00> : vector<34x128xf32>
    %33 = tpu.matmul %31, %32, %cst_20 {dimension_numbers = #tpu.dot_dimension_numbers<[1], [0], [0], [1], [0, 0, 1, 1], [], []>} : vector<34x32xbf16>, vector<32x128xbf16>, vector<34x128xf32> -> vector<34x128xf32>
    %c0_21 = arith.constant 0 : index
    %c0_22 = arith.constant 0 : index
    %34 = vector.load %arg8[%c0_21, %c0_22] : memref<1x128xf32, #tpu.memory_space<vmem>>, vector<1x128xf32>
    %35 = vector.broadcast %34 : vector<1x128xf32> to vector<34x128xf32>
    %36 = arith.addf %33, %35 : vector<34x128xf32>
    %cst_23 = arith.constant 5.000000e-01 : f32
    %37 = vector.broadcast %cst_23 : f32 to vector<34x128xf32>
    %38 = arith.mulf %37, %36 : vector<34x128xf32>
    %39 = arith.mulf %36, %36 : vector<34x128xf32>
    %40 = arith.mulf %39, %36 : vector<34x128xf32>
    %cst_24 = arith.constant 4.471500e-02 : f32
    %41 = vector.broadcast %cst_24 : f32 to vector<34x128xf32>
    %42 = arith.mulf %41, %40 : vector<34x128xf32>
    %43 = arith.addf %36, %42 : vector<34x128xf32>
    %cst_25 = arith.constant 0.797884583 : f32
    %44 = vector.broadcast %cst_25 : f32 to vector<34x128xf32>
    %45 = arith.mulf %44, %43 : vector<34x128xf32>
    %46 = math.tanh %45 : vector<34x128xf32>
    %cst_26 = arith.constant 1.000000e+00 : f32
    %47 = vector.broadcast %cst_26 : f32 to vector<34x128xf32>
    %48 = arith.addf %47, %46 : vector<34x128xf32>
    %49 = arith.mulf %38, %48 : vector<34x128xf32>
    %50 = arith.truncf %49 : vector<34x128xf32> to vector<34x128xbf16>
    %c0_27 = arith.constant 0 : index
    %c0_28 = arith.constant 0 : index
    %51 = vector.load %arg10[%c0_27, %c0_28] : memref<34x128xbf16, #tpu.memory_space<vmem>>, vector<34x128xbf16>
    tpu.vector_store %arg10[%c0_27, %c0_28], %50 {strides = array<i32>} : memref<34x128xbf16, #tpu.memory_space<vmem>>, vector<34x128xbf16>,
    return
  }
  func.func @transform_0(%arg0: i32) -> (i32, i32) {
    %c0_i32 = arith.constant 0 : i32
    %c0_i32_0 = arith.constant 0 : i32
    return %arg0, %c0_i32 : i32, i32
  }
  func.func @transform_1(%arg0: i32) -> (i32, i32) {
    %c0_i32 = arith.constant 0 : i32
    %c0_i32_0 = arith.constant 0 : i32
    return %arg0, %c0_i32 : i32, i32
  }
  func.func @transform_2(%arg0: i32) -> (i32, i32) {
    %c0_i32 = arith.constant 0 : i32
    %c0_i32_0 = arith.constant 0 : i32
    %c0_i32_1 = arith.constant 0 : i32
    return %c0_i32, %c0_i32_0 : i32, i32
  }
  func.func @transform_3(%arg0: i32) -> (i32, i32) {
    %c0_i32 = arith.constant 0 : i32
    %c0_i32_0 = arith.constant 0 : i32
    %c0_i32_1 = arith.constant 0 : i32
    return %c0_i32, %c0_i32_0 : i32, i32
  }
  func.func @transform_4(%arg0: i32) -> (i32, i32) {
    %c0_i32 = arith.constant 0 : i32
    %c0_i32_0 = arith.constant 0 : i32
    %c0_i32_1 = arith.constant 0 : i32
    return %c0_i32, %c0_i32_0 : i32, i32
  }
  func.func @transform_5(%arg0: i32) -> (i32, i32) {
    %c0_i32 = arith.constant 0 : i32
    %c0_i32_0 = arith.constant 0 : i32
    %c0_i32_1 = arith.constant 0 : i32
    return %c0_i32, %c0_i32_0 : i32, i32
  }
  func.func @transform_6(%arg0: i32) -> (i32, i32) {
    %c0_i32 = arith.constant 0 : i32
    %c0_i32_0 = arith.constant 0 : i32
    %c0_i32_1 = arith.constant 0 : i32
    return %c0_i32, %c0_i32_0 : i32, i32
  }
  func.func @transform_7(%arg0: i32) -> (i32, i32) {
    %c0_i32 = arith.constant 0 : i32
    %c0_i32_0 = arith.constant 0 : i32
    %c0_i32_1 = arith.constant 0 : i32
    return %c0_i32, %c0_i32_0 : i32, i32
  }
  func.func @transform_8(%arg0: i32) -> (i32, i32) {
    %c0_i32 = arith.constant 0 : i32
    %c0_i32_0 = arith.constant 0 : i32
    return %arg0, %c0_i32 : i32, i32
  }
  func.func @transform_9(%arg0: i32) -> (i32, i32) {
    %c0_i32 = arith.constant 0 : i32
    %c0_i32_0 = arith.constant 0 : i32
    return %arg0, %c0_i32 : i32, i32
  }
}

module attributes {stable_mosaic.version = 11 : i64} {
  func.func @_linear_residual_kernel(%arg0: i32, %arg1: memref<34x128xbf16, #tpu.memory_space<vmem>>, %arg2: memref<34x32xf32, #tpu.memory_space<vmem>>, %arg3: memref<128x32xbf16, #tpu.memory_space<vmem>>, %arg4: memref<1x32xf32, #tpu.memory_space<vmem>>, %arg5: memref<34x32xf32, #tpu.memory_space<vmem>>) attributes {dimension_semantics = [#tpu.dimension_semantics<parallel>], iteration_bounds = array<i64: 1>, scalar_prefetch = 0 : i64, scratch_operands = 0 : i64, tpu.core_type = #tpu.core_type<tc>, window_params = [{transform_indices = @transform_0, window_bounds = array<i64: 34, 128>}, {transform_indices = @transform_1, window_bounds = array<i64: 34, 32>}, {pipeline_mode = #tpu.pipeline_mode<synchronous>, transform_indices = @transform_2, window_bounds = array<i64: 128, 32>}, {pipeline_mode = #tpu.pipeline_mode<synchronous>, transform_indices = @transform_3, window_bounds = array<i64: 1, 32>}, {transform_indices = @transform_4, window_bounds = array<i64: 34, 32>}]} {
    %c0 = arith.constant 0 : index
    %c0_0 = arith.constant 0 : index
    %0 = vector.load %arg1[%c0, %c0_0] : memref<34x128xbf16, #tpu.memory_space<vmem>>, vector<34x128xbf16>
    %c0_1 = arith.constant 0 : index
    %c0_2 = arith.constant 0 : index
    %1 = vector.load %arg3[%c0_1, %c0_2] : memref<128x32xbf16, #tpu.memory_space<vmem>>, vector<128x32xbf16>
    %cst = arith.constant dense<0.000000e+00> : vector<34x32xf32>
    %2 = tpu.matmul %0, %1, %cst {dimension_numbers = #tpu.dot_dimension_numbers<[1], [0], [0], [1], [0, 0, 1, 1], [], []>} : vector<34x128xbf16>, vector<128x32xbf16>, vector<34x32xf32> -> vector<34x32xf32>
    %c0_3 = arith.constant 0 : index
    %c0_4 = arith.constant 0 : index
    %3 = vector.load %arg4[%c0_3, %c0_4] : memref<1x32xf32, #tpu.memory_space<vmem>>, vector<1x32xf32>
    %4 = vector.broadcast %3 : vector<1x32xf32> to vector<34x32xf32>
    %5 = arith.addf %2, %4 : vector<34x32xf32>
    %c0_5 = arith.constant 0 : index
    %c0_6 = arith.constant 0 : index
    %6 = vector.load %arg2[%c0_5, %c0_6] : memref<34x32xf32, #tpu.memory_space<vmem>>, vector<34x32xf32>
    %7 = arith.addf %6, %5 : vector<34x32xf32>
    %c0_7 = arith.constant 0 : index
    %c0_8 = arith.constant 0 : index
    %8 = vector.load %arg5[%c0_7, %c0_8] : memref<34x32xf32, #tpu.memory_space<vmem>>, vector<34x32xf32>
    tpu.vector_store %arg5[%c0_7, %c0_8], %7 {strides = array<i32>} : memref<34x32xf32, #tpu.memory_space<vmem>>, vector<34x32xf32>,
    return
  }
  func.func @transform_0(%arg0: i32) -> (i32, i32) {
    %c0_i32 = arith.constant 0 : i32
    %c0_i32_0 = arith.constant 0 : i32
    return %arg0, %c0_i32 : i32, i32
  }
  func.func @transform_1(%arg0: i32) -> (i32, i32) {
    %c0_i32 = arith.constant 0 : i32
    %c0_i32_0 = arith.constant 0 : i32
    return %arg0, %c0_i32 : i32, i32
  }
  func.func @transform_2(%arg0: i32) -> (i32, i32) {
    %c0_i32 = arith.constant 0 : i32
    %c0_i32_0 = arith.constant 0 : i32
    %c0_i32_1 = arith.constant 0 : i32
    return %c0_i32, %c0_i32_0 : i32, i32
  }
  func.func @transform_3(%arg0: i32) -> (i32, i32) {
    %c0_i32 = arith.constant 0 : i32
    %c0_i32_0 = arith.constant 0 : i32
    %c0_i32_1 = arith.constant 0 : i32
    return %c0_i32, %c0_i32_0 : i32, i32
  }
  func.func @transform_4(%arg0: i32) -> (i32, i32) {
    %c0_i32 = arith.constant 0 : i32
    %c0_i32_0 = arith.constant 0 : i32
    return %arg0, %c0_i32 : i32, i32
  }
}

module attributes {stable_mosaic.version = 11 : i64} {
  func.func @_mha_cls_kernel(%arg0: i32, %arg1: memref<1x17x96xbf16, #tpu.memory_space<vmem>>, %arg2: memref<1x17x32xbf16, #tpu.memory_space<vmem>>, %arg3: memref<1x1x16xf32, #tpu.memory_space<vmem>>) attributes {dimension_semantics = [#tpu.dimension_semantics<parallel>], iteration_bounds = array<i64: 2>, scalar_prefetch = 0 : i64, scratch_operands = 0 : i64, tpu.core_type = #tpu.core_type<tc>, window_params = [{transform_indices = @transform_0, window_bounds = array<i64: 1, 17, 96>}, {transform_indices = @transform_1, window_bounds = array<i64: 1, 17, 32>}, {transform_indices = @transform_2, window_bounds = array<i64: 1, 1, 16>}]} {
    %c0 = arith.constant 0 : index
    %c0_0 = arith.constant 0 : index
    %c0_1 = arith.constant 0 : index
    %0 = vector.load %arg1[%c0, %c0_0, %c0_1] : memref<1x17x96xbf16, #tpu.memory_space<vmem>>, vector<1x17x8xbf16>
    %1 = vector.shape_cast %0 : vector<1x17x8xbf16> to vector<17x8xbf16>
    %cst = arith.constant 3.535160e-01 : bf16
    %2 = vector.broadcast %cst : bf16 to vector<17x8xbf16>
    %3 = arith.mulf %1, %2 : vector<17x8xbf16>
    %c0_2 = arith.constant 0 : index
    %c0_3 = arith.constant 0 : index
    %c32 = arith.constant 32 : index
    %4 = vector.load %arg1[%c0_2, %c0_3, %c32] : memref<1x17x96xbf16, #tpu.memory_space<vmem>>, vector<1x17x8xbf16>
    %5 = vector.shape_cast %4 : vector<1x17x8xbf16> to vector<17x8xbf16>
    %c0_4 = arith.constant 0 : index
    %c0_5 = arith.constant 0 : index
    %c64 = arith.constant 64 : index
    %6 = vector.load %arg1[%c0_4, %c0_5, %c64] : memref<1x17x96xbf16, #tpu.memory_space<vmem>>, vector<1x17x8xbf16>
    %7 = vector.shape_cast %6 : vector<1x17x8xbf16> to vector<17x8xbf16>
    %cst_6 = arith.constant dense<0.000000e+00> : vector<17x17xf32>
    %8 = tpu.matmul %3, %5, %cst_6 {dimension_numbers = #tpu.dot_dimension_numbers<[1], [1], [0], [0], [0, 0, 1, 0], [], []>} : vector<17x8xbf16>, vector<17x8xbf16>, vector<17x17xf32> -> vector<17x17xf32>
    %cst_7 = arith.constant dense<0xFF800000> : vector<17xf32>
    %9 = vector.multi_reduction <maximumf>, %8, %cst_7 [1] : vector<17x17xf32> to vector<17xf32>
    %10 = vector.shape_cast %9 : vector<17xf32> to vector<17x1xf32>
    %11 = vector.broadcast %10 : vector<17x1xf32> to vector<17x17xf32>
    %12 = arith.subf %8, %11 : vector<17x17xf32>
    %13 = math.exp %12 : vector<17x17xf32>
    %cst_8 = arith.constant dense<0.000000e+00> : vector<17xf32>
    %14 = vector.multi_reduction <add>, %13, %cst_8 [1] : vector<17x17xf32> to vector<17xf32>
    %15 = vector.shape_cast %14 : vector<17xf32> to vector<17x1xf32>
    %16 = tpu.reciprocal %15 {approx = true} : vector<17x1xf32> -> vector<17x1xf32>
    %17 = vector.broadcast %16 : vector<17x1xf32> to vector<17x17xf32>
    %18 = arith.mulf %13, %17 : vector<17x17xf32>
    %19 = arith.truncf %18 : vector<17x17xf32> to vector<17x17xbf16>
    %cst_9 = arith.constant dense<0.000000e+00> : vector<17x8xf32>
    %20 = tpu.matmul %19, %7, %cst_9 {dimension_numbers = #tpu.dot_dimension_numbers<[1], [0], [0], [1], [0, 0, 1, 1], [], []>} : vector<17x17xbf16>, vector<17x8xbf16>, vector<17x8xf32> -> vector<17x8xf32>
    %21 = arith.truncf %20 : vector<17x8xf32> to vector<17x8xbf16>
    %c0_10 = arith.constant 0 : index
    %c0_11 = arith.constant 0 : index
    %c0_12 = arith.constant 0 : index
    %22 = vector.load %arg2[%c0_10, %c0_11, %c0_12] : memref<1x17x32xbf16, #tpu.memory_space<vmem>>, vector<1x17x8xbf16>
    %23 = vector.shape_cast %22 : vector<1x17x8xbf16> to vector<17x8xbf16>
    %24 = vector.shape_cast %21 : vector<17x8xbf16> to vector<1x17x8xbf16>
    tpu.vector_store %arg2[%c0_10, %c0_11, %c0_12], %24 {strides = array<i32>} : memref<1x17x32xbf16, #tpu.memory_space<vmem>>, vector<1x17x8xbf16>,
    %25 = vector.extract_strided_slice %18 {offsets = [0, 1], sizes = [1, 16], strides = [1, 1]} : vector<17x17xf32> to vector<1x16xf32>
    %c0_13 = arith.constant 0 : index
    %c0_14 = arith.constant 0 : index
    %c8 = arith.constant 8 : index
    %26 = vector.load %arg1[%c0_13, %c0_14, %c8] : memref<1x17x96xbf16, #tpu.memory_space<vmem>>, vector<1x17x8xbf16>
    %27 = vector.shape_cast %26 : vector<1x17x8xbf16> to vector<17x8xbf16>
    %cst_15 = arith.constant 3.535160e-01 : bf16
    %28 = vector.broadcast %cst_15 : bf16 to vector<17x8xbf16>
    %29 = arith.mulf %27, %28 : vector<17x8xbf16>
    %c0_16 = arith.constant 0 : index
    %c0_17 = arith.constant 0 : index
    %c40 = arith.constant 40 : index
    %30 = vector.load %arg1[%c0_16, %c0_17, %c40] : memref<1x17x96xbf16, #tpu.memory_space<vmem>>, vector<1x17x8xbf16>
    %31 = vector.shape_cast %30 : vector<1x17x8xbf16> to vector<17x8xbf16>
    %c0_18 = arith.constant 0 : index
    %c0_19 = arith.constant 0 : index
    %c72 = arith.constant 72 : index
    %32 = vector.load %arg1[%c0_18, %c0_19, %c72] : memref<1x17x96xbf16, #tpu.memory_space<vmem>>, vector<1x17x8xbf16>
    %33 = vector.shape_cast %32 : vector<1x17x8xbf16> to vector<17x8xbf16>
    %cst_20 = arith.constant dense<0.000000e+00> : vector<17x17xf32>
    %34 = tpu.matmul %29, %31, %cst_20 {dimension_numbers = #tpu.dot_dimension_numbers<[1], [1], [0], [0], [0, 0, 1, 0], [], []>} : vector<17x8xbf16>, vector<17x8xbf16>, vector<17x17xf32> -> vector<17x17xf32>
    %cst_21 = arith.constant dense<0xFF800000> : vector<17xf32>
    %35 = vector.multi_reduction <maximumf>, %34, %cst_21 [1] : vector<17x17xf32> to vector<17xf32>
    %36 = vector.shape_cast %35 : vector<17xf32> to vector<17x1xf32>
    %37 = vector.broadcast %36 : vector<17x1xf32> to vector<17x17xf32>
    %38 = arith.subf %34, %37 : vector<17x17xf32>
    %39 = math.exp %38 : vector<17x17xf32>
    %cst_22 = arith.constant dense<0.000000e+00> : vector<17xf32>
    %40 = vector.multi_reduction <add>, %39, %cst_22 [1] : vector<17x17xf32> to vector<17xf32>
    %41 = vector.shape_cast %40 : vector<17xf32> to vector<17x1xf32>
    %42 = tpu.reciprocal %41 {approx = true} : vector<17x1xf32> -> vector<17x1xf32>
    %43 = vector.broadcast %42 : vector<17x1xf32> to vector<17x17xf32>
    %44 = arith.mulf %39, %43 : vector<17x17xf32>
    %45 = arith.truncf %44 : vector<17x17xf32> to vector<17x17xbf16>
    %cst_23 = arith.constant dense<0.000000e+00> : vector<17x8xf32>
    %46 = tpu.matmul %45, %33, %cst_23 {dimension_numbers = #tpu.dot_dimension_numbers<[1], [0], [0], [1], [0, 0, 1, 1], [], []>} : vector<17x17xbf16>, vector<17x8xbf16>, vector<17x8xf32> -> vector<17x8xf32>
    %47 = arith.truncf %46 : vector<17x8xf32> to vector<17x8xbf16>
    %c0_24 = arith.constant 0 : index
    %c0_25 = arith.constant 0 : index
    %c8_26 = arith.constant 8 : index
    %48 = vector.load %arg2[%c0_24, %c0_25, %c8_26] : memref<1x17x32xbf16, #tpu.memory_space<vmem>>, vector<1x17x8xbf16>
    %49 = vector.shape_cast %48 : vector<1x17x8xbf16> to vector<17x8xbf16>
    %50 = vector.shape_cast %47 : vector<17x8xbf16> to vector<1x17x8xbf16>
    tpu.vector_store %arg2[%c0_24, %c0_25, %c8_26], %50 {strides = array<i32>} : memref<1x17x32xbf16, #tpu.memory_space<vmem>>, vector<1x17x8xbf16>,
    %51 = vector.extract_strided_slice %44 {offsets = [0, 1], sizes = [1, 16], strides = [1, 1]} : vector<17x17xf32> to vector<1x16xf32>
    %52 = arith.addf %25, %51 : vector<1x16xf32>
    %c0_27 = arith.constant 0 : index
    %c0_28 = arith.constant 0 : index
    %c16 = arith.constant 16 : index
    %53 = vector.load %arg1[%c0_27, %c0_28, %c16] : memref<1x17x96xbf16, #tpu.memory_space<vmem>>, vector<1x17x8xbf16>
    %54 = vector.shape_cast %53 : vector<1x17x8xbf16> to vector<17x8xbf16>
    %cst_29 = arith.constant 3.535160e-01 : bf16
    %55 = vector.broadcast %cst_29 : bf16 to vector<17x8xbf16>
    %56 = arith.mulf %54, %55 : vector<17x8xbf16>
    %c0_30 = arith.constant 0 : index
    %c0_31 = arith.constant 0 : index
    %c48 = arith.constant 48 : index
    %57 = vector.load %arg1[%c0_30, %c0_31, %c48] : memref<1x17x96xbf16, #tpu.memory_space<vmem>>, vector<1x17x8xbf16>
    %58 = vector.shape_cast %57 : vector<1x17x8xbf16> to vector<17x8xbf16>
    %c0_32 = arith.constant 0 : index
    %c0_33 = arith.constant 0 : index
    %c80 = arith.constant 80 : index
    %59 = vector.load %arg1[%c0_32, %c0_33, %c80] : memref<1x17x96xbf16, #tpu.memory_space<vmem>>, vector<1x17x8xbf16>
    %60 = vector.shape_cast %59 : vector<1x17x8xbf16> to vector<17x8xbf16>
    %cst_34 = arith.constant dense<0.000000e+00> : vector<17x17xf32>
    %61 = tpu.matmul %56, %58, %cst_34 {dimension_numbers = #tpu.dot_dimension_numbers<[1], [1], [0], [0], [0, 0, 1, 0], [], []>} : vector<17x8xbf16>, vector<17x8xbf16>, vector<17x17xf32> -> vector<17x17xf32>
    %cst_35 = arith.constant dense<0xFF800000> : vector<17xf32>
    %62 = vector.multi_reduction <maximumf>, %61, %cst_35 [1] : vector<17x17xf32> to vector<17xf32>
    %63 = vector.shape_cast %62 : vector<17xf32> to vector<17x1xf32>
    %64 = vector.broadcast %63 : vector<17x1xf32> to vector<17x17xf32>
    %65 = arith.subf %61, %64 : vector<17x17xf32>
    %66 = math.exp %65 : vector<17x17xf32>
    %cst_36 = arith.constant dense<0.000000e+00> : vector<17xf32>
    %67 = vector.multi_reduction <add>, %66, %cst_36 [1] : vector<17x17xf32> to vector<17xf32>
    %68 = vector.shape_cast %67 : vector<17xf32> to vector<17x1xf32>
    %69 = tpu.reciprocal %68 {approx = true} : vector<17x1xf32> -> vector<17x1xf32>
    %70 = vector.broadcast %69 : vector<17x1xf32> to vector<17x17xf32>
    %71 = arith.mulf %66, %70 : vector<17x17xf32>
    %72 = arith.truncf %71 : vector<17x17xf32> to vector<17x17xbf16>
    %cst_37 = arith.constant dense<0.000000e+00> : vector<17x8xf32>
    %73 = tpu.matmul %72, %60, %cst_37 {dimension_numbers = #tpu.dot_dimension_numbers<[1], [0], [0], [1], [0, 0, 1, 1], [], []>} : vector<17x17xbf16>, vector<17x8xbf16>, vector<17x8xf32> -> vector<17x8xf32>
    %74 = arith.truncf %73 : vector<17x8xf32> to vector<17x8xbf16>
    %c0_38 = arith.constant 0 : index
    %c0_39 = arith.constant 0 : index
    %c16_40 = arith.constant 16 : index
    %75 = vector.load %arg2[%c0_38, %c0_39, %c16_40] : memref<1x17x32xbf16, #tpu.memory_space<vmem>>, vector<1x17x8xbf16>
    %76 = vector.shape_cast %75 : vector<1x17x8xbf16> to vector<17x8xbf16>
    %77 = vector.shape_cast %74 : vector<17x8xbf16> to vector<1x17x8xbf16>
    tpu.vector_store %arg2[%c0_38, %c0_39, %c16_40], %77 {strides = array<i32>} : memref<1x17x32xbf16, #tpu.memory_space<vmem>>, vector<1x17x8xbf16>,
    %78 = vector.extract_strided_slice %71 {offsets = [0, 1], sizes = [1, 16], strides = [1, 1]} : vector<17x17xf32> to vector<1x16xf32>
    %79 = arith.addf %52, %78 : vector<1x16xf32>
    %c0_41 = arith.constant 0 : index
    %c0_42 = arith.constant 0 : index
    %c24 = arith.constant 24 : index
    %80 = vector.load %arg1[%c0_41, %c0_42, %c24] : memref<1x17x96xbf16, #tpu.memory_space<vmem>>, vector<1x17x8xbf16>
    %81 = vector.shape_cast %80 : vector<1x17x8xbf16> to vector<17x8xbf16>
    %cst_43 = arith.constant 3.535160e-01 : bf16
    %82 = vector.broadcast %cst_43 : bf16 to vector<17x8xbf16>
    %83 = arith.mulf %81, %82 : vector<17x8xbf16>
    %c0_44 = arith.constant 0 : index
    %c0_45 = arith.constant 0 : index
    %c56 = arith.constant 56 : index
    %84 = vector.load %arg1[%c0_44, %c0_45, %c56] : memref<1x17x96xbf16, #tpu.memory_space<vmem>>, vector<1x17x8xbf16>
    %85 = vector.shape_cast %84 : vector<1x17x8xbf16> to vector<17x8xbf16>
    %c0_46 = arith.constant 0 : index
    %c0_47 = arith.constant 0 : index
    %c88 = arith.constant 88 : index
    %86 = vector.load %arg1[%c0_46, %c0_47, %c88] : memref<1x17x96xbf16, #tpu.memory_space<vmem>>, vector<1x17x8xbf16>
    %87 = vector.shape_cast %86 : vector<1x17x8xbf16> to vector<17x8xbf16>
    %cst_48 = arith.constant dense<0.000000e+00> : vector<17x17xf32>
    %88 = tpu.matmul %83, %85, %cst_48 {dimension_numbers = #tpu.dot_dimension_numbers<[1], [1], [0], [0], [0, 0, 1, 0], [], []>} : vector<17x8xbf16>, vector<17x8xbf16>, vector<17x17xf32> -> vector<17x17xf32>
    %cst_49 = arith.constant dense<0xFF800000> : vector<17xf32>
    %89 = vector.multi_reduction <maximumf>, %88, %cst_49 [1] : vector<17x17xf32> to vector<17xf32>
    %90 = vector.shape_cast %89 : vector<17xf32> to vector<17x1xf32>
    %91 = vector.broadcast %90 : vector<17x1xf32> to vector<17x17xf32>
    %92 = arith.subf %88, %91 : vector<17x17xf32>
    %93 = math.exp %92 : vector<17x17xf32>
    %cst_50 = arith.constant dense<0.000000e+00> : vector<17xf32>
    %94 = vector.multi_reduction <add>, %93, %cst_50 [1] : vector<17x17xf32> to vector<17xf32>
    %95 = vector.shape_cast %94 : vector<17xf32> to vector<17x1xf32>
    %96 = tpu.reciprocal %95 {approx = true} : vector<17x1xf32> -> vector<17x1xf32>
    %97 = vector.broadcast %96 : vector<17x1xf32> to vector<17x17xf32>
    %98 = arith.mulf %93, %97 : vector<17x17xf32>
    %99 = arith.truncf %98 : vector<17x17xf32> to vector<17x17xbf16>
    %cst_51 = arith.constant dense<0.000000e+00> : vector<17x8xf32>
    %100 = tpu.matmul %99, %87, %cst_51 {dimension_numbers = #tpu.dot_dimension_numbers<[1], [0], [0], [1], [0, 0, 1, 1], [], []>} : vector<17x17xbf16>, vector<17x8xbf16>, vector<17x8xf32> -> vector<17x8xf32>
    %101 = arith.truncf %100 : vector<17x8xf32> to vector<17x8xbf16>
    %c0_52 = arith.constant 0 : index
    %c0_53 = arith.constant 0 : index
    %c24_54 = arith.constant 24 : index
    %102 = vector.load %arg2[%c0_52, %c0_53, %c24_54] : memref<1x17x32xbf16, #tpu.memory_space<vmem>>, vector<1x17x8xbf16>
    %103 = vector.shape_cast %102 : vector<1x17x8xbf16> to vector<17x8xbf16>
    %104 = vector.shape_cast %101 : vector<17x8xbf16> to vector<1x17x8xbf16>
    tpu.vector_store %arg2[%c0_52, %c0_53, %c24_54], %104 {strides = array<i32>} : memref<1x17x32xbf16, #tpu.memory_space<vmem>>, vector<1x17x8xbf16>,
    %105 = vector.extract_strided_slice %98 {offsets = [0, 1], sizes = [1, 16], strides = [1, 1]} : vector<17x17xf32> to vector<1x16xf32>
    %106 = arith.addf %79, %105 : vector<1x16xf32>
    %cst_55 = arith.constant 2.500000e-01 : f32
    %107 = vector.broadcast %cst_55 : f32 to vector<1x16xf32>
    %108 = arith.mulf %106, %107 : vector<1x16xf32>
    %c0_56 = arith.constant 0 : index
    %c0_57 = arith.constant 0 : index
    %c0_58 = arith.constant 0 : index
    %109 = vector.load %arg3[%c0_56, %c0_57, %c0_58] : memref<1x1x16xf32, #tpu.memory_space<vmem>>, vector<1x1x16xf32>
    %110 = vector.shape_cast %109 : vector<1x1x16xf32> to vector<1x16xf32>
    %111 = vector.shape_cast %108 : vector<1x16xf32> to vector<1x1x16xf32>
    tpu.vector_store %arg3[%c0_56, %c0_57, %c0_58], %111 {strides = array<i32>} : memref<1x1x16xf32, #tpu.memory_space<vmem>>, vector<1x1x16xf32>,
    return
  }
  func.func @transform_0(%arg0: i32) -> (i32, i32, i32) {
    %c0_i32 = arith.constant 0 : i32
    %c0_i32_0 = arith.constant 0 : i32
    %c0_i32_1 = arith.constant 0 : i32
    return %arg0, %c0_i32, %c0_i32_0 : i32, i32, i32
  }
  func.func @transform_1(%arg0: i32) -> (i32, i32, i32) {
    %c0_i32 = arith.constant 0 : i32
    %c0_i32_0 = arith.constant 0 : i32
    %c0_i32_1 = arith.constant 0 : i32
    return %arg0, %c0_i32, %c0_i32_0 : i32, i32, i32
  }
  func.func @transform_2(%arg0: i32) -> (i32, i32, i32) {
    %c0_i32 = arith.constant 0 : i32
    %c0_i32_0 = arith.constant 0 : i32
    %c0_i32_1 = arith.constant 0 : i32
    return %arg0, %c0_i32, %c0_i32_0 : i32, i32, i32
  }
}

module attributes {stable_mosaic.version = 11 : i64} {
  func.func @_layernorm_kernel(%arg0: i32, %arg1: memref<2x32xf32, #tpu.memory_space<vmem>>, %arg2: memref<1x32xf32, #tpu.memory_space<vmem>>, %arg3: memref<1x32xf32, #tpu.memory_space<vmem>>, %arg4: memref<2x32xf32, #tpu.memory_space<vmem>>) attributes {dimension_semantics = [#tpu.dimension_semantics<parallel>], iteration_bounds = array<i64: 1>, scalar_prefetch = 0 : i64, scratch_operands = 0 : i64, tpu.core_type = #tpu.core_type<tc>, window_params = [{transform_indices = @transform_0, window_bounds = array<i64: 2, 32>}, {pipeline_mode = #tpu.pipeline_mode<synchronous>, transform_indices = @transform_1, window_bounds = array<i64: 1, 32>}, {pipeline_mode = #tpu.pipeline_mode<synchronous>, transform_indices = @transform_2, window_bounds = array<i64: 1, 32>}, {transform_indices = @transform_3, window_bounds = array<i64: 2, 32>}]} {
    %c0 = arith.constant 0 : index
    %c0_0 = arith.constant 0 : index
    %0 = vector.load %arg1[%c0, %c0_0] : memref<2x32xf32, #tpu.memory_space<vmem>>, vector<2x32xf32>
    %cst = arith.constant dense<0.000000e+00> : vector<2xf32>
    %1 = vector.multi_reduction <add>, %0, %cst [1] : vector<2x32xf32> to vector<2xf32>
    %2 = vector.shape_cast %1 : vector<2xf32> to vector<2x1xf32>
    %cst_1 = arith.constant 3.200000e+01 : f32
    %3 = vector.broadcast %cst_1 : f32 to vector<2x1xf32>
    %4 = arith.divf %2, %3 : vector<2x1xf32>
    %5 = vector.broadcast %4 : vector<2x1xf32> to vector<2x32xf32>
    %6 = arith.subf %0, %5 : vector<2x32xf32>
    %7 = arith.mulf %6, %6 : vector<2x32xf32>
    %cst_2 = arith.constant dense<0.000000e+00> : vector<2xf32>
    %8 = vector.multi_reduction <add>, %7, %cst_2 [1] : vector<2x32xf32> to vector<2xf32>
    %9 = vector.shape_cast %8 : vector<2xf32> to vector<2x1xf32>
    %cst_3 = arith.constant 3.200000e+01 : f32
    %10 = vector.broadcast %cst_3 : f32 to vector<2x1xf32>
    %11 = arith.divf %9, %10 : vector<2x1xf32>
    %cst_4 = arith.constant 9.99999997E-7 : f32
    %12 = vector.broadcast %cst_4 : f32 to vector<2x1xf32>
    %13 = arith.addf %11, %12 : vector<2x1xf32>
    %14 = math.rsqrt %13 : vector<2x1xf32>
    %15 = vector.broadcast %14 : vector<2x1xf32> to vector<2x32xf32>
    %16 = arith.mulf %6, %15 : vector<2x32xf32>
    %c0_5 = arith.constant 0 : index
    %c0_6 = arith.constant 0 : index
    %17 = vector.load %arg2[%c0_5, %c0_6] : memref<1x32xf32, #tpu.memory_space<vmem>>, vector<1x32xf32>
    %18 = vector.broadcast %17 : vector<1x32xf32> to vector<2x32xf32>
    %19 = arith.mulf %16, %18 : vector<2x32xf32>
    %c0_7 = arith.constant 0 : index
    %c0_8 = arith.constant 0 : index
    %20 = vector.load %arg3[%c0_7, %c0_8] : memref<1x32xf32, #tpu.memory_space<vmem>>, vector<1x32xf32>
    %21 = vector.broadcast %20 : vector<1x32xf32> to vector<2x32xf32>
    %22 = arith.addf %19, %21 : vector<2x32xf32>
    %c0_9 = arith.constant 0 : index
    %c0_10 = arith.constant 0 : index
    %23 = vector.load %arg4[%c0_9, %c0_10] : memref<2x32xf32, #tpu.memory_space<vmem>>, vector<2x32xf32>
    tpu.vector_store %arg4[%c0_9, %c0_10], %22 {strides = array<i32>} : memref<2x32xf32, #tpu.memory_space<vmem>>, vector<2x32xf32>,
    return
  }
  func.func @transform_0(%arg0: i32) -> (i32, i32) {
    %c0_i32 = arith.constant 0 : i32
    %c0_i32_0 = arith.constant 0 : i32
    return %arg0, %c0_i32 : i32, i32
  }
  func.func @transform_1(%arg0: i32) -> (i32, i32) {
    %c0_i32 = arith.constant 0 : i32
    %c0_i32_0 = arith.constant 0 : i32
    %c0_i32_1 = arith.constant 0 : i32
    return %c0_i32, %c0_i32_0 : i32, i32
  }
  func.func @transform_2(%arg0: i32) -> (i32, i32) {
    %c0_i32 = arith.constant 0 : i32
    %c0_i32_0 = arith.constant 0 : i32
    %c0_i32_1 = arith.constant 0 : i32
    return %c0_i32, %c0_i32_0 : i32, i32
  }
  func.func @transform_3(%arg0: i32) -> (i32, i32) {
    %c0_i32 = arith.constant 0 : i32
    %c0_i32_0 = arith.constant 0 : i32
    return %arg0, %c0_i32 : i32, i32
  }
}

module attributes {stable_mosaic.version = 11 : i64} {
  func.func @_dino_head_kernel(%arg0: i32, %arg1: memref<2x32xf32, #tpu.memory_space<vmem>>, %arg2: memref<32x48xbf16, #tpu.memory_space<vmem>>, %arg3: memref<1x48xf32, #tpu.memory_space<vmem>>, %arg4: memref<48x48xbf16, #tpu.memory_space<vmem>>, %arg5: memref<1x48xf32, #tpu.memory_space<vmem>>, %arg6: memref<48x24xbf16, #tpu.memory_space<vmem>>, %arg7: memref<1x24xf32, #tpu.memory_space<vmem>>, %arg8: memref<32x10xbf16, #tpu.memory_space<vmem>>, %arg9: memref<2x24xf32, #tpu.memory_space<vmem>>, %arg10: memref<2x10xf32, #tpu.memory_space<vmem>>) attributes {dimension_semantics = [#tpu.dimension_semantics<parallel>], iteration_bounds = array<i64: 1>, scalar_prefetch = 0 : i64, scratch_operands = 0 : i64, tpu.core_type = #tpu.core_type<tc>, window_params = [{transform_indices = @transform_0, window_bounds = array<i64: 2, 32>}, {pipeline_mode = #tpu.pipeline_mode<synchronous>, transform_indices = @transform_1, window_bounds = array<i64: 32, 48>}, {pipeline_mode = #tpu.pipeline_mode<synchronous>, transform_indices = @transform_2, window_bounds = array<i64: 1, 48>}, {pipeline_mode = #tpu.pipeline_mode<synchronous>, transform_indices = @transform_3, window_bounds = array<i64: 48, 48>}, {pipeline_mode = #tpu.pipeline_mode<synchronous>, transform_indices = @transform_4, window_bounds = array<i64: 1, 48>}, {pipeline_mode = #tpu.pipeline_mode<synchronous>, transform_indices = @transform_5, window_bounds = array<i64: 48, 24>}, {pipeline_mode = #tpu.pipeline_mode<synchronous>, transform_indices = @transform_6, window_bounds = array<i64: 1, 24>}, {pipeline_mode = #tpu.pipeline_mode<synchronous>, transform_indices = @transform_7, window_bounds = array<i64: 32, 10>}, {transform_indices = @transform_8, window_bounds = array<i64: 2, 24>}, {transform_indices = @transform_9, window_bounds = array<i64: 2, 10>}]} {
    %c0 = arith.constant 0 : index
    %c0_0 = arith.constant 0 : index
    %0 = vector.load %arg1[%c0, %c0_0] : memref<2x32xf32, #tpu.memory_space<vmem>>, vector<2x32xf32>
    %1 = arith.truncf %0 : vector<2x32xf32> to vector<2x32xbf16>
    %c0_1 = arith.constant 0 : index
    %c0_2 = arith.constant 0 : index
    %2 = vector.load %arg2[%c0_1, %c0_2] : memref<32x48xbf16, #tpu.memory_space<vmem>>, vector<32x48xbf16>
    %cst = arith.constant dense<0.000000e+00> : vector<2x48xf32>
    %3 = tpu.matmul %1, %2, %cst {dimension_numbers = #tpu.dot_dimension_numbers<[1], [0], [0], [1], [0, 0, 1, 1], [], []>} : vector<2x32xbf16>, vector<32x48xbf16>, vector<2x48xf32> -> vector<2x48xf32>
    %c0_3 = arith.constant 0 : index
    %c0_4 = arith.constant 0 : index
    %4 = vector.load %arg3[%c0_3, %c0_4] : memref<1x48xf32, #tpu.memory_space<vmem>>, vector<1x48xf32>
    %5 = vector.broadcast %4 : vector<1x48xf32> to vector<2x48xf32>
    %6 = arith.addf %3, %5 : vector<2x48xf32>
    %cst_5 = arith.constant 5.000000e-01 : f32
    %7 = vector.broadcast %cst_5 : f32 to vector<2x48xf32>
    %8 = arith.mulf %7, %6 : vector<2x48xf32>
    %9 = arith.mulf %6, %6 : vector<2x48xf32>
    %10 = arith.mulf %9, %6 : vector<2x48xf32>
    %cst_6 = arith.constant 4.471500e-02 : f32
    %11 = vector.broadcast %cst_6 : f32 to vector<2x48xf32>
    %12 = arith.mulf %11, %10 : vector<2x48xf32>
    %13 = arith.addf %6, %12 : vector<2x48xf32>
    %cst_7 = arith.constant 0.797884583 : f32
    %14 = vector.broadcast %cst_7 : f32 to vector<2x48xf32>
    %15 = arith.mulf %14, %13 : vector<2x48xf32>
    %16 = math.tanh %15 : vector<2x48xf32>
    %cst_8 = arith.constant 1.000000e+00 : f32
    %17 = vector.broadcast %cst_8 : f32 to vector<2x48xf32>
    %18 = arith.addf %17, %16 : vector<2x48xf32>
    %19 = arith.mulf %8, %18 : vector<2x48xf32>
    %20 = arith.truncf %19 : vector<2x48xf32> to vector<2x48xbf16>
    %c0_9 = arith.constant 0 : index
    %c0_10 = arith.constant 0 : index
    %21 = vector.load %arg4[%c0_9, %c0_10] : memref<48x48xbf16, #tpu.memory_space<vmem>>, vector<48x48xbf16>
    %cst_11 = arith.constant dense<0.000000e+00> : vector<2x48xf32>
    %22 = tpu.matmul %20, %21, %cst_11 {dimension_numbers = #tpu.dot_dimension_numbers<[1], [0], [0], [1], [0, 0, 1, 1], [], []>} : vector<2x48xbf16>, vector<48x48xbf16>, vector<2x48xf32> -> vector<2x48xf32>
    %c0_12 = arith.constant 0 : index
    %c0_13 = arith.constant 0 : index
    %23 = vector.load %arg5[%c0_12, %c0_13] : memref<1x48xf32, #tpu.memory_space<vmem>>, vector<1x48xf32>
    %24 = vector.broadcast %23 : vector<1x48xf32> to vector<2x48xf32>
    %25 = arith.addf %22, %24 : vector<2x48xf32>
    %cst_14 = arith.constant 5.000000e-01 : f32
    %26 = vector.broadcast %cst_14 : f32 to vector<2x48xf32>
    %27 = arith.mulf %26, %25 : vector<2x48xf32>
    %28 = arith.mulf %25, %25 : vector<2x48xf32>
    %29 = arith.mulf %28, %25 : vector<2x48xf32>
    %cst_15 = arith.constant 4.471500e-02 : f32
    %30 = vector.broadcast %cst_15 : f32 to vector<2x48xf32>
    %31 = arith.mulf %30, %29 : vector<2x48xf32>
    %32 = arith.addf %25, %31 : vector<2x48xf32>
    %cst_16 = arith.constant 0.797884583 : f32
    %33 = vector.broadcast %cst_16 : f32 to vector<2x48xf32>
    %34 = arith.mulf %33, %32 : vector<2x48xf32>
    %35 = math.tanh %34 : vector<2x48xf32>
    %cst_17 = arith.constant 1.000000e+00 : f32
    %36 = vector.broadcast %cst_17 : f32 to vector<2x48xf32>
    %37 = arith.addf %36, %35 : vector<2x48xf32>
    %38 = arith.mulf %27, %37 : vector<2x48xf32>
    %39 = arith.truncf %38 : vector<2x48xf32> to vector<2x48xbf16>
    %c0_18 = arith.constant 0 : index
    %c0_19 = arith.constant 0 : index
    %40 = vector.load %arg6[%c0_18, %c0_19] : memref<48x24xbf16, #tpu.memory_space<vmem>>, vector<48x24xbf16>
    %cst_20 = arith.constant dense<0.000000e+00> : vector<2x24xf32>
    %41 = tpu.matmul %39, %40, %cst_20 {dimension_numbers = #tpu.dot_dimension_numbers<[1], [0], [0], [1], [0, 0, 1, 1], [], []>} : vector<2x48xbf16>, vector<48x24xbf16>, vector<2x24xf32> -> vector<2x24xf32>
    %c0_21 = arith.constant 0 : index
    %c0_22 = arith.constant 0 : index
    %42 = vector.load %arg7[%c0_21, %c0_22] : memref<1x24xf32, #tpu.memory_space<vmem>>, vector<1x24xf32>
    %43 = vector.broadcast %42 : vector<1x24xf32> to vector<2x24xf32>
    %44 = arith.addf %41, %43 : vector<2x24xf32>
    %c0_23 = arith.constant 0 : index
    %c0_24 = arith.constant 0 : index
    %45 = vector.load %arg9[%c0_23, %c0_24] : memref<2x24xf32, #tpu.memory_space<vmem>>, vector<2x24xf32>
    tpu.vector_store %arg9[%c0_23, %c0_24], %44 {strides = array<i32>} : memref<2x24xf32, #tpu.memory_space<vmem>>, vector<2x24xf32>,
    %46 = arith.mulf %0, %0 : vector<2x32xf32>
    %cst_25 = arith.constant dense<0.000000e+00> : vector<2xf32>
    %47 = vector.multi_reduction <add>, %46, %cst_25 [1] : vector<2x32xf32> to vector<2xf32>
    %48 = vector.shape_cast %47 : vector<2xf32> to vector<2x1xf32>
    %49 = math.sqrt %48 : vector<2x1xf32>
    %cst_26 = arith.constant 9.99999996E-13 : f32
    %50 = vector.broadcast %cst_26 : f32 to vector<2x1xf32>
    %51 = arith.maximumf %49, %50 : vector<2x1xf32>
    %52 = vector.broadcast %51 : vector<2x1xf32> to vector<2x32xf32>
    %53 = arith.divf %0, %52 : vector<2x32xf32>
    %54 = arith.truncf %53 : vector<2x32xf32> to vector<2x32xbf16>
    %c0_27 = arith.constant 0 : index
    %c0_28 = arith.constant 0 : index
    %55 = vector.load %arg8[%c0_27, %c0_28] : memref<32x10xbf16, #tpu.memory_space<vmem>>, vector<32x10xbf16>
    %cst_29 = arith.constant dense<0.000000e+00> : vector<2x10xf32>
    %56 = tpu.matmul %54, %55, %cst_29 {dimension_numbers = #tpu.dot_dimension_numbers<[1], [0], [0], [1], [0, 0, 1, 1], [], []>} : vector<2x32xbf16>, vector<32x10xbf16>, vector<2x10xf32> -> vector<2x10xf32>
    %c0_30 = arith.constant 0 : index
    %c0_31 = arith.constant 0 : index
    %57 = vector.load %arg10[%c0_30, %c0_31] : memref<2x10xf32, #tpu.memory_space<vmem>>, vector<2x10xf32>
    tpu.vector_store %arg10[%c0_30, %c0_31], %56 {strides = array<i32>} : memref<2x10xf32, #tpu.memory_space<vmem>>, vector<2x10xf32>,
    return
  }
  func.func @transform_0(%arg0: i32) -> (i32, i32) {
    %c0_i32 = arith.constant 0 : i32
    %c0_i32_0 = arith.constant 0 : i32
    return %arg0, %c0_i32 : i32, i32
  }
  func.func @transform_1(%arg0: i32) -> (i32, i32) {
    %c0_i32 = arith.constant 0 : i32
    %c0_i32_0 = arith.constant 0 : i32
    %c0_i32_1 = arith.constant 0 : i32
    return %c0_i32, %c0_i32_0 : i32, i32
  }
  func.func @transform_2(%arg0: i32) -> (i32, i32) {
    %c0_i32 = arith.constant 0 : i32
    %c0_i32_0 = arith.constant 0 : i32
    %c0_i32_1 = arith.constant 0 : i32
    return %c0_i32, %c0_i32_0 : i32, i32
  }
  func.func @transform_3(%arg0: i32) -> (i32, i32) {
    %c0_i32 = arith.constant 0 : i32
    %c0_i32_0 = arith.constant 0 : i32
    %c0_i32_1 = arith.constant 0 : i32
    return %c0_i32, %c0_i32_0 : i32, i32
  }
  func.func @transform_4(%arg0: i32) -> (i32, i32) {
    %c0_i32 = arith.constant 0 : i32
    %c0_i32_0 = arith.constant 0 : i32
    %c0_i32_1 = arith.constant 0 : i32
    return %c0_i32, %c0_i32_0 : i32, i32
  }
  func.func @transform_5(%arg0: i32) -> (i32, i32) {
    %c0_i32 = arith.constant 0 : i32
    %c0_i32_0 = arith.constant 0 : i32
    %c0_i32_1 = arith.constant 0 : i32
    return %c0_i32, %c0_i32_0 : i32, i32
  }
  func.func @transform_6(%arg0: i32) -> (i32, i32) {
    %c0_i32 = arith.constant 0 : i32
    %c0_i32_0 = arith.constant 0 : i32
    %c0_i32_1 = arith.constant 0 : i32
    return %c0_i32, %c0_i32_0 : i32, i32
  }
  func.func @transform_7(%arg0: i32) -> (i32, i32) {
    %c0_i32 = arith.constant 0 : i32
    %c0_i32_0 = arith.constant 0 : i32
    %c0_i32_1 = arith.constant 0 : i32
    return %c0_i32, %c0_i32_0 : i32, i32
  }
  func.func @transform_8(%arg0: i32) -> (i32, i32) {
    %c0_i32 = arith.constant 0 : i32
    %c0_i32_0 = arith.constant 0 : i32
    return %arg0, %c0_i32 : i32, i32
  }
  func.func @transform_9(%arg0: i32) -> (i32, i32) {
    %c0_i32 = arith.constant 0 : i32
    %c0_i32_0 = arith.constant 0 : i32
    return %arg0, %c0_i32 : i32, i32
  }
}

</mosaic_0001>

<llo_original>
// kernel: pmtrans_forward.12
$region0: #{pmtrans_forward.12}
  #allocation0 [shape = 'u32[]', space=smem, size = 0x4, offset = 0x4, fixed_abs, tag = 'smem constant byte address 0x4 - core index']
  #allocation1 [shape = 'u32[144,128]{1,0:T(1,128)}', space=vmem, size = 0x12000, scoped, tag = 'internal scratch']
  %s0 = inlined_call_operand.vmem [shape: f32[34,32], index: 0, kind: input, shape index: {}]
  %s1 = inlined_call_operand.vmem [shape: f32[1,32], index: 1, kind: input, shape index: {}]
  %s2 = inlined_call_operand.vmem [shape: f32[1,32], index: 2, kind: input, shape index: {}]
  %s3 = inlined_call_operand.vmem [shape: bf16[32,96], index: 3, kind: input, shape index: {}]
  %s4 = inlined_call_operand.vmem [shape: f32[1,96], index: 4, kind: input, shape index: {}]
  %s5 = inlined_call_operand.vmem [shape: bf16[34,96], index: 5, kind: output, shape index: {}]
  %s6 = sld [smem:[#allocation0]]
  $region30: #{pmtrans_forward.12} parent=0
    _
  %s8 = ssub.s32 1, %s6
  %s9 = scalar_select 0, %s8, %s6
  // Predicated region
  $region2: #{pmtrans_forward.12} parent=0 // pred_check
    _
  $region3: #{pmtrans_forward.12} parent=0 // pred_check_branch
    %11 = sbr.rel (0) target = $region5
  $region4: #{pmtrans_forward.12} parent=0 // pred_region
    _
  $region5: #{pmtrans_forward.12} parent=0 // pred_fallthru
    _
  // Predicated region
  $region6: #{pmtrans_forward.12} parent=0 // pred_check
    _
  $region7: #{pmtrans_forward.12} parent=0 // pred_check_branch
    %13 = sbr.rel (0) target = $region9
  $region8: #{pmtrans_forward.12} parent=0 // pred_region
    _
  $region9: #{pmtrans_forward.12} parent=0 // pred_fallthru
    _
  // Predicated region
  $region10: #{pmtrans_forward.12} parent=0 // pred_check
    _
  $region11: #{pmtrans_forward.12} parent=0 // pred_check_branch
    %15 = sbr.rel (0) target = $region13
  $region12: #{pmtrans_forward.12} parent=0 // pred_region
    _
  $region13: #{pmtrans_forward.12} parent=0 // pred_fallthru
    _
  // Predicated region
  $region14: #{pmtrans_forward.12} parent=0 // pred_check
    _
  $region15: #{pmtrans_forward.12} parent=0 // pred_check_branch
    %17 = sbr.rel (0) target = $region17
  $region16: #{pmtrans_forward.12} parent=0 // pred_region
    _
  $region17: #{pmtrans_forward.12} parent=0 // pred_fallthru
    _
  // Predicated region
  $region18: #{pmtrans_forward.12} parent=0 // pred_check
    _
  $region19: #{pmtrans_forward.12} parent=0 // pred_check_branch
    %19 = sbr.rel (0) target = $region21
  $region20: #{pmtrans_forward.12} parent=0 // pred_region
    _
  $region21: #{pmtrans_forward.12} parent=0 // pred_fallthru
    _
  %v21 = vld [vmem:[%s0] sm:$0xff]
  %v22 = vld [vmem:[%s0 + $0x8] sm:$0xff]
  %v23 = vld [vmem:[%s0 + $0x10] sm:$0xff]
  %v24 = vld [vmem:[%s0 + $0x18] sm:$0xff]
  %v25 = vld [vmem:[%s0 + $0x20] sm:$0x3]
  %vm26 = vcmask 261120
  %v27 = vsel %vm26, %v21, 0.0
  %28 = vadd.xlane.f32.xlu0 %v27
  %v29 = vpop.xlane.xlu0 %28
  %v30 = vsel %vm26, %v22, 0.0
  %31 = vadd.xlane.f32.xlu0 %v30
  %v32 = vpop.xlane.xlu0 %31
  %v33 = vsel %vm26, %v23, 0.0
  %34 = vadd.xlane.f32.xlu0 %v33
  %v35 = vpop.xlane.xlu0 %34
  %v36 = vsel %vm26, %v24, 0.0
  %37 = vadd.xlane.f32.xlu0 %v36
  %v38 = vpop.xlane.xlu0 %37
  %vm39 = vcmask 254976
  %v40 = vsel %vm39, %v25, 0.0
  %41 = vadd.xlane.f32.xlu0 %v40
  %v42 = vpop.xlane.xlu0 %41
  %v43 = vrcp.pop 32.0
  %v44 = vmul.f32 %v29, %v43
  %v45 = vmul.f32 %v32, %v43
  %v46 = vmul.f32 %v35, %v43
  %v47 = vmul.f32 %v38, %v43
  %v48 = vmul.f32 %v42, %v43
  %v49 = vsub.f32 %v21, %v44
  %v50 = vsub.f32 %v22, %v45
  %v51 = vsub.f32 %v23, %v46
  %v52 = vsub.f32 %v24, %v47
  %v53 = vsub.f32 %v25, %v48
  %v54 = vmul.f32 %v49, %v49
  %v55 = vmul.f32 %v50, %v50
  %v56 = vmul.f32 %v51, %v51
  %v57 = vmul.f32 %v52, %v52
  %v58 = vmul.f32 %v53, %v53
  %v59 = vsel %vm26, %v54, 0.0
  %60 = vadd.xlane.f32.xlu0 %v59
  %v61 = vpop.xlane.xlu0 %60
  %v62 = vsel %vm26, %v55, 0.0
  %63 = vadd.xlane.f32.xlu0 %v62
  %v64 = vpop.xlane.xlu0 %63
  %v65 = vsel %vm26, %v56, 0.0
  %66 = vadd.xlane.f32.xlu0 %v65
  %v67 = vpop.xlane.xlu0 %66
  %v68 = vsel %vm26, %v57, 0.0
  %69 = vadd.xlane.f32.xlu0 %v68
  %v70 = vpop.xlane.xlu0 %69
  %v71 = vsel %vm39, %v58, 0.0
  %72 = vadd.xlane.f32.xlu0 %v71
  %v73 = vpop.xlane.xlu0 %72
  %v74 = vmul.f32 %v61, %v43
  %v75 = vmul.f32 %v64, %v43
  %v76 = vmul.f32 %v67, %v43
  %v77 = vmul.f32 %v70, %v43
  %v78 = vmul.f32 %v73, %v43
  %v79 = vadd.f32 %v74, 1e-06
  %v80 = vadd.f32 %v75, 1e-06
  %v81 = vadd.f32 %v76, 1e-06
  %v82 = vadd.f32 %v77, 1e-06
  %v83 = vadd.f32 %v78, 1e-06
  %v84 = vrsqrt.pop %v79
  %v85 = vrsqrt.pop %v80
  %v86 = vrsqrt.pop %v81
  %v87 = vrsqrt.pop %v82
  %v88 = vrsqrt.pop %v83
  %v89 = vmul.f32 %v49, %v84
  %v90 = vmul.f32 %v50, %v85
  %v91 = vmul.f32 %v51, %v86
  %v92 = vmul.f32 %v52, %v87
  %v93 = vmul.f32 %v53, %v88
  %v94 = vld [vmem:[%s1] sm:$0x1]
  %v96 = vlaneseq
  %v97 = vshrl.u32 %v96, 7
  %v98 = vsub.s32 0, %v97
  %v99 = vrot.slane %v94, %v98
  %v101 = vmul.f32 %v89, %v99
  %v102 = vmul.f32 %v90, %v99
  %v103 = vmul.f32 %v91, %v99
  %v104 = vmul.f32 %v92, %v99
  %v105 = vmul.f32 %v93, %v99
  %v106 = vld [vmem:[%s2] sm:$0x1]
  %v108 = vlaneseq
  %v109 = vshrl.u32 %v108, 7
  %v110 = vsub.s32 0, %v109
  %v111 = vrot.slane %v106, %v110
  %v113 = vadd.f32 %v101, %v111
  %v114 = vadd.f32 %v102, %v111
  %v115 = vadd.f32 %v103, %v111
  %v116 = vadd.f32 %v104, %v111
  %v117 = vadd.f32 %v105, %v111
  %v118 = vpack.c.bf16 %v114, %v113
  %v119 = vpack.c.bf16 %v116, %v115
  %v120 = vpack.c.bf16 %v117, %v117
  %v121 = vld [vmem:[%s3] sm:$0xf]
  %v122 = vld [vmem:[%s3 + $0x4] sm:$0xf]
  %v123 = vld [vmem:[%s3 + $0x8] sm:$0xf]
  %v124 = vld [vmem:[%s3 + $0xc] sm:$0xf]
  %v125 = vld [vmem:[%s4] sm:$0x1]
  %v127 = vlaneseq
  %v128 = vshrl.u32 %v127, 7
  %v129 = vsub.s32 0, %v128
  %v130 = vrot.slane %v125, %v129
  %v136 = vunpack.c.l.b16 %v121
  %v137 = vunpack.c.l.b16 %v122
  %v138 = vunpack.c.l.b16 %v123
  %v139 = vunpack.c.l.b16 %v124
  %v140 = vpack.c.b16 %v137, %v136
  %v141 = vpack.c.b16 %v139, %v138
  %v145 = vsel %vm26, %v118, 0
  %v148 = vsel %vm26, %v119, 0
  %v151 = vsel %vm26, %v120, 0
  %153 = vmatprep.subr.bf16.mxu0 0
  %154 = vmatpush1.bf16.msra.mxu0 %v140
  %155 = vmatprep.subr.bf16.mxu0 0
  %156 = vmatpush1.bf16.msra.mxu0 %v141
  %157 = vmatprep.subr.bf16.mxu0 0
  %158 = vmatpush1.bf16.msra.mxu0 0
  %159 = vmatprep.subr.bf16.mxu0 0
  %160 = vmatpush1.bf16.msra.mxu0 0
  %161 = vmatprep.subr.bf16.mxu0 0
  %162 = vmatpush1.bf16.msra.mxu0 0
  %163 = vmatprep.subr.bf16.mxu0 0
  %164 = vmatpush1.bf16.msra.mxu0 0
  %165 = vmatprep.subr.bf16.mxu0 0
  %166 = vmatpush1.bf16.msra.mxu0 0
  %167 = vmatprep.subr.bf16.mxu0 0
  %168 = vmatpush1.bf16.msra.mxu0 0
  %169 = vmatprep.subr.bf16.mxu0 0
  %170 = vmatpush1.bf16.msra.mxu0 0
  %171 = vmatprep.subr.bf16.mxu0 0
  %172 = vmatpush1.bf16.msra.mxu0 0
  %173 = vmatprep.subr.bf16.mxu0 0
  %174 = vmatpush1.bf16.msra.mxu0 0
  %175 = vmatprep.subr.bf16.mxu0 0
  %176 = vmatpush1.bf16.msra.mxu0 0
  %177 = vmatprep.subr.bf16.mxu0 0
  %178 = vmatpush1.bf16.msra.mxu0 0
  %179 = vmatprep.subr.bf16.mxu0 0
  %180 = vmatpush1.bf16.msra.mxu0 0
  %181 = vmatprep.subr.bf16.mxu0 0
  %182 = vmatpush1.bf16.msra.mxu0 0
  %183 = vmatprep.subr.bf16.mxu0 0
  %184 = vmatpush1.bf16.msra.mxu0 0
  %185 = vmatprep.mubr.bf16.mxu0 0
  %186 = vmatmul.mubr.bf16.gmra.mrb[0].mxu0 %v145
  %v187 = vpop.f32.mrb[0].mxu0
  %v188 = vadd.f32 %v130, %v187
  %v189 = vpop.f32.mrb[0].mxu0
  %v190 = vpop.f32.mrb[0].mxu0
  %v191 = vadd.f32 %v130, %v190
  %v192 = vpop.f32.mrb[0].mxu0
  %193 = vmatprep.mubr.bf16.mxu0 0
  %194 = vmatmul.mubr.bf16.gmra.mrb[0].mxu0 %v148
  %v195 = vpop.f32.mrb[0].mxu0
  %v196 = vadd.f32 %v130, %v195
  %v197 = vpop.f32.mrb[0].mxu0
  %v198 = vpop.f32.mrb[0].mxu0
  %v199 = vadd.f32 %v130, %v198
  %v200 = vpop.f32.mrb[0].mxu0
  %201 = vmatprep.mubr.bf16.mxu0 0
  %202 = vmatmul.mubr.bf16.gmra.mrb[0].mxu0 %v151
  %v203 = vpop.f32.mrb[0].mxu0
  %v204 = vadd.f32 %v130, %v203
  %v205 = vpop.f32.mrb[0].mxu0
  %v206 = vpop.f32.mrb[0].mxu0
  %v207 = vpop.f32.mrb[0].mxu0
  %208 = vdwg.mxu0
  %v209 = vpack.c.bf16 %v191, %v188
  %v210 = vpack.c.bf16 %v199, %v196
  %v211 = vpack.c.bf16 %v204, %v204
  %v215 = vunpack.c.l.b16 %v209
  %v216 = vunpack.c.h.b16 %v209
  %v217 = vunpack.c.l.b16 %v210
  %v218 = vunpack.c.h.b16 %v210
  %v219 = vunpack.c.l.b16 %v211
  %v220 = vpack.c.b16 %v215, %v215
  %v221 = vpack.c.b16 %v216, %v216
  %v222 = vpack.c.b16 %v217, %v217
  %v223 = vpack.c.b16 %v218, %v218
  %v224 = vpack.c.b16 %v219, %v219
  %vm230 = vcmask 781312
  %231 = vst.msk [vmem:[%s5] sm:$0xf] %vm230, %v220
  %232 = vst.msk [vmem:[%s5 + $0x4] sm:$0xf] %vm230, %v221
  %233 = vst.msk [vmem:[%s5 + $0x8] sm:$0xf] %vm230, %v222
  %234 = vst.msk [vmem:[%s5 + $0xc] sm:$0xf] %vm230, %v223
  %vm235 = vcmask 778240
  %236 = vst.msk [vmem:[%s5 + $0x10] sm:$0x1] %vm235, %v224
  // Predicated region
  $region22: #{pmtrans_forward.12} parent=0 // pred_check
    _
  $region23: #{pmtrans_forward.12} parent=0 // pred_check_branch
    %238 = sbr.rel (0) target = $region25
  $region24: #{pmtrans_forward.12} parent=0 // pred_region
    _
  $region25: #{pmtrans_forward.12} parent=0 // pred_fallthru
    _
  // Predicated region
  $region26: #{pmtrans_forward.12} parent=0 // pred_check
    _
  $region27: #{pmtrans_forward.12} parent=0 // pred_check_branch
    %240 = sbr.rel (0) target = $region29
  $region28: #{pmtrans_forward.12} parent=0 // pred_region
    _
  $region29: #{pmtrans_forward.12} parent=0 // pred_fallthru
    _

// kernel: pmtrans_forward.11
$region0: #{pmtrans_forward.11}
  #allocation0 [shape = 'u32[]', space=smem, size = 0x4, offset = 0x4, fixed_abs, tag = 'smem constant byte address 0x4 - core index']
  #allocation1 [shape = 'u32[144,128]{1,0:T(1,128)}', space=vmem, size = 0x12000, scoped, tag = 'internal scratch']
  %s0 = inlined_call_operand.vmem [shape: f32[32,48], index: 0, kind: input, shape index: {}]
  %s1 = inlined_call_operand.vmem [shape: bf16[48,32], index: 1, kind: input, shape index: {}]
  %s2 = inlined_call_operand.vmem [shape: f32[1,32], index: 2, kind: input, shape index: {}]
  %s3 = inlined_call_operand.vmem [shape: f32[32,32], index: 3, kind: output, shape index: {}]
  %s4 = sld [smem:[#allocation0]]
  $region22: #{pmtrans_forward.11} parent=0
    _
  %s6 = ssub.s32 1, %s4
  %s7 = scalar_select 0, %s6, %s4
  // Predicated region
  $region2: #{pmtrans_forward.11} parent=0 // pred_check
    _
  $region3: #{pmtrans_forward.11} parent=0 // pred_check_branch
    %9 = sbr.rel (0) target = $region5
  $region4: #{pmtrans_forward.11} parent=0 // pred_region
    _
  $region5: #{pmtrans_forward.11} parent=0 // pred_fallthru
    _
  // Predicated region
  $region6: #{pmtrans_forward.11} parent=0 // pred_check
    _
  $region7: #{pmtrans_forward.11} parent=0 // pred_check_branch
    %11 = sbr.rel (0) target = $region9
  $region8: #{pmtrans_forward.11} parent=0 // pred_region
    _
  $region9: #{pmtrans_forward.11} parent=0 // pred_fallthru
    _
  // Predicated region
  $region10: #{pmtrans_forward.11} parent=0 // pred_check
    _
  $region11: #{pmtrans_forward.11} parent=0 // pred_check_branch
    %13 = sbr.rel (0) target = $region13
  $region12: #{pmtrans_forward.11} parent=0 // pred_region
    _
  $region13: #{pmtrans_forward.11} parent=0 // pred_fallthru
    _
  %v15 = vld [vmem:[%s0] sm:$0xff]
  %v16 = vld [vmem:[%s0 + $0x8] sm:$0xff]
  %v17 = vld [vmem:[%s0 + $0x10] sm:$0xff]
  %v18 = vld [vmem:[%s0 + $0x18] sm:$0xff]
  %v19 = vpack.c.bf16 %v16, %v15
  %v20 = vpack.c.bf16 %v18, %v17
  %v21 = vld [vmem:[%s1] sm:$0xf]
  %v22 = vld [vmem:[%s1 + $0x4] sm:$0xf]
  %v23 = vld [vmem:[%s1 + $0x8] sm:$0xf]
  %v24 = vld [vmem:[%s1 + $0xc] sm:$0xf]
  %v25 = vld [vmem:[%s1 + $0x10] sm:$0xf]
  %v26 = vld [vmem:[%s1 + $0x14] sm:$0xf]
  %v27 = vld [vmem:[%s2] sm:$0x1]
  %v29 = vlaneseq
  %v30 = vshrl.u32 %v29, 7
  %v31 = vsub.s32 0, %v30
  %v32 = vrot.slane %v27, %v31
  %v40 = vunpack.c.l.b16 %v21
  %v41 = vunpack.c.l.b16 %v22
  %v42 = vunpack.c.l.b16 %v23
  %v43 = vunpack.c.l.b16 %v24
  %v44 = vunpack.c.l.b16 %v25
  %v45 = vunpack.c.l.b16 %v26
  %v46 = vpack.c.b16 %v41, %v40
  %v47 = vpack.c.b16 %v43, %v42
  %v48 = vpack.c.b16 %v45, %v44
  %vm52 = vcmask 392192
  %v54 = vsel %vm52, %v19, 0
  %v57 = vsel %vm52, %v20, 0
  %59 = vmatprep.subr.bf16.mxu0 0
  %60 = vmatpush1.bf16.msra.mxu0 %v46
  %61 = vmatprep.subr.bf16.mxu0 0
  %62 = vmatpush1.bf16.msra.mxu0 %v47
  %63 = vmatprep.subr.bf16.mxu0 0
  %64 = vmatpush1.bf16.msra.mxu0 %v48
  %65 = vmatprep.subr.bf16.mxu0 0
  %66 = vmatpush1.bf16.msra.mxu0 0
  %67 = vmatprep.subr.bf16.mxu0 0
  %68 = vmatpush1.bf16.msra.mxu0 0
  %69 = vmatprep.subr.bf16.mxu0 0
  %70 = vmatpush1.bf16.msra.mxu0 0
  %71 = vmatprep.subr.bf16.mxu0 0
  %72 = vmatpush1.bf16.msra.mxu0 0
  %73 = vmatprep.subr.bf16.mxu0 0
  %74 = vmatpush1.bf16.msra.mxu0 0
  %75 = vmatprep.subr.bf16.mxu0 0
  %76 = vmatpush1.bf16.msra.mxu0 0
  %77 = vmatprep.subr.bf16.mxu0 0
  %78 = vmatpush1.bf16.msra.mxu0 0
  %79 = vmatprep.subr.bf16.mxu0 0
  %80 = vmatpush1.bf16.msra.mxu0 0
  %81 = vmatprep.subr.bf16.mxu0 0
  %82 = vmatpush1.bf16.msra.mxu0 0
  %83 = vmatprep.subr.bf16.mxu0 0
  %84 = vmatpush1.bf16.msra.mxu0 0
  %85 = vmatprep.subr.bf16.mxu0 0
  %86 = vmatpush1.bf16.msra.mxu0 0
  %87 = vmatprep.subr.bf16.mxu0 0
  %88 = vmatpush1.bf16.msra.mxu0 0
  %89 = vmatprep.subr.bf16.mxu0 0
  %90 = vmatpush1.bf16.msra.mxu0 0
  %91 = vmatprep.mubr.bf16.mxu0 0
  %92 = vmatmul.mubr.bf16.gmra.mrb[0].mxu0 %v54
  %v93 = vpop.f32.mrb[0].mxu0
  %v94 = vadd.f32 %v32, %v93
  %v95 = vpop.f32.mrb[0].mxu0
  %v96 = vpop.f32.mrb[0].mxu0
  %v97 = vadd.f32 %v32, %v96
  %v98 = vpop.f32.mrb[0].mxu0
  %99 = vmatprep.mubr.bf16.mxu0 0
  %100 = vmatmul.mubr.bf16.gmra.mrb[0].mxu0 %v57
  %v101 = vpop.f32.mrb[0].mxu0
  %v102 = vadd.f32 %v32, %v101
  %v103 = vpop.f32.mrb[0].mxu0
  %v104 = vpop.f32.mrb[0].mxu0
  %v105 = vadd.f32 %v32, %v104
  %v106 = vpop.f32.mrb[0].mxu0
  %107 = vdwg.mxu0
  %vm108 = vcmask 261120
  %109 = vst.msk [vmem:[%s3] sm:$0xff] %vm108, %v94
  %110 = vst.msk [vmem:[%s3 + $0x8] sm:$0xff] %vm108, %v97
  %111 = vst.msk [vmem:[%s3 + $0x10] sm:$0xff] %vm108, %v102
  %112 = vst.msk [vmem:[%s3 + $0x18] sm:$0xff] %vm108, %v105
  // Predicated region
  $region14: #{pmtrans_forward.11} parent=0 // pred_check
    _
  $region15: #{pmtrans_forward.11} parent=0 // pred_check_branch
    %114 = sbr.rel (0) target = $region17
  $region16: #{pmtrans_forward.11} parent=0 // pred_region
    _
  $region17: #{pmtrans_forward.11} parent=0 // pred_fallthru
    _
  // Predicated region
  $region18: #{pmtrans_forward.11} parent=0 // pred_check
    _
  $region19: #{pmtrans_forward.11} parent=0 // pred_check_branch
    %116 = sbr.rel (0) target = $region21
  $region20: #{pmtrans_forward.11} parent=0 // pred_region
    _
  $region21: #{pmtrans_forward.11} parent=0 // pred_fallthru
    _

// kernel: pmtrans_forward.14
$region0: #{pmtrans_forward.14}
  #allocation0 [shape = 'u32[]', space=smem, size = 0x4, offset = 0x4, fixed_abs, tag = 'smem constant byte address 0x4 - core index']
  #allocation1 [shape = 'u32[144,128]{1,0:T(1,128)}', space=vmem, size = 0x12000, scoped, tag = 'internal scratch']
  %s0 = inlined_call_operand.vmem [shape: bf16[34,32], index: 0, kind: input, shape index: {}]
  %s1 = inlined_call_operand.vmem [shape: f32[34,32], index: 1, kind: input, shape index: {}]
  %s2 = inlined_call_operand.vmem [shape: bf16[32,32], index: 2, kind: input, shape index: {}]
  %s3 = inlined_call_operand.vmem [shape: f32[1,32], index: 3, kind: input, shape index: {}]
  %s4 = inlined_call_operand.vmem [shape: f32[1,32], index: 4, kind: input, shape index: {}]
  %s5 = inlined_call_operand.vmem [shape: f32[1,32], index: 5, kind: input, shape index: {}]
  %s6 = inlined_call_operand.vmem [shape: bf16[32,128], index: 6, kind: input, shape index: {}]
  %s7 = inlined_call_operand.vmem [shape: f32[1,128], index: 7, kind: input, shape index: {}]
  %s8 = inlined_call_operand.vmem [shape: f32[34,32], index: 8, kind: output, shape index: {0}]
  %s9 = inlined_call_operand.vmem [shape: bf16[34,128], index: 9, kind: output, shape index: {1}]
  %10 = xla_tuple %s8, %s9
  %s11 = sld [smem:[#allocation0]]
  $region50: #{pmtrans_forward.14} parent=0
    _
  %s13 = ssub.s32 1, %s11
  %s14 = scalar_select 0, %s13, %s11
  // Predicated region
  $region2: #{pmtrans_forward.14} parent=0 // pred_check
    _
  $region3: #{pmtrans_forward.14} parent=0 // pred_check_branch
    %16 = sbr.rel (0) target = $region5
  $region4: #{pmtrans_forward.14} parent=0 // pred_region
    _
  $region5: #{pmtrans_forward.14} parent=0 // pred_fallthru
    _
  // Predicated region
  $region6: #{pmtrans_forward.14} parent=0 // pred_check
    _
  $region7: #{pmtrans_forward.14} parent=0 // pred_check_branch
    %18 = sbr.rel (0) target = $region9
  $region8: #{pmtrans_forward.14} parent=0 // pred_region
    _
  $region9: #{pmtrans_forward.14} parent=0 // pred_fallthru
    _
  // Predicated region
  $region10: #{pmtrans_forward.14} parent=0 // pred_check
    _
  $region11: #{pmtrans_forward.14} parent=0 // pred_check_branch
    %20 = sbr.rel (0) target = $region13
  $region12: #{pmtrans_forward.14} parent=0 // pred_region
    _
  $region13: #{pmtrans_forward.14} parent=0 // pred_fallthru
    _
  // Predicated region
  $region14: #{pmtrans_forward.14} parent=0 // pred_check
    _
  $region15: #{pmtrans_forward.14} parent=0 // pred_check_branch
    %22 = sbr.rel (0) target = $region17
  $region16: #{pmtrans_forward.14} parent=0 // pred_region
    _
  $region17: #{pmtrans_forward.14} parent=0 // pred_fallthru
    _
  // Predicated region
  $region18: #{pmtrans_forward.14} parent=0 // pred_check
    _
  $region19: #{pmtrans_forward.14} parent=0 // pred_check_branch
    %24 = sbr.rel (0) target = $region21
  $region20: #{pmtrans_forward.14} parent=0 // pred_region
    _
  $region21: #{pmtrans_forward.14} parent=0 // pred_fallthru
    _
  // Predicated region
  $region22: #{pmtrans_forward.14} parent=0 // pred_check
    _
  $region23: #{pmtrans_forward.14} parent=0 // pred_check_branch
    %26 = sbr.rel (0) target = $region25
  $region24: #{pmtrans_forward.14} parent=0 // pred_region
    _
  $region25: #{pmtrans_forward.14} parent=0 // pred_fallthru
    _
  // Predicated region
  $region26: #{pmtrans_forward.14} parent=0 // pred_check
    _
  $region27: #{pmtrans_forward.14} parent=0 // pred_check_branch
    %28 = sbr.rel (0) target = $region29
  $region28: #{pmtrans_forward.14} parent=0 // pred_region
    _
  $region29: #{pmtrans_forward.14} parent=0 // pred_fallthru
    _
  // Predicated region
  $region30: #{pmtrans_forward.14} parent=0 // pred_check
    _
  $region31: #{pmtrans_forward.14} parent=0 // pred_check_branch
    %30 = sbr.rel (0) target = $region33
  $region32: #{pmtrans_forward.14} parent=0 // pred_region
    _
  $region33: #{pmtrans_forward.14} parent=0 // pred_fallthru
    _
  %v32 = vld [vmem:[%s0] sm:$0xf]
  %v33 = vld [vmem:[%s0 + $0x4] sm:$0xf]
  %v34 = vld [vmem:[%s0 + $0x8] sm:$0xf]
  %v35 = vld [vmem:[%s0 + $0xc] sm:$0xf]
  %v36 = vld [vmem:[%s0 + $0x10] sm:$0x1]
  %v37 = vld [vmem:[%s2] sm:$0xf]
  %v38 = vld [vmem:[%s2 + $0x4] sm:$0xf]
  %v39 = vld [vmem:[%s2 + $0x8] sm:$0xf]
  %v40 = vld [vmem:[%s2 + $0xc] sm:$0xf]
  %v41 = vld [vmem:[%s3] sm:$0x1]
  %v43 = vlaneseq
  %v44 = vshrl.u32 %v43, 7
  %v45 = vsub.s32 0, %v44
  %v46 = vrot.slane %v41, %v45
  %v53 = vunpack.c.l.b16 %v32
  %v54 = vunpack.c.l.b16 %v33
  %v55 = vunpack.c.l.b16 %v34
  %v56 = vunpack.c.l.b16 %v35
  %v57 = vunpack.c.l.b16 %v36
  %v58 = vpack.c.b16 %v54, %v53
  %v59 = vpack.c.b16 %v56, %v55
  %v60 = vpack.c.b16 %v57, %v57
  %v65 = vunpack.c.l.b16 %v37
  %v66 = vunpack.c.l.b16 %v38
  %v67 = vunpack.c.l.b16 %v39
  %v68 = vunpack.c.l.b16 %v40
  %v69 = vpack.c.b16 %v66, %v65
  %v70 = vpack.c.b16 %v68, %v67
  %vm73 = vcmask 261120
  %v75 = vsel %vm73, %v58, 0
  %v78 = vsel %vm73, %v59, 0
  %v81 = vsel %vm73, %v60, 0
  %83 = vmatprep.subr.bf16.mxu0 0
  %84 = vmatpush1.bf16.msra.mxu0 %v69
  %85 = vmatprep.subr.bf16.mxu0 0
  %86 = vmatpush1.bf16.msra.mxu0 %v70
  %87 = vmatprep.subr.bf16.mxu0 0
  %88 = vmatpush1.bf16.msra.mxu0 0
  %89 = vmatprep.subr.bf16.mxu0 0
  %90 = vmatpush1.bf16.msra.mxu0 0
  %91 = vmatprep.subr.bf16.mxu0 0
  %92 = vmatpush1.bf16.msra.mxu0 0
  %93 = vmatprep.subr.bf16.mxu0 0
  %94 = vmatpush1.bf16.msra.mxu0 0
  %95 = vmatprep.subr.bf16.mxu0 0
  %96 = vmatpush1.bf16.msra.mxu0 0
  %97 = vmatprep.subr.bf16.mxu0 0
  %98 = vmatpush1.bf16.msra.mxu0 0
  %99 = vmatprep.subr.bf16.mxu0 0
  %100 = vmatpush1.bf16.msra.mxu0 0
  %101 = vmatprep.subr.bf16.mxu0 0
  %102 = vmatpush1.bf16.msra.mxu0 0
  %103 = vmatprep.subr.bf16.mxu0 0
  %104 = vmatpush1.bf16.msra.mxu0 0
  %105 = vmatprep.subr.bf16.mxu0 0
  %106 = vmatpush1.bf16.msra.mxu0 0
  %107 = vmatprep.subr.bf16.mxu0 0
  %108 = vmatpush1.bf16.msra.mxu0 0
  %109 = vmatprep.subr.bf16.mxu0 0
  %110 = vmatpush1.bf16.msra.mxu0 0
  %111 = vmatprep.subr.bf16.mxu0 0
  %112 = vmatpush1.bf16.msra.mxu0 0
  %113 = vmatprep.subr.bf16.mxu0 0
  %114 = vmatpush1.bf16.msra.mxu0 0
  %115 = vmatprep.mubr.bf16.mxu0 0
  %116 = vmatmul.mubr.bf16.gmra.mrb[0].mxu0 %v75
  %v117 = vpop.f32.mrb[0].mxu0
  %v118 = vadd.f32 %v46, %v117
  %v119 = vpop.f32.mrb[0].mxu0
  %v120 = vpop.f32.mrb[0].mxu0
  %v121 = vadd.f32 %v46, %v120
  %v122 = vpop.f32.mrb[0].mxu0
  %123 = vmatprep.mubr.bf16.mxu0 0
  %124 = vmatmul.mubr.bf16.gmra.mrb[0].mxu0 %v78
  %v125 = vpop.f32.mrb[0].mxu0
  %v126 = vadd.f32 %v46, %v125
  %v127 = vpop.f32.mrb[0].mxu0
  %v128 = vpop.f32.mrb[0].mxu0
  %v129 = vadd.f32 %v46, %v128
  %v130 = vpop.f32.mrb[0].mxu0
  %131 = vmatprep.mubr.bf16.mxu0 0
  %132 = vmatmul.mubr.bf16.gmra.mrb[0].mxu0 %v81
  %v133 = vpop.f32.mrb[0].mxu0
  %v134 = vadd.f32 %v46, %v133
  %v135 = vpop.f32.mrb[0].mxu0
  %v136 = vpop.f32.mrb[0].mxu0
  %v137 = vpop.f32.mrb[0].mxu0
  %138 = vdwg.mxu0
  %v139 = vld [vmem:[%s1] sm:$0xff]
  %v140 = vld [vmem:[%s1 + $0x8] sm:$0xff]
  %v141 = vld [vmem:[%s1 + $0x10] sm:$0xff]
  %v142 = vld [vmem:[%s1 + $0x18] sm:$0xff]
  %v143 = vld [vmem:[%s1 + $0x20] sm:$0x3]
  %v144 = vadd.f32 %v139, %v118
  %v145 = vadd.f32 %v140, %v121
  %v146 = vadd.f32 %v141, %v126
  %v147 = vadd.f32 %v142, %v129
  %v148 = vadd.f32 %v143, %v134
  %149 = vst.msk [vmem:[%s8] sm:$0xff] %vm73, %v144
  %150 = vst.msk [vmem:[%s8 + $0x8] sm:$0xff] %vm73, %v145
  %151 = vst.msk [vmem:[%s8 + $0x10] sm:$0xff] %vm73, %v146
  %152 = vst.msk [vmem:[%s8 + $0x18] sm:$0xff] %vm73, %v147
  %vm153 = vcmask 254976
  %154 = vst.msk [vmem:[%s8 + $0x20] sm:$0x3] %vm153, %v148
  %v155 = vsel %vm73, %v144, 0.0
  %156 = vadd.xlane.f32.xlu0 %v155
  %v157 = vpop.xlane.xlu0 %156
  %v158 = vsel %vm73, %v145, 0.0
  %159 = vadd.xlane.f32.xlu0 %v158
  %v160 = vpop.xlane.xlu0 %159
  %v161 = vsel %vm73, %v146, 0.0
  %162 = vadd.xlane.f32.xlu0 %v161
  %v163 = vpop.xlane.xlu0 %162
  %v164 = vsel %vm73, %v147, 0.0
  %165 = vadd.xlane.f32.xlu0 %v164
  %v166 = vpop.xlane.xlu0 %165
  %v167 = vsel %vm153, %v148, 0.0
  %168 = vadd.xlane.f32.xlu0 %v167
  %v169 = vpop.xlane.xlu0 %168
  %v170 = vrcp.pop 32.0
  %v171 = vmul.f32 %v157, %v170
  %v172 = vmul.f32 %v160, %v170
  %v173 = vmul.f32 %v163, %v170
  %v174 = vmul.f32 %v166, %v170
  %v175 = vmul.f32 %v169, %v170
  %v176 = vsub.f32 %v144, %v171
  %v177 = vsub.f32 %v145, %v172
  %v178 = vsub.f32 %v146, %v173
  %v179 = vsub.f32 %v147, %v174
  %v180 = vsub.f32 %v148, %v175
  %v181 = vmul.f32 %v176, %v176
  %v182 = vmul.f32 %v177, %v177
  %v183 = vmul.f32 %v178, %v178
  %v184 = vmul.f32 %v179, %v179
  %v185 = vmul.f32 %v180, %v180
  %v186 = vsel %vm73, %v181, 0.0
  %187 = vadd.xlane.f32.xlu0 %v186
  %v188 = vpop.xlane.xlu0 %187
  %v189 = vsel %vm73, %v182, 0.0
  %190 = vadd.xlane.f32.xlu0 %v189
  %v191 = vpop.xlane.xlu0 %190
  %v192 = vsel %vm73, %v183, 0.0
  %193 = vadd.xlane.f32.xlu0 %v192
  %v194 = vpop.xlane.xlu0 %193
  %v195 = vsel %vm73, %v184, 0.0
  %196 = vadd.xlane.f32.xlu0 %v195
  %v197 = vpop.xlane.xlu0 %196
  %v198 = vsel %vm153, %v185, 0.0
  %199 = vadd.xlane.f32.xlu0 %v198
  %v200 = vpop.xlane.xlu0 %199
  %v201 = vmul.f32 %v188, %v170
  %v202 = vmul.f32 %v191, %v170
  %v203 = vmul.f32 %v194, %v170
  %v204 = vmul.f32 %v197, %v170
  %v205 = vmul.f32 %v200, %v170
  %v206 = vadd.f32 %v201, 1e-06
  %v207 = vadd.f32 %v202, 1e-06
  %v208 = vadd.f32 %v203, 1e-06
  %v209 = vadd.f32 %v204, 1e-06
  %v210 = vadd.f32 %v205, 1e-06
  %v211 = vrsqrt.pop %v206
  %v212 = vrsqrt.pop %v207
  %v213 = vrsqrt.pop %v208
  %v214 = vrsqrt.pop %v209
  %v215 = vrsqrt.pop %v210
  %v216 = vmul.f32 %v176, %v211
  %v217 = vmul.f32 %v177, %v212
  %v218 = vmul.f32 %v178, %v213
  %v219 = vmul.f32 %v179, %v214
  %v220 = vmul.f32 %v180, %v215
  %v221 = vld [vmem:[%s4] sm:$0x1]
  %v223 = vlaneseq
  %v224 = vshrl.u32 %v223, 7
  %v225 = vsub.s32 0, %v224
  %v226 = vrot.slane %v221, %v225
  %v228 = vmul.f32 %v216, %v226
  %v229 = vmul.f32 %v217, %v226
  %v230 = vmul.f32 %v218, %v226
  %v231 = vmul.f32 %v219, %v226
  %v232 = vmul.f32 %v220, %v226
  %v233 = vld [vmem:[%s5] sm:$0x1]
  %v235 = vlaneseq
  %v236 = vshrl.u32 %v235, 7
  %v237 = vsub.s32 0, %v236
  %v238 = vrot.slane %v233, %v237
  %v240 = vadd.f32 %v228, %v238
  %v241 = vadd.f32 %v229, %v238
  %v242 = vadd.f32 %v230, %v238
  %v243 = vadd.f32 %v231, %v238
  %v244 = vadd.f32 %v232, %v238
  %v245 = vpack.c.bf16 %v241, %v240
  %v246 = vpack.c.bf16 %v243, %v242
  %v247 = vpack.c.bf16 %v244, %v244
  %v248 = vld [vmem:[%s6] sm:$0xf]
  %v249 = vld [vmem:[%s6 + $0x4] sm:$0xf]
  %v250 = vld [vmem:[%s6 + $0x8] sm:$0xf]
  %v251 = vld [vmem:[%s6 + $0xc] sm:$0xf]
  %v252 = vld [vmem:[%s7] sm:$0x1]
  %v254 = vlaneseq
  %v255 = vshrl.u32 %v254, 7
  %v256 = vsub.s32 0, %v255
  %v257 = vrot.slane %v252, %v256
  %v263 = vunpack.c.l.b16 %v248
  %v264 = vunpack.c.l.b16 %v249
  %v265 = vunpack.c.l.b16 %v250
  %v266 = vunpack.c.l.b16 %v251
  %v267 = vpack.c.b16 %v264, %v263
  %v268 = vpack.c.b16 %v266, %v265
  %v272 = vsel %vm73, %v245, 0
  %v275 = vsel %vm73, %v246, 0
  %v278 = vsel %vm73, %v247, 0
  %280 = vmatprep.subr.bf16.mxu0 0
  %281 = vmatpush1.bf16.msra.mxu0 %v267
  %282 = vmatprep.subr.bf16.mxu0 0
  %283 = vmatpush1.bf16.msra.mxu0 %v268
  %284 = vmatprep.subr.bf16.mxu0 0
  %285 = vmatpush1.bf16.msra.mxu0 0
  %286 = vmatprep.subr.bf16.mxu0 0
  %287 = vmatpush1.bf16.msra.mxu0 0
  %288 = vmatprep.subr.bf16.mxu0 0
  %289 = vmatpush1.bf16.msra.mxu0 0
  %290 = vmatprep.subr.bf16.mxu0 0
  %291 = vmatpush1.bf16.msra.mxu0 0
  %292 = vmatprep.subr.bf16.mxu0 0
  %293 = vmatpush1.bf16.msra.mxu0 0
  %294 = vmatprep.subr.bf16.mxu0 0
  %295 = vmatpush1.bf16.msra.mxu0 0
  %296 = vmatprep.subr.bf16.mxu0 0
  %297 = vmatpush1.bf16.msra.mxu0 0
  %298 = vmatprep.subr.bf16.mxu0 0
  %299 = vmatpush1.bf16.msra.mxu0 0
  %300 = vmatprep.subr.bf16.mxu0 0
  %301 = vmatpush1.bf16.msra.mxu0 0
  %302 = vmatprep.subr.bf16.mxu0 0
  %303 = vmatpush1.bf16.msra.mxu0 0
  %304 = vmatprep.subr.bf16.mxu0 0
  %305 = vmatpush1.bf16.msra.mxu0 0
  %306 = vmatprep.subr.bf16.mxu0 0
  %307 = vmatpush1.bf16.msra.mxu0 0
  %308 = vmatprep.subr.bf16.mxu0 0
  %309 = vmatpush1.bf16.msra.mxu0 0
  %310 = vmatprep.subr.bf16.mxu0 0
  %311 = vmatpush1.bf16.msra.mxu0 0
  %312 = vmatprep.mubr.bf16.mxu0 0
  %313 = vmatmul.mubr.bf16.gmra.mrb[0].mxu0 %v272
  %v314 = vpop.f32.mrb[0].mxu0
  %v315 = vadd.f32 %v257, %v314
  %v316 = vpop.f32.mrb[0].mxu0
  %v317 = vpop.f32.mrb[0].mxu0
  %v318 = vadd.f32 %v257, %v317
  %v319 = vpop.f32.mrb[0].mxu0
  %320 = vmatprep.mubr.bf16.mxu0 0
  %321 = vmatmul.mubr.bf16.gmra.mrb[0].mxu0 %v275
  %v322 = vpop.f32.mrb[0].mxu0
  %v323 = vadd.f32 %v257, %v322
  %v324 = vpop.f32.mrb[0].mxu0
  %v325 = vpop.f32.mrb[0].mxu0
  %v326 = vadd.f32 %v257, %v325
  %v327 = vpop.f32.mrb[0].mxu0
  %328 = vmatprep.mubr.bf16.mxu0 0
  %329 = vmatmul.mubr.bf16.gmra.mrb[0].mxu0 %v278
  %v330 = vpop.f32.mrb[0].mxu0
  %v331 = vadd.f32 %v257, %v330
  %v332 = vpop.f32.mrb[0].mxu0
  %v333 = vpop.f32.mrb[0].mxu0
  %v334 = vpop.f32.mrb[0].mxu0
  %335 = vdwg.mxu0
  %v336 = vmul.f32 %v315, 0.5
  %v337 = vmul.f32 %v318, 0.5
  %v338 = vmul.f32 %v323, 0.5
  %v339 = vmul.f32 %v326, 0.5
  %v340 = vmul.f32 %v331, 0.5
  %v341 = vmul.f32 %v315, %v315
  %v342 = vmul.f32 %v318, %v318
  %v343 = vmul.f32 %v323, %v323
  %v344 = vmul.f32 %v326, %v326
  %v345 = vmul.f32 %v331, %v331
  %v346 = vmul.f32 %v341, %v315
  %v347 = vmul.f32 %v342, %v318
  %v348 = vmul.f32 %v343, %v323
  %v349 = vmul.f32 %v344, %v326
  %v350 = vmul.f32 %v345, %v331
  %v351 = vmul.f32 %v346, 0.044715
  %v352 = vmul.f32 %v347, 0.044715
  %v353 = vmul.f32 %v348, 0.044715
  %v354 = vmul.f32 %v349, 0.044715
  %v355 = vmul.f32 %v350, 0.044715
  %v356 = vadd.f32 %v315, %v351
  %v357 = vadd.f32 %v318, %v352
  %v358 = vadd.f32 %v323, %v353
  %v359 = vadd.f32 %v326, %v354
  %v360 = vadd.f32 %v331, %v355
  %v361 = vmul.f32 %v356, 0.7978846
  %v362 = vmul.f32 %v357, 0.7978846
  %v363 = vmul.f32 %v358, 0.7978846
  %v364 = vmul.f32 %v359, 0.7978846
  %v365 = vmul.f32 %v360, 0.7978846
  %v366 = vtanh.pop %v361
  %v367 = vtanh.pop %v362
  %v368 = vtanh.pop %v363
  %v369 = vtanh.pop %v364
  %v370 = vtanh.pop %v365
  %v371 = vadd.f32 %v366, 1.0
  %v372 = vadd.f32 %v367, 1.0
  %v373 = vadd.f32 %v368, 1.0
  %v374 = vadd.f32 %v369, 1.0
  %v375 = vadd.f32 %v370, 1.0
  %v376 = vmul.f32 %v336, %v371
  %v377 = vmul.f32 %v337, %v372
  %v378 = vmul.f32 %v338, %v373
  %v379 = vmul.f32 %v339, %v374
  %v380 = vmul.f32 %v340, %v375
  %v381 = vpack.c.bf16 %v377, %v376
  %v382 = vpack.c.bf16 %v379, %v378
  %v383 = vpack.c.bf16 %v380, %v380
  %v387 = vunpack.c.l.b16 %v381
  %v388 = vunpack.c.h.b16 %v381
  %v389 = vunpack.c.l.b16 %v382
  %v390 = vunpack.c.h.b16 %v382
  %v391 = vunpack.c.l.b16 %v383
  %v392 = vpack.c.b16 %v387, %v387
  %v393 = vpack.c.b16 %v388, %v388
  %v394 = vpack.c.b16 %v389, %v389
  %v395 = vpack.c.b16 %v390, %v390
  %v396 = vpack.c.b16 %v391, %v391
  %402 = vst [vmem:[%s9] sm:$0xf] %v392
  %403 = vst [vmem:[%s9 + $0x4] sm:$0xf] %v393
  %404 = vst [vmem:[%s9 + $0x8] sm:$0xf] %v394
  %405 = vst [vmem:[%s9 + $0xc] sm:$0xf] %v395
  %406 = vst [vmem:[%s9 + $0x10] sm:$0x1] %v396
  // Predicated region
  $region34: #{pmtrans_forward.14} parent=0 // pred_check
    _
  $region35: #{pmtrans_forward.14} parent=0 // pred_check_branch
    %408 = sbr.rel (0) target = $region37
  $region36: #{pmtrans_forward.14} parent=0 // pred_region
    _
  $region37: #{pmtrans_forward.14} parent=0 // pred_fallthru
    _
  // Predicated region
  $region38: #{pmtrans_forward.14} parent=0 // pred_check
    _
  $region39: #{pmtrans_forward.14} parent=0 // pred_check_branch
    %410 = sbr.rel (0) target = $region41
  $region40: #{pmtrans_forward.14} parent=0 // pred_region
    _
  $region41: #{pmtrans_forward.14} parent=0 // pred_fallthru
    _
  // Predicated region
  $region42: #{pmtrans_forward.14} parent=0 // pred_check
    _
  $region43: #{pmtrans_forward.14} parent=0 // pred_check_branch
    %412 = sbr.rel (0) target = $region45
  $region44: #{pmtrans_forward.14} parent=0 // pred_region
    _
  $region45: #{pmtrans_forward.14} parent=0 // pred_fallthru
    _
  // Predicated region
  $region46: #{pmtrans_forward.14} parent=0 // pred_check
    _
  $region47: #{pmtrans_forward.14} parent=0 // pred_check_branch
    %414 = sbr.rel (0) target = $region49
  $region48: #{pmtrans_forward.14} parent=0 // pred_region
    _
  $region49: #{pmtrans_forward.14} parent=0 // pred_fallthru
    _

// kernel: pmtrans_forward.13
$region0: #{pmtrans_forward.13}
  #allocation0 [shape = 'u32[]', space=smem, size = 0x4, offset = 0x4, fixed_abs, tag = 'smem constant byte address 0x4 - core index']
  #allocation1 [shape = 'u32[144,128]{1,0:T(1,128)}', space=vmem, size = 0x12000, scoped, tag = 'internal scratch']
  %s0 = inlined_call_operand.vmem [shape: bf16[2,17,96], index: 0, kind: input, shape index: {}]
  %s1 = inlined_call_operand.vmem [shape: bf16[2,17,32], index: 1, kind: output, shape index: {}]
  %s2 = sld [smem:[#allocation0]]
  $region37: #{pmtrans_forward.13} parent=0
    _
  %s4 = ssub.s32 1, %s2
  %s5 = scalar_select 0, %s4, %s2
  loop: start=0, step=1, limit=4
  $region2: #{pmtrans_forward.13} parent=0 // loop_pre_header
    _
  $region3: #{pmtrans_forward.13} parent=0 // loop_header
    %s7 = sphi 0, %s11
    %p8 = scmp.ge.s32.totalorder %s7, 4
    %s17 = sphi 0, %s19
    %s20 = sphi 0, %s17
    %s21 = sphi 0, %s20
    %s37 = sphi 0, %s21
    %s43 = sphi 0, %s45
    %s46 = sphi 0, %s43
    %s47 = sphi 0, %s46
    %s63 = sphi 0, %s47
  $region4: #{pmtrans_forward.13} parent=0 // loop_header_branch
    %10 = sbr.rel (%p8) target = $region8
  $region5: #{pmtrans_forward.13} parent=0 // loop_body
    %s12 = ssub.s32 %s7, 1
    %s13 = ssub.s32 %s7, 2
    %s14 = sadd.s32 %s7, 1
    %s15 = ssub.s32 %s7, %s14
    %p16 = scmp.eq.s32.totalorder %s15, 0
    %s18 = sadd.s32 %s17, 1
    %s19 = scalar_select %p16, %s17, %s18
    %p22 = pneg %p16
    %p23 = scmp.eq.s32.totalorder %s7, 1
    %p24 = por %p22, %p23
    %p25 = scmp.ne.s32.totalorder %s17, %s20
    %p26 = scmp.eq.s32.totalorder %s7, 0
    %p27 = por %p25, %p26
    %p28 = scmp.ne.s32.totalorder %s17, %s20
    %p29 = scmp.eq.s32.totalorder %s12, 1
    %p30 = por %p28, %p29
    %p31 = scmp.ne.s32.totalorder %s20, %s21
    %p32 = scmp.eq.s32.totalorder %s12, 0
    %p33 = por %p31, %p32
    %p34 = scmp.ne.s32.totalorder %s20, %s21
    %p35 = scmp.eq.s32.totalorder %s13, 1
    %p36 = por %p34, %p35
    %p38 = scmp.ne.s32.totalorder %s21, %s37
    %p39 = scmp.eq.s32.totalorder %s13, 0
    %p40 = por %p38, %p39
    %s41 = ssub.s32 %s7, %s14
    %p42 = scmp.eq.s32.totalorder %s41, 0
    %s44 = sadd.s32 %s43, 1
    %s45 = scalar_select %p42, %s43, %s44
    %p48 = pneg %p42
    %p49 = scmp.eq.s32.totalorder %s7, 1
    %p50 = por %p48, %p49
    %p51 = scmp.ne.s32.totalorder %s43, %s46
    %p52 = scmp.eq.s32.totalorder %s7, 0
    %p53 = por %p51, %p52
    %p54 = scmp.ne.s32.totalorder %s43, %s46
    %p55 = scmp.eq.s32.totalorder %s12, 1
    %p56 = por %p54, %p55
    %p57 = scmp.ne.s32.totalorder %s46, %s47
    %p58 = scmp.eq.s32.totalorder %s12, 0
    %p59 = por %p57, %p58
    %p60 = scmp.ne.s32.totalorder %s46, %s47
    %p61 = scmp.eq.s32.totalorder %s13, 1
    %p62 = por %p60, %p61
    %p64 = scmp.ne.s32.totalorder %s47, %s63
    %p65 = scmp.eq.s32.totalorder %s13, 0
    %p66 = por %p64, %p65
    %p67 = scmp.le.s32.totalorder 1, %s7
    %p68 = scmp.lt.s32.totalorder %s7, 3
    %p69 = pnand %p67, %p68
    %p70 = pneg %p69
    // Predicated region
    $region9: #{pmtrans_forward.13} parent=5 // pred_check
      _
    $region10: #{pmtrans_forward.13} parent=5 // pred_check_branch
      %72 = sbr.rel (%p69) target = $region12
    $region11: #{pmtrans_forward.13} parent=5 // pred_region
      %s73 = ssub.s32 %s7, 1
    $region12: #{pmtrans_forward.13} parent=5 // pred_fallthru
      _
    %p74 = scmp.lt.s32.totalorder %s7, 2
    // Predicated region
    $region13: #{pmtrans_forward.13} parent=5 // pred_check
      %p75 = pneg %p74
    $region14: #{pmtrans_forward.13} parent=5 // pred_check_branch
      %77 = sbr.rel (%p75) target = $region16
    $region15: #{pmtrans_forward.13} parent=5 // pred_region
      // Predicated region
      $region17: #{pmtrans_forward.13} parent=15 // pred_check
        %p78 = pneg %p27
      $region18: #{pmtrans_forward.13} parent=15 // pred_check_branch
        %80 = sbr.rel (%p78) target = $region20
      $region19: #{pmtrans_forward.13} parent=15 // pred_region
        %p81 = scmp.lt.s32.totalorder %s7, 1
        %s82 = scalar_select %p81, %s7, 1
        %s83 = smul.addr %s82, 3
        %s84 = smul.addr %s83, 4
        %s85 = scalar_lea.vmem %s0, %s84
      $region20: #{pmtrans_forward.13} parent=15 // pred_fallthru
        _
    $region16: #{pmtrans_forward.13} parent=5 // pred_fallthru
      _
    %p86 = scmp.le.s32.totalorder 1, %s7
    %p87 = scmp.lt.s32.totalorder %s7, 3
    %p88 = pnand %p86, %p87
    %p89 = pneg %p88
    // Predicated region
    $region21: #{pmtrans_forward.13} parent=5 // pred_check
      _
    $region22: #{pmtrans_forward.13} parent=5 // pred_check_branch
      %91 = sbr.rel (%p88) target = $region24
    $region23: #{pmtrans_forward.13} parent=5 // pred_region
      %s92 = ssub.s32 %s7, 1
      %p93 = scmp.lt.s32.totalorder %s12, 1
      %s94 = scalar_select %p93, %s12, 1
      %s95 = smul.addr %s94, 3
      %s96 = smul.addr %s95, 4
      %s97 = scalar_lea.vmem %s0, %s96
      %p98 = pneg %p33
      %p99 = pneg %p30
      %p100 = pneg %p59
      %p101 = pneg %p56
      %p102 = scmp.lt.s32.totalorder %s12, 1
      %s103 = scalar_select %p102, %s12, 1
      %s104 = smul.addr %s103, 3
      %s105 = smul.addr %s104, 4
      %s106 = scalar_lea.vmem %s1, %s105
      %p107 = scmp.lt.s32.totalorder %s12, 1
      %s108 = scalar_select %p107, %s12, 1
      %s109 = smul.addr %s108, 3
      %s110 = smul.addr %s109, 4
      %s111 = scalar_lea.vmem %s0, %s110
      %p112 = scmp.lt.s32.totalorder %s12, 1
      %s113 = scalar_select %p112, %s12, 1
      %s114 = smul.addr %s113, 3
      %s115 = smul.addr %s114, 4
      %s116 = scalar_lea.vmem %s1, %s115
      %v119 = vld [vmem:[%s111] sm:$0xf]
      %v120 = vld [vmem:[%s111 + $0x4] sm:$0xf]
      %v121 = vld [vmem:[%s111 + $0x8] sm:$0x1]
      %v122 = vmul.bf16 %v119, 1052065461
      %v123 = vmul.bf16 %v120, 1052065461
      %v124 = vmul.bf16 %v121, 1052065461
      %v128 = vunpack.c.l.b16 %v122
      %v129 = vunpack.c.l.b16 %v123
      %v130 = vunpack.c.l.b16 %v124
      %v131 = vpack.c.b16 %v129, %v128
      %v132 = vpack.c.b16 %v130, %v130
      %v136 = vunpack.c.l.b16 %v119
      %v137 = vunpack.c.l.b16 %v120
      %v138 = vunpack.c.l.b16 %v121
      %v139 = vpack.c.b16 %v137, %v136
      %v140 = vpack.c.b16 %v138, %v138
      %141 = vrot.lane.b32.xlu0 %v139, 96
      %v142 = vpop.permute.xlu0 %141
      %143 = vrot.lane.b32.xlu0 %v140, 96
      %v144 = vpop.permute.xlu0 %143
      %vm145 = vcmask 64512
      %v147 = vsel %vm145, %v131, 0
      %v150 = vsel %vm145, %v132, 0
      %v153 = vsel %vm145, %v142, 0
      %v156 = vsel %vm145, %v144, 0
      %158 = vmatprep.subr.bf16.mxu0 0
      %159 = vmatpush1.bf16.xpose.msra.mxu0 %v153
      %160 = vmatprep.subr.bf16.mxu0 0
      %161 = vmatpush1.bf16.xpose.msra.mxu0 %v156
      %162 = vmatprep.subr.bf16.mxu0 0
      %163 = vmatpush1.bf16.xpose.msra.mxu0 0
      %164 = vmatprep.subr.bf16.mxu0 0
      %165 = vmatpush1.bf16.xpose.msra.mxu0 0
      %166 = vmatprep.subr.bf16.mxu0 0
      %167 = vmatpush1.bf16.xpose.msra.mxu0 0
      %168 = vmatprep.subr.bf16.mxu0 0
      %169 = vmatpush1.bf16.xpose.msra.mxu0 0
      %170 = vmatprep.subr.bf16.mxu0 0
      %171 = vmatpush1.bf16.xpose.msra.mxu0 0
      %172 = vmatprep.subr.bf16.mxu0 0
      %173 = vmatpush1.bf16.xpose.msra.mxu0 0
      %174 = vmatprep.subr.bf16.mxu0 0
      %175 = vmatpush1.bf16.xpose.msra.mxu0 0
      %176 = vmatprep.subr.bf16.mxu0 0
      %177 = vmatpush1.bf16.xpose.msra.mxu0 0
      %178 = vmatprep.subr.bf16.mxu0 0
      %179 = vmatpush1.bf16.xpose.msra.mxu0 0
      %180 = vmatprep.subr.bf16.mxu0 0
      %181 = vmatpush1.bf16.xpose.msra.mxu0 0
      %182 = vmatprep.subr.bf16.mxu0 0
      %183 = vmatpush1.bf16.xpose.msra.mxu0 0
      %184 = vmatprep.subr.bf16.mxu0 0
      %185 = vmatpush1.bf16.xpose.msra.mxu0 0
      %186 = vmatprep.subr.bf16.mxu0 0
      %187 = vmatpush1.bf16.xpose.msra.mxu0 0
      %188 = vmatprep.subr.bf16.mxu0 0
      %189 = vmatpush1.bf16.xpose.msra.mxu0 0
      %190 = vmatprep.mubr.bf16.mxu0 0
      %191 = vmatmul.mubr.bf16.gmra.mrb[0].mxu0 %v147
      %v192 = vpop.f32.mrb[0].mxu0
      %v193 = vadd.f32 0.0, %v192
      %v194 = vpop.f32.mrb[0].mxu0
      %v195 = vpop.f32.mrb[0].mxu0
      %v196 = vadd.f32 0.0, %v195
      %v197 = vpop.f32.mrb[0].mxu0
      %198 = vmatprep.mubr.bf16.mxu0 0
      %199 = vmatmul.mubr.bf16.gmra.mrb[0].mxu0 %v150
      %v200 = vpop.f32.mrb[0].mxu0
      %v201 = vadd.f32 0.0, %v200
      %v202 = vpop.f32.mrb[0].mxu0
      %v203 = vpop.f32.mrb[0].mxu0
      %v204 = vpop.f32.mrb[0].mxu0
      %205 = vdwg.mxu0
      %vm206 = vcmask 138240
      %v207 = vsel %vm206, %v193, -inf
      %208 = vmax.xlane.f32.xlu0 %v207
      %v209 = vpop.xlane.xlu0 %208
      %v210 = vsel %vm206, %v196, -inf
      %211 = vmax.xlane.f32.xlu0 %v210
      %v212 = vpop.xlane.xlu0 %211
      %vm213 = vcmask 131072
      %v214 = vsel %vm213, %v201, -inf
      %215 = vmax.xlane.f32.xlu0 %v214
      %v216 = vpop.xlane.xlu0 %215
      %v217 = vsub.f32 %v193, %v209
      %v218 = vsub.f32 %v196, %v212
      %v219 = vsub.f32 %v201, %v216
      %v220 = vmul.f32 %v217, 1.442695
      %v221 = vpow.pop %v220
      %v222 = vmul.f32 %v218, 1.442695
      %v223 = vpow.pop %v222
      %v224 = vmul.f32 %v219, 1.442695
      %v225 = vpow.pop %v224
      %v226 = vsel %vm206, %v221, 0.0
      %227 = vadd.xlane.f32.xlu0 %v226
      %v228 = vpop.xlane.xlu0 %227
      %v229 = vsel %vm206, %v223, 0.0
      %230 = vadd.xlane.f32.xlu0 %v229
      %v231 = vpop.xlane.xlu0 %230
      %v232 = vsel %vm213, %v225, 0.0
      %233 = vadd.xlane.f32.xlu0 %v232
      %v234 = vpop.xlane.xlu0 %233
      %v235 = vrcp.pop %v228
      %v236 = vrcp.pop %v231
      %v237 = vrcp.pop %v234
      %v238 = vmul.f32 %v221, %v235
      %v239 = vmul.f32 %v223, %v236
      %v240 = vmul.f32 %v225, %v237
      %v241 = vpack.c.bf16 %v239, %v238
      %v242 = vpack.c.bf16 %v240, %v240
      %243 = vrot.lane.b32.xlu0 %v139, 64
      %v244 = vpop.permute.xlu0 %243
      %245 = vrot.lane.b32.xlu0 %v140, 64
      %v246 = vpop.permute.xlu0 %245
      %v249 = vsel %vm206, %v241, 0
      %v252 = vsel %vm206, %v242, 0
      %vm254 = vcmask 1040384
      %v255 = vsel 0, 4294967295, 65535
      %v256 = vsel %vm254, %v255, 0
      %v258 = vand.u32 %v246, %v256
      %260 = vmatprep.subr.bf16.mxu0 0
      %261 = vmatpush1.bf16.msra.mxu0 %v244
      %262 = vmatprep.subr.bf16.mxu0 0
      %263 = vmatpush1.bf16.msra.mxu0 %v258
      %264 = vmatprep.subr.bf16.mxu0 0
      %265 = vmatpush1.bf16.msra.mxu0 0
      %266 = vmatprep.subr.bf16.mxu0 0
      %267 = vmatpush1.bf16.msra.mxu0 0
      %268 = vmatprep.subr.bf16.mxu0 0
      %269 = vmatpush1.bf16.msra.mxu0 0
      %270 = vmatprep.subr.bf16.mxu0 0
      %271 = vmatpush1.bf16.msra.mxu0 0
      %272 = vmatprep.subr.bf16.mxu0 0
      %273 = vmatpush1.bf16.msra.mxu0 0
      %274 = vmatprep.subr.bf16.mxu0 0
      %275 = vmatpush1.bf16.msra.mxu0 0
      %276 = vmatprep.subr.bf16.mxu0 0
      %277 = vmatpush1.bf16.msra.mxu0 0
      %278 = vmatprep.subr.bf16.mxu0 0
      %279 = vmatpush1.bf16.msra.mxu0 0
      %280 = vmatprep.subr.bf16.mxu0 0
      %281 = vmatpush1.bf16.msra.mxu0 0
      %282 = vmatprep.subr.bf16.mxu0 0
      %283 = vmatpush1.bf16.msra.mxu0 0
      %284 = vmatprep.subr.bf16.mxu0 0
      %285 = vmatpush1.bf16.msra.mxu0 0
      %286 = vmatprep.subr.bf16.mxu0 0
      %287 = vmatpush1.bf16.msra.mxu0 0
      %288 = vmatprep.subr.bf16.mxu0 0
      %289 = vmatpush1.bf16.msra.mxu0 0
      %290 = vmatprep.subr.bf16.mxu0 0
      %291 = vmatpush1.bf16.msra.mxu0 0
      %292 = vmatprep.mubr.bf16.mxu0 0
      %293 = vmatmul.mubr.bf16.gmra.mrb[0].mxu0 %v249
      %v294 = vpop.f32.mrb[0].mxu0
      %v295 = vadd.f32 0.0, %v294
      %v296 = vpop.f32.mrb[0].mxu0
      %v297 = vpop.f32.mrb[0].mxu0
      %v298 = vadd.f32 0.0, %v297
      %v299 = vpop.f32.mrb[0].mxu0
      %300 = vmatprep.mubr.bf16.mxu0 0
      %301 = vmatmul.mubr.bf16.gmra.mrb[0].mxu0 %v252
      %v302 = vpop.f32.mrb[0].mxu0
      %v303 = vadd.f32 0.0, %v302
      %v304 = vpop.f32.mrb[0].mxu0
      %v305 = vpop.f32.mrb[0].mxu0
      %v306 = vpop.f32.mrb[0].mxu0
      %307 = vdwg.mxu0
      %v308 = vpack.c.bf16 %v298, %v295
      %v309 = vpack.c.bf16 %v303, %v303
      %v312 = vunpack.c.l.b16 %v308
      %v313 = vunpack.c.h.b16 %v308
      %v314 = vunpack.c.l.b16 %v309
      %v315 = vpack.c.b16 %v312, %v312
      %v316 = vpack.c.b16 %v313, %v313
      %v317 = vpack.c.b16 %v314, %v314
      %vm321 = vcmask 60416
      %322 = vst.msk [vmem:[%s116] sm:$0xf] %vm321, %v315
      %323 = vst.msk [vmem:[%s116 + $0x4] sm:$0xf] %vm321, %v316
      %vm324 = vcmask 57344
      %vm325 = vsmask.f32 256
      %vm326 = vmand %vm324, %vm325
      %v327 = vld [vmem:[%s116 + $0x8] sm:$0x1]
      %v328 = vsel %vm326, %v317, %v327
      %329 = vst [vmem:[%s116 + $0x8] sm:$0x1] %v328
      %v330 = vld [vmem:[%s111] sm:$0xf]
      %v331 = vld [vmem:[%s111 + $0x4] sm:$0xf]
      %v332 = vld [vmem:[%s111 + $0x8] sm:$0x1]
      %v333 = vmul.bf16 %v330, 1052065461
      %v334 = vmul.bf16 %v331, 1052065461
      %v335 = vmul.bf16 %v332, 1052065461
      %v339 = vunpack.c.l.b16 %v333
      %v340 = vunpack.c.l.b16 %v334
      %v341 = vunpack.c.l.b16 %v335
      %v342 = vpack.c.b16 %v340, %v339
      %v343 = vpack.c.b16 %v341, %v341
      %344 = vrot.lane.b32.xlu0 %v342, 120
      %v345 = vpop.permute.xlu0 %344
      %346 = vrot.lane.b32.xlu0 %v343, 120
      %v347 = vpop.permute.xlu0 %346
      %v351 = vunpack.c.l.b16 %v330
      %v352 = vunpack.c.l.b16 %v331
      %v353 = vunpack.c.l.b16 %v332
      %v354 = vpack.c.b16 %v352, %v351
      %v355 = vpack.c.b16 %v353, %v353
      %356 = vrot.lane.b32.xlu0 %v354, 88
      %v357 = vpop.permute.xlu0 %356
      %358 = vrot.lane.b32.xlu0 %v355, 88
      %v359 = vpop.permute.xlu0 %358
      %v361 = vsel %vm145, %v345, 0
      %v364 = vsel %vm145, %v347, 0
      %v367 = vsel %vm145, %v357, 0
      %v370 = vsel %vm145, %v359, 0
      %372 = vmatprep.subr.bf16.mxu0 0
      %373 = vmatpush1.bf16.xpose.msra.mxu0 %v367
      %374 = vmatprep.subr.bf16.mxu0 0
      %375 = vmatpush1.bf16.xpose.msra.mxu0 %v370
      %376 = vmatprep.subr.bf16.mxu0 0
      %377 = vmatpush1.bf16.xpose.msra.mxu0 0
      %378 = vmatprep.subr.bf16.mxu0 0
      %379 = vmatpush1.bf16.xpose.msra.mxu0 0
      %380 = vmatprep.subr.bf16.mxu0 0
      %381 = vmatpush1.bf16.xpose.msra.mxu0 0
      %382 = vmatprep.subr.bf16.mxu0 0
      %383 = vmatpush1.bf16.xpose.msra.mxu0 0
      %384 = vmatprep.subr.bf16.mxu0 0
      %385 = vmatpush1.bf16.xpose.msra.mxu0 0
      %386 = vmatprep.subr.bf16.mxu0 0
      %387 = vmatpush1.bf16.xpose.msra.mxu0 0
      %388 = vmatprep.subr.bf16.mxu0 0
      %389 = vmatpush1.bf16.xpose.msra.mxu0 0
      %390 = vmatprep.subr.bf16.mxu0 0
      %391 = vmatpush1.bf16.xpose.msra.mxu0 0
      %392 = vmatprep.subr.bf16.mxu0 0
      %393 = vmatpush1.bf16.xpose.msra.mxu0 0
      %394 = vmatprep.subr.bf16.mxu0 0
      %395 = vmatpush1.bf16.xpose.msra.mxu0 0
      %396 = vmatprep.subr.bf16.mxu0 0
      %397 = vmatpush1.bf16.xpose.msra.mxu0 0
      %398 = vmatprep.subr.bf16.mxu0 0
      %399 = vmatpush1.bf16.xpose.msra.mxu0 0
      %400 = vmatprep.subr.bf16.mxu0 0
      %401 = vmatpush1.bf16.xpose.msra.mxu0 0
      %402 = vmatprep.subr.bf16.mxu0 0
      %403 = vmatpush1.bf16.xpose.msra.mxu0 0
      %404 = vmatprep.mubr.bf16.mxu0 0
      %405 = vmatmul.mubr.bf16.gmra.mrb[0].mxu0 %v361
      %v406 = vpop.f32.mrb[0].mxu0
      %v407 = vadd.f32 0.0, %v406
      %v408 = vpop.f32.mrb[0].mxu0
      %v409 = vpop.f32.mrb[0].mxu0
      %v410 = vadd.f32 0.0, %v409
      %v411 = vpop.f32.mrb[0].mxu0
      %412 = vmatprep.mubr.bf16.mxu0 0
      %413 = vmatmul.mubr.bf16.gmra.mrb[0].mxu0 %v364
      %v414 = vpop.f32.mrb[0].mxu0
      %v415 = vadd.f32 0.0, %v414
      %v416 = vpop.f32.mrb[0].mxu0
      %v417 = vpop.f32.mrb[0].mxu0
      %v418 = vpop.f32.mrb[0].mxu0
      %419 = vdwg.mxu0
      %v420 = vsel %vm206, %v407, -inf
      %421 = vmax.xlane.f32.xlu0 %v420
      %v422 = vpop.xlane.xlu0 %421
      %v423 = vsel %vm206, %v410, -inf
      %424 = vmax.xlane.f32.xlu0 %v423
      %v425 = vpop.xlane.xlu0 %424
      %v426 = vsel %vm213, %v415, -inf
      %427 = vmax.xlane.f32.xlu0 %v426
      %v428 = vpop.xlane.xlu0 %427
      %v429 = vsub.f32 %v407, %v422
      %v430 = vsub.f32 %v410, %v425
      %v431 = vsub.f32 %v415, %v428
      %v432 = vmul.f32 %v429, 1.442695
      %v433 = vpow.pop %v432
      %v434 = vmul.f32 %v430, 1.442695
      %v435 = vpow.pop %v434
      %v436 = vmul.f32 %v431, 1.442695
      %v437 = vpow.pop %v436
      %v438 = vsel %vm206, %v433, 0.0
      %439 = vadd.xlane.f32.xlu0 %v438
      %v440 = vpop.xlane.xlu0 %439
      %v441 = vsel %vm206, %v435, 0.0
      %442 = vadd.xlane.f32.xlu0 %v441
      %v443 = vpop.xlane.xlu0 %442
      %v444 = vsel %vm213, %v437, 0.0
      %445 = vadd.xlane.f32.xlu0 %v444
      %v446 = vpop.xlane.xlu0 %445
      %v447 = vrcp.pop %v440
      %v448 = vrcp.pop %v443
      %v449 = vrcp.pop %v446
      %v450 = vmul.f32 %v433, %v447
      %v451 = vmul.f32 %v435, %v448
      %v452 = vmul.f32 %v437, %v449
      %v453 = vpack.c.bf16 %v451, %v450
      %v454 = vpack.c.bf16 %v452, %v452
      %455 = vrot.lane.b32.xlu0 %v354, 56
      %v456 = vpop.permute.xlu0 %455
      %457 = vrot.lane.b32.xlu0 %v355, 56
      %v458 = vpop.permute.xlu0 %457
      %v461 = vsel %vm206, %v453, 0
      %v464 = vsel %vm206, %v454, 0
      %v467 = vand.u32 %v458, %v256
      %469 = vmatprep.subr.bf16.mxu0 0
      %470 = vmatpush1.bf16.msra.mxu0 %v456
      %471 = vmatprep.subr.bf16.mxu0 0
      %472 = vmatpush1.bf16.msra.mxu0 %v467
      %473 = vmatprep.subr.bf16.mxu0 0
      %474 = vmatpush1.bf16.msra.mxu0 0
      %475 = vmatprep.subr.bf16.mxu0 0
      %476 = vmatpush1.bf16.msra.mxu0 0
      %477 = vmatprep.subr.bf16.mxu0 0
      %478 = vmatpush1.bf16.msra.mxu0 0
      %479 = vmatprep.subr.bf16.mxu0 0
      %480 = vmatpush1.bf16.msra.mxu0 0
      %481 = vmatprep.subr.bf16.mxu0 0
      %482 = vmatpush1.bf16.msra.mxu0 0
      %483 = vmatprep.subr.bf16.mxu0 0
      %484 = vmatpush1.bf16.msra.mxu0 0
      %485 = vmatprep.subr.bf16.mxu0 0
      %486 = vmatpush1.bf16.msra.mxu0 0
      %487 = vmatprep.subr.bf16.mxu0 0
      %488 = vmatpush1.bf16.msra.mxu0 0
      %489 = vmatprep.subr.bf16.mxu0 0
      %490 = vmatpush1.bf16.msra.mxu0 0
      %491 = vmatprep.subr.bf16.mxu0 0
      %492 = vmatpush1.bf16.msra.mxu0 0
      %493 = vmatprep.subr.bf16.mxu0 0
      %494 = vmatpush1.bf16.msra.mxu0 0
      %495 = vmatprep.subr.bf16.mxu0 0
      %496 = vmatpush1.bf16.msra.mxu0 0
      %497 = vmatprep.subr.bf16.mxu0 0
      %498 = vmatpush1.bf16.msra.mxu0 0
      %499 = vmatprep.subr.bf16.mxu0 0
      %500 = vmatpush1.bf16.msra.mxu0 0
      %501 = vmatprep.mubr.bf16.mxu0 0
      %502 = vmatmul.mubr.bf16.gmra.mrb[0].mxu0 %v461
      %v503 = vpop.f32.mrb[0].mxu0
      %v504 = vadd.f32 0.0, %v503
      %v505 = vpop.f32.mrb[0].mxu0
      %v506 = vpop.f32.mrb[0].mxu0
      %v507 = vadd.f32 0.0, %v506
      %v508 = vpop.f32.mrb[0].mxu0
      %509 = vmatprep.mubr.bf16.mxu0 0
      %510 = vmatmul.mubr.bf16.gmra.mrb[0].mxu0 %v464
      %v511 = vpop.f32.mrb[0].mxu0
      %v512 = vadd.f32 0.0, %v511
      %v513 = vpop.f32.mrb[0].mxu0
      %v514 = vpop.f32.mrb[0].mxu0
      %v515 = vpop.f32.mrb[0].mxu0
      %516 = vdwg.mxu0
      %v517 = vpack.c.bf16 %v507, %v504
      %v518 = vpack.c.bf16 %v512, %v512
      %v521 = vunpack.c.l.b16 %v517
      %v522 = vunpack.c.h.b16 %v517
      %v523 = vunpack.c.l.b16 %v518
      %v524 = vpack.c.b16 %v521, %v521
      %v525 = vpack.c.b16 %v522, %v522
      %v526 = vpack.c.b16 %v523, %v523
      %527 = vrot.lane.b32.xlu0 %v524, 8
      %v528 = vpop.permute.xlu0 %527
      %529 = vrot.lane.b32.xlu0 %v525, 8
      %v530 = vpop.permute.xlu0 %529
      %531 = vrot.lane.b32.xlu0 %v526, 8
      %v532 = vpop.permute.xlu0 %531
      %vm536 = vcmask 126016
      %537 = vst.msk [vmem:[%s116] sm:$0xf] %vm536, %v528
      %538 = vst.msk [vmem:[%s116 + $0x4] sm:$0xf] %vm536, %v530
      %vm539 = vcmask 122944
      %vm540 = vmand %vm539, %vm325
      %v541 = vld [vmem:[%s116 + $0x8] sm:$0x1]
      %v542 = vsel %vm540, %v532, %v541
      %543 = vst [vmem:[%s116 + $0x8] sm:$0x1] %v542
      %v544 = vld [vmem:[%s111] sm:$0xf]
      %v545 = vld [vmem:[%s111 + $0x4] sm:$0xf]
      %v546 = vld [vmem:[%s111 + $0x8] sm:$0x1]
      %v547 = vmul.bf16 %v544, 1052065461
      %v548 = vmul.bf16 %v545, 1052065461
      %v549 = vmul.bf16 %v546, 1052065461
      %v553 = vunpack.c.l.b16 %v547
      %v554 = vunpack.c.l.b16 %v548
      %v555 = vunpack.c.l.b16 %v549
      %v556 = vpack.c.b16 %v554, %v553
      %v557 = vpack.c.b16 %v555, %v555
      %558 = vrot.lane.b32.xlu0 %v556, 112
      %v559 = vpop.permute.xlu0 %558
      %560 = vrot.lane.b32.xlu0 %v557, 112
      %v561 = vpop.permute.xlu0 %560
      %v565 = vunpack.c.l.b16 %v544
      %v566 = vunpack.c.l.b16 %v545
      %v567 = vunpack.c.l.b16 %v546
      %v568 = vpack.c.b16 %v566, %v565
      %v569 = vpack.c.b16 %v567, %v567
      %570 = vrot.lane.b32.xlu0 %v568, 80
      %v571 = vpop.permute.xlu0 %570
      %572 = vrot.lane.b32.xlu0 %v569, 80
      %v573 = vpop.permute.xlu0 %572
      %v575 = vsel %vm145, %v559, 0
      %v578 = vsel %vm145, %v561, 0
      %v581 = vsel %vm145, %v571, 0
      %v584 = vsel %vm145, %v573, 0
      %586 = vmatprep.subr.bf16.mxu0 0
      %587 = vmatpush1.bf16.xpose.msra.mxu0 %v581
      %588 = vmatprep.subr.bf16.mxu0 0
      %589 = vmatpush1.bf16.xpose.msra.mxu0 %v584
      %590 = vmatprep.subr.bf16.mxu0 0
      %591 = vmatpush1.bf16.xpose.msra.mxu0 0
      %592 = vmatprep.subr.bf16.mxu0 0
      %593 = vmatpush1.bf16.xpose.msra.mxu0 0
      %594 = vmatprep.subr.bf16.mxu0 0
      %595 = vmatpush1.bf16.xpose.msra.mxu0 0
      %596 = vmatprep.subr.bf16.mxu0 0
      %597 = vmatpush1.bf16.xpose.msra.mxu0 0
      %598 = vmatprep.subr.bf16.mxu0 0
      %599 = vmatpush1.bf16.xpose.msra.mxu0 0
      %600 = vmatprep.subr.bf16.mxu0 0
      %601 = vmatpush1.bf16.xpose.msra.mxu0 0
      %602 = vmatprep.subr.bf16.mxu0 0
      %603 = vmatpush1.bf16.xpose.msra.mxu0 0
      %604 = vmatprep.subr.bf16.mxu0 0
      %605 = vmatpush1.bf16.xpose.msra.mxu0 0
      %606 = vmatprep.subr.bf16.mxu0 0
      %607 = vmatpush1.bf16.xpose.msra.mxu0 0
      %608 = vmatprep.subr.bf16.mxu0 0
      %609 = vmatpush1.bf16.xpose.msra.mxu0 0
      %610 = vmatprep.subr.bf16.mxu0 0
      %611 = vmatpush1.bf16.xpose.msra.mxu0 0
      %612 = vmatprep.subr.bf16.mxu0 0
      %613 = vmatpush1.bf16.xpose.msra.mxu0 0
      %614 = vmatprep.subr.bf16.mxu0 0
      %615 = vmatpush1.bf16.xpose.msra.mxu0 0
      %616 = vmatprep.subr.bf16.mxu0 0
      %617 = vmatpush1.bf16.xpose.msra.mxu0 0
      %618 = vmatprep.mubr.bf16.mxu0 0
      %619 = vmatmul.mubr.bf16.gmra.mrb[0].mxu0 %v575
      %v620 = vpop.f32.mrb[0].mxu0
      %v621 = vadd.f32 0.0, %v620
      %v622 = vpop.f32.mrb[0].mxu0
      %v623 = vpop.f32.mrb[0].mxu0
      %v624 = vadd.f32 0.0, %v623
      %v625 = vpop.f32.mrb[0].mxu0
      %626 = vmatprep.mubr.bf16.mxu0 0
      %627 = vmatmul.mubr.bf16.gmra.mrb[0].mxu0 %v578
      %v628 = vpop.f32.mrb[0].mxu0
      %v629 = vadd.f32 0.0, %v628
      %v630 = vpop.f32.mrb[0].mxu0
      %v631 = vpop.f32.mrb[0].mxu0
      %v632 = vpop.f32.mrb[0].mxu0
      %633 = vdwg.mxu0
      %v634 = vsel %vm206, %v621, -inf
      %635 = vmax.xlane.f32.xlu0 %v634
      %v636 = vpop.xlane.xlu0 %635
      %v637 = vsel %vm206, %v624, -inf
      %638 = vmax.xlane.f32.xlu0 %v637
      %v639 = vpop.xlane.xlu0 %638
      %v640 = vsel %vm213, %v629, -inf
      %641 = vmax.xlane.f32.xlu0 %v640
      %v642 = vpop.xlane.xlu0 %641
      %v643 = vsub.f32 %v621, %v636
      %v644 = vsub.f32 %v624, %v639
      %v645 = vsub.f32 %v629, %v642
      %v646 = vmul.f32 %v643, 1.442695
      %v647 = vpow.pop %v646
      %v648 = vmul.f32 %v644, 1.442695
      %v649 = vpow.pop %v648
      %v650 = vmul.f32 %v645, 1.442695
      %v651 = vpow.pop %v650
      %v652 = vsel %vm206, %v647, 0.0
      %653 = vadd.xlane.f32.xlu0 %v652
      %v654 = vpop.xlane.xlu0 %653
      %v655 = vsel %vm206, %v649, 0.0
      %656 = vadd.xlane.f32.xlu0 %v655
      %v657 = vpop.xlane.xlu0 %656
      %v658 = vsel %vm213, %v651, 0.0
      %659 = vadd.xlane.f32.xlu0 %v658
      %v660 = vpop.xlane.xlu0 %659
      %v661 = vrcp.pop %v654
      %v662 = vrcp.pop %v657
      %v663 = vrcp.pop %v660
      %v664 = vmul.f32 %v647, %v661
      %v665 = vmul.f32 %v649, %v662
      %v666 = vmul.f32 %v651, %v663
      %v667 = vpack.c.bf16 %v665, %v664
      %v668 = vpack.c.bf16 %v666, %v666
      %669 = vrot.lane.b32.xlu0 %v568, 48
      %v670 = vpop.permute.xlu0 %669
      %671 = vrot.lane.b32.xlu0 %v569, 48
      %v672 = vpop.permute.xlu0 %671
      %v675 = vsel %vm206, %v667, 0
      %v678 = vsel %vm206, %v668, 0
      %v681 = vand.u32 %v672, %v256
      %683 = vmatprep.subr.bf16.mxu0 0
      %684 = vmatpush1.bf16.msra.mxu0 %v670
      %685 = vmatprep.subr.bf16.mxu0 0
      %686 = vmatpush1.bf16.msra.mxu0 %v681
      %687 = vmatprep.subr.bf16.mxu0 0
      %688 = vmatpush1.bf16.msra.mxu0 0
      %689 = vmatprep.subr.bf16.mxu0 0
      %690 = vmatpush1.bf16.msra.mxu0 0
      %691 = vmatprep.subr.bf16.mxu0 0
      %692 = vmatpush1.bf16.msra.mxu0 0
      %693 = vmatprep.subr.bf16.mxu0 0
      %694 = vmatpush1.bf16.msra.mxu0 0
      %695 = vmatprep.subr.bf16.mxu0 0
      %696 = vmatpush1.bf16.msra.mxu0 0
      %697 = vmatprep.subr.bf16.mxu0 0
      %698 = vmatpush1.bf16.msra.mxu0 0
      %699 = vmatprep.subr.bf16.mxu0 0
      %700 = vmatpush1.bf16.msra.mxu0 0
      %701 = vmatprep.subr.bf16.mxu0 0
      %702 = vmatpush1.bf16.msra.mxu0 0
      %703 = vmatprep.subr.bf16.mxu0 0
      %704 = vmatpush1.bf16.msra.mxu0 0
      %705 = vmatprep.subr.bf16.mxu0 0
      %706 = vmatpush1.bf16.msra.mxu0 0
      %707 = vmatprep.subr.bf16.mxu0 0
      %708 = vmatpush1.bf16.msra.mxu0 0
      %709 = vmatprep.subr.bf16.mxu0 0
      %710 = vmatpush1.bf16.msra.mxu0 0
      %711 = vmatprep.subr.bf16.mxu0 0
      %712 = vmatpush1.bf16.msra.mxu0 0
      %713 = vmatprep.subr.bf16.mxu0 0
      %714 = vmatpush1.bf16.msra.mxu0 0
      %715 = vmatprep.mubr.bf16.mxu0 0
      %716 = vmatmul.mubr.bf16.gmra.mrb[0].mxu0 %v675
      %v717 = vpop.f32.mrb[0].mxu0
      %v718 = vadd.f32 0.0, %v717
      %v719 = vpop.f32.mrb[0].mxu0
      %v720 = vpop.f32.mrb[0].mxu0
      %v721 = vadd.f32 0.0, %v720
      %v722 = vpop.f32.mrb[0].mxu0
      %723 = vmatprep.mubr.bf16.mxu0 0
      %724 = vmatmul.mubr.bf16.gmra.mrb[0].mxu0 %v678
      %v725 = vpop.f32.mrb[0].mxu0
      %v726 = vadd.f32 0.0, %v725
      %v727 = vpop.f32.mrb[0].mxu0
      %v728 = vpop.f32.mrb[0].mxu0
      %v729 = vpop.f32.mrb[0].mxu0
      %730 = vdwg.mxu0
      %v731 = vpack.c.bf16 %v721, %v718
      %v732 = vpack.c.bf16 %v726, %v726
      %v735 = vunpack.c.l.b16 %v731
      %v736 = vunpack.c.h.b16 %v731
      %v737 = vunpack.c.l.b16 %v732
      %v738 = vpack.c.b16 %v735, %v735
      %v739 = vpack.c.b16 %v736, %v736
      %v740 = vpack.c.b16 %v737, %v737
      %741 = vrot.lane.b32.xlu0 %v738, 16
      %v742 = vpop.permute.xlu0 %741
      %743 = vrot.lane.b32.xlu0 %v739, 16
      %v744 = vpop.permute.xlu0 %743
      %745 = vrot.lane.b32.xlu0 %v740, 16
      %v746 = vpop.permute.xlu0 %745
      %vm750 = vcmask 191616
      %751 = vst.msk [vmem:[%s116] sm:$0xf] %vm750, %v742
      %752 = vst.msk [vmem:[%s116 + $0x4] sm:$0xf] %vm750, %v744
      %vm753 = vcmask 188544
      %vm754 = vmand %vm753, %vm325
      %v755 = vld [vmem:[%s116 + $0x8] sm:$0x1]
      %v756 = vsel %vm754, %v746, %v755
      %757 = vst [vmem:[%s116 + $0x8] sm:$0x1] %v756
      %v758 = vld [vmem:[%s111] sm:$0xf]
      %v759 = vld [vmem:[%s111 + $0x4] sm:$0xf]
      %v760 = vld [vmem:[%s111 + $0x8] sm:$0x1]
      %v761 = vmul.bf16 %v758, 1052065461
      %v762 = vmul.bf16 %v759, 1052065461
      %v763 = vmul.bf16 %v760, 1052065461
      %v767 = vunpack.c.l.b16 %v761
      %v768 = vunpack.c.l.b16 %v762
      %v769 = vunpack.c.l.b16 %v763
      %v770 = vpack.c.b16 %v768, %v767
      %v771 = vpack.c.b16 %v769, %v769
      %772 = vrot.lane.b32.xlu0 %v770, 104
      %v773 = vpop.permute.xlu0 %772
      %774 = vrot.lane.b32.xlu0 %v771, 104
      %v775 = vpop.permute.xlu0 %774
      %v779 = vunpack.c.l.b16 %v758
      %v780 = vunpack.c.l.b16 %v759
      %v781 = vunpack.c.l.b16 %v760
      %v782 = vpack.c.b16 %v780, %v779
      %v783 = vpack.c.b16 %v781, %v781
      %784 = vrot.lane.b32.xlu0 %v782, 72
      %v785 = vpop.permute.xlu0 %784
      %786 = vrot.lane.b32.xlu0 %v783, 72
      %v787 = vpop.permute.xlu0 %786
      %v789 = vsel %vm145, %v773, 0
      %v792 = vsel %vm145, %v775, 0
      %v795 = vsel %vm145, %v785, 0
      %v798 = vsel %vm145, %v787, 0
      %800 = vmatprep.subr.bf16.mxu0 0
      %801 = vmatpush1.bf16.xpose.msra.mxu0 %v795
      %802 = vmatprep.subr.bf16.mxu0 0
      %803 = vmatpush1.bf16.xpose.msra.mxu0 %v798
      %804 = vmatprep.subr.bf16.mxu0 0
      %805 = vmatpush1.bf16.xpose.msra.mxu0 0
      %806 = vmatprep.subr.bf16.mxu0 0
      %807 = vmatpush1.bf16.xpose.msra.mxu0 0
      %808 = vmatprep.subr.bf16.mxu0 0
      %809 = vmatpush1.bf16.xpose.msra.mxu0 0
      %810 = vmatprep.subr.bf16.mxu0 0
      %811 = vmatpush1.bf16.xpose.msra.mxu0 0
      %812 = vmatprep.subr.bf16.mxu0 0
      %813 = vmatpush1.bf16.xpose.msra.mxu0 0
      %814 = vmatprep.subr.bf16.mxu0 0
      %815 = vmatpush1.bf16.xpose.msra.mxu0 0
      %816 = vmatprep.subr.bf16.mxu0 0
      %817 = vmatpush1.bf16.xpose.msra.mxu0 0
      %818 = vmatprep.subr.bf16.mxu0 0
      %819 = vmatpush1.bf16.xpose.msra.mxu0 0
      %820 = vmatprep.subr.bf16.mxu0 0
      %821 = vmatpush1.bf16.xpose.msra.mxu0 0
      %822 = vmatprep.subr.bf16.mxu0 0
      %823 = vmatpush1.bf16.xpose.msra.mxu0 0
      %824 = vmatprep.subr.bf16.mxu0 0
      %825 = vmatpush1.bf16.xpose.msra.mxu0 0
      %826 = vmatprep.subr.bf16.mxu0 0
      %827 = vmatpush1.bf16.xpose.msra.mxu0 0
      %828 = vmatprep.subr.bf16.mxu0 0
      %829 = vmatpush1.bf16.xpose.msra.mxu0 0
      %830 = vmatprep.subr.bf16.mxu0 0
      %831 = vmatpush1.bf16.xpose.msra.mxu0 0
      %832 = vmatprep.mubr.bf16.mxu0 0
      %833 = vmatmul.mubr.bf16.gmra.mrb[0].mxu0 %v789
      %v834 = vpop.f32.mrb[0].mxu0
      %v835 = vadd.f32 0.0, %v834
      %v836 = vpop.f32.mrb[0].mxu0
      %v837 = vpop.f32.mrb[0].mxu0
      %v838 = vadd.f32 0.0, %v837
      %v839 = vpop.f32.mrb[0].mxu0
      %840 = vmatprep.mubr.bf16.mxu0 0
      %841 = vmatmul.mubr.bf16.gmra.mrb[0].mxu0 %v792
      %v842 = vpop.f32.mrb[0].mxu0
      %v843 = vadd.f32 0.0, %v842
      %v844 = vpop.f32.mrb[0].mxu0
      %v845 = vpop.f32.mrb[0].mxu0
      %v846 = vpop.f32.mrb[0].mxu0
      %847 = vdwg.mxu0
      %v848 = vsel %vm206, %v835, -inf
      %849 = vmax.xlane.f32.xlu0 %v848
      %v850 = vpop.xlane.xlu0 %849
      %v851 = vsel %vm206, %v838, -inf
      %852 = vmax.xlane.f32.xlu0 %v851
      %v853 = vpop.xlane.xlu0 %852
      %v854 = vsel %vm213, %v843, -inf
      %855 = vmax.xlane.f32.xlu0 %v854
      %v856 = vpop.xlane.xlu0 %855
      %v857 = vsub.f32 %v835, %v850
      %v858 = vsub.f32 %v838, %v853
      %v859 = vsub.f32 %v843, %v856
      %v860 = vmul.f32 %v857, 1.442695
      %v861 = vpow.pop %v860
      %v862 = vmul.f32 %v858, 1.442695
      %v863 = vpow.pop %v862
      %v864 = vmul.f32 %v859, 1.442695
      %v865 = vpow.pop %v864
      %v866 = vsel %vm206, %v861, 0.0
      %867 = vadd.xlane.f32.xlu0 %v866
      %v868 = vpop.xlane.xlu0 %867
      %v869 = vsel %vm206, %v863, 0.0
      %870 = vadd.xlane.f32.xlu0 %v869
      %v871 = vpop.xlane.xlu0 %870
      %v872 = vsel %vm213, %v865, 0.0
      %873 = vadd.xlane.f32.xlu0 %v872
      %v874 = vpop.xlane.xlu0 %873
      %v875 = vrcp.pop %v868
      %v876 = vrcp.pop %v871
      %v877 = vrcp.pop %v874
      %v878 = vmul.f32 %v861, %v875
      %v879 = vmul.f32 %v863, %v876
      %v880 = vmul.f32 %v865, %v877
      %v881 = vpack.c.bf16 %v879, %v878
      %v882 = vpack.c.bf16 %v880, %v880
      %883 = vrot.lane.b32.xlu0 %v782, 40
      %v884 = vpop.permute.xlu0 %883
      %885 = vrot.lane.b32.xlu0 %v783, 40
      %v886 = vpop.permute.xlu0 %885
      %v889 = vsel %vm206, %v881, 0
      %v892 = vsel %vm206, %v882, 0
      %v895 = vand.u32 %v886, %v256
      %897 = vmatprep.subr.bf16.mxu0 0
      %898 = vmatpush1.bf16.msra.mxu0 %v884
      %899 = vmatprep.subr.bf16.mxu0 0
      %900 = vmatpush1.bf16.msra.mxu0 %v895
      %901 = vmatprep.subr.bf16.mxu0 0
      %902 = vmatpush1.bf16.msra.mxu0 0
      %903 = vmatprep.subr.bf16.mxu0 0
      %904 = vmatpush1.bf16.msra.mxu0 0
      %905 = vmatprep.subr.bf16.mxu0 0
      %906 = vmatpush1.bf16.msra.mxu0 0
      %907 = vmatprep.subr.bf16.mxu0 0
      %908 = vmatpush1.bf16.msra.mxu0 0
      %909 = vmatprep.subr.bf16.mxu0 0
      %910 = vmatpush1.bf16.msra.mxu0 0
      %911 = vmatprep.subr.bf16.mxu0 0
      %912 = vmatpush1.bf16.msra.mxu0 0
      %913 = vmatprep.subr.bf16.mxu0 0
      %914 = vmatpush1.bf16.msra.mxu0 0
      %915 = vmatprep.subr.bf16.mxu0 0
      %916 = vmatpush1.bf16.msra.mxu0 0
      %917 = vmatprep.subr.bf16.mxu0 0
      %918 = vmatpush1.bf16.msra.mxu0 0
      %919 = vmatprep.subr.bf16.mxu0 0
      %920 = vmatpush1.bf16.msra.mxu0 0
      %921 = vmatprep.subr.bf16.mxu0 0
      %922 = vmatpush1.bf16.msra.mxu0 0
      %923 = vmatprep.subr.bf16.mxu0 0
      %924 = vmatpush1.bf16.msra.mxu0 0
      %925 = vmatprep.subr.bf16.mxu0 0
      %926 = vmatpush1.bf16.msra.mxu0 0
      %927 = vmatprep.subr.bf16.mxu0 0
      %928 = vmatpush1.bf16.msra.mxu0 0
      %929 = vmatprep.mubr.bf16.mxu0 0
      %930 = vmatmul.mubr.bf16.gmra.mrb[0].mxu0 %v889
      %v931 = vpop.f32.mrb[0].mxu0
      %v932 = vadd.f32 0.0, %v931
      %v933 = vpop.f32.mrb[0].mxu0
      %v934 = vpop.f32.mrb[0].mxu0
      %v935 = vadd.f32 0.0, %v934
      %v936 = vpop.f32.mrb[0].mxu0
      %937 = vmatprep.mubr.bf16.mxu0 0
      %938 = vmatmul.mubr.bf16.gmra.mrb[0].mxu0 %v892
      %v939 = vpop.f32.mrb[0].mxu0
      %v940 = vadd.f32 0.0, %v939
      %v941 = vpop.f32.mrb[0].mxu0
      %v942 = vpop.f32.mrb[0].mxu0
      %v943 = vpop.f32.mrb[0].mxu0
      %944 = vdwg.mxu0
      %v945 = vpack.c.bf16 %v935, %v932
      %v946 = vpack.c.bf16 %v940, %v940
      %v949 = vunpack.c.l.b16 %v945
      %v950 = vunpack.c.h.b16 %v945
      %v951 = vunpack.c.l.b16 %v946
      %v952 = vpack.c.b16 %v949, %v949
      %v953 = vpack.c.b16 %v950, %v950
      %v954 = vpack.c.b16 %v951, %v951
      %955 = vrot.lane.b32.xlu0 %v952, 24
      %v956 = vpop.permute.xlu0 %955
      %957 = vrot.lane.b32.xlu0 %v953, 24
      %v958 = vpop.permute.xlu0 %957
      %959 = vrot.lane.b32.xlu0 %v954, 24
      %v960 = vpop.permute.xlu0 %959
      %vm964 = vcmask 257216
      %965 = vst.msk [vmem:[%s116] sm:$0xf] %vm964, %v956
      %966 = vst.msk [vmem:[%s116 + $0x4] sm:$0xf] %vm964, %v958
      %vm967 = vcmask 254144
      %vm968 = vmand %vm967, %vm325
      %v969 = vld [vmem:[%s116 + $0x8] sm:$0x1]
      %v970 = vsel %vm968, %v960, %v969
      %971 = vst [vmem:[%s116 + $0x8] sm:$0x1] %v970
      %p972 = scmp.lt.s32.totalorder %s12, 1
      %s973 = scalar_select %p972, %s12, 1
      %s974 = smul.addr %s973, 3
      %s975 = smul.addr %s974, 4
      %s976 = scalar_lea.vmem %s1, %s975
      // Predicated region
      $region25: #{pmtrans_forward.13} parent=23 // pred_check
        %p977 = pneg %p56
      $region26: #{pmtrans_forward.13} parent=23 // pred_check_branch
        %979 = sbr.rel (%p977) target = $region28
      $region27: #{pmtrans_forward.13} parent=23 // pred_region
        _
      $region28: #{pmtrans_forward.13} parent=23 // pred_fallthru
        _
    $region24: #{pmtrans_forward.13} parent=5 // pred_fallthru
      _
    %p980 = scmp.le.s32.totalorder 2, %s7
    // Predicated region
    $region29: #{pmtrans_forward.13} parent=5 // pred_check
      %p981 = pneg %p980
    $region30: #{pmtrans_forward.13} parent=5 // pred_check_branch
      %983 = sbr.rel (%p981) target = $region32
    $region31: #{pmtrans_forward.13} parent=5 // pred_region
      %s984 = ssub.s32 %s7, 2
      // Predicated region
      $region33: #{pmtrans_forward.13} parent=31 // pred_check
        %p985 = pneg %p62
      $region34: #{pmtrans_forward.13} parent=31 // pred_check_branch
        %987 = sbr.rel (%p985) target = $region36
      $region35: #{pmtrans_forward.13} parent=31 // pred_region
        %p988 = scmp.lt.s32.totalorder %s13, 1
        %s989 = scalar_select %p988, %s13, 1
        %s990 = smul.addr %s989, 3
        %s991 = smul.addr %s990, 4
        %s992 = scalar_lea.vmem %s1, %s991
      $region36: #{pmtrans_forward.13} parent=31 // pred_fallthru
        _
    $region32: #{pmtrans_forward.13} parent=5 // pred_fallthru
      _
  $region6: #{pmtrans_forward.13} parent=0 // loop_footer
    %s11 = sadd.s32 1, %s7
  $region7: #{pmtrans_forward.13} parent=0 // loop_footer_branch
    %6 = sbr.rel target = $region3
  $region8: #{pmtrans_forward.13} parent=0 // loop_exit
    _

// kernel: pmtrans_forward.15
$region0: #{pmtrans_forward.15}
  #allocation0 [shape = 'u32[]', space=smem, size = 0x4, offset = 0x4, fixed_abs, tag = 'smem constant byte address 0x4 - core index']
  #allocation1 [shape = 'u32[144,128]{1,0:T(1,128)}', space=vmem, size = 0x12000, scoped, tag = 'internal scratch']
  %s0 = inlined_call_operand.vmem [shape: bf16[34,128], index: 0, kind: input, shape index: {}]
  %s1 = inlined_call_operand.vmem [shape: f32[34,32], index: 1, kind: input, shape index: {}]
  %s2 = inlined_call_operand.vmem [shape: bf16[128,32], index: 2, kind: input, shape index: {}]
  %s3 = inlined_call_operand.vmem [shape: f32[1,32], index: 3, kind: input, shape index: {}]
  %s4 = inlined_call_operand.vmem [shape: f32[34,32], index: 4, kind: output, shape index: {}]
  %s5 = sld [smem:[#allocation0]]
  $region26: #{pmtrans_forward.15} parent=0
    _
  %s7 = ssub.s32 1, %s5
  %s8 = scalar_select 0, %s7, %s5
  // Predicated region
  $region2: #{pmtrans_forward.15} parent=0 // pred_check
    _
  $region3: #{pmtrans_forward.15} parent=0 // pred_check_branch
    %10 = sbr.rel (0) target = $region5
  $region4: #{pmtrans_forward.15} parent=0 // pred_region
    _
  $region5: #{pmtrans_forward.15} parent=0 // pred_fallthru
    _
  // Predicated region
  $region6: #{pmtrans_forward.15} parent=0 // pred_check
    _
  $region7: #{pmtrans_forward.15} parent=0 // pred_check_branch
    %12 = sbr.rel (0) target = $region9
  $region8: #{pmtrans_forward.15} parent=0 // pred_region
    _
  $region9: #{pmtrans_forward.15} parent=0 // pred_fallthru
    _
  // Predicated region
  $region10: #{pmtrans_forward.15} parent=0 // pred_check
    _
  $region11: #{pmtrans_forward.15} parent=0 // pred_check_branch
    %14 = sbr.rel (0) target = $region13
  $region12: #{pmtrans_forward.15} parent=0 // pred_region
    _
  $region13: #{pmtrans_forward.15} parent=0 // pred_fallthru
    _
  // Predicated region
  $region14: #{pmtrans_forward.15} parent=0 // pred_check
    _
  $region15: #{pmtrans_forward.15} parent=0 // pred_check_branch
    %16 = sbr.rel (0) target = $region17
  $region16: #{pmtrans_forward.15} parent=0 // pred_region
    _
  $region17: #{pmtrans_forward.15} parent=0 // pred_fallthru
    _
  %v18 = vld [vmem:[%s0] sm:$0xf]
  %v19 = vld [vmem:[%s0 + $0x4] sm:$0xf]
  %v20 = vld [vmem:[%s0 + $0x8] sm:$0xf]
  %v21 = vld [vmem:[%s0 + $0xc] sm:$0xf]
  %v22 = vld [vmem:[%s0 + $0x10] sm:$0x1]
  %v23 = vld [vmem:[%s2] sm:$0xf]
  %v24 = vld [vmem:[%s2 + $0x4] sm:$0xf]
  %v25 = vld [vmem:[%s2 + $0x8] sm:$0xf]
  %v26 = vld [vmem:[%s2 + $0xc] sm:$0xf]
  %v27 = vld [vmem:[%s2 + $0x10] sm:$0xf]
  %v28 = vld [vmem:[%s2 + $0x14] sm:$0xf]
  %v29 = vld [vmem:[%s2 + $0x18] sm:$0xf]
  %v30 = vld [vmem:[%s2 + $0x1c] sm:$0xf]
  %v31 = vld [vmem:[%s2 + $0x20] sm:$0xf]
  %v32 = vld [vmem:[%s2 + $0x24] sm:$0xf]
  %v33 = vld [vmem:[%s2 + $0x28] sm:$0xf]
  %v34 = vld [vmem:[%s2 + $0x2c] sm:$0xf]
  %v35 = vld [vmem:[%s2 + $0x30] sm:$0xf]
  %v36 = vld [vmem:[%s2 + $0x34] sm:$0xf]
  %v37 = vld [vmem:[%s2 + $0x38] sm:$0xf]
  %v38 = vld [vmem:[%s2 + $0x3c] sm:$0xf]
  %v39 = vld [vmem:[%s3] sm:$0x1]
  %v41 = vlaneseq
  %v42 = vshrl.u32 %v41, 7
  %v43 = vsub.s32 0, %v42
  %v44 = vrot.slane %v39, %v43
  %v51 = vunpack.c.l.b16 %v18
  %v52 = vunpack.c.l.b16 %v19
  %v53 = vunpack.c.l.b16 %v20
  %v54 = vunpack.c.l.b16 %v21
  %v55 = vunpack.c.l.b16 %v22
  %v56 = vpack.c.b16 %v52, %v51
  %v57 = vpack.c.b16 %v54, %v53
  %v58 = vpack.c.b16 %v55, %v55
  %v78 = vunpack.c.l.b16 %v23
  %v79 = vunpack.c.l.b16 %v24
  %v80 = vunpack.c.l.b16 %v25
  %v81 = vunpack.c.l.b16 %v26
  %v82 = vunpack.c.l.b16 %v27
  %v83 = vunpack.c.l.b16 %v28
  %v84 = vunpack.c.l.b16 %v29
  %v85 = vunpack.c.l.b16 %v30
  %v86 = vunpack.c.l.b16 %v31
  %v87 = vunpack.c.l.b16 %v32
  %v88 = vunpack.c.l.b16 %v33
  %v89 = vunpack.c.l.b16 %v34
  %v90 = vunpack.c.l.b16 %v35
  %v91 = vunpack.c.l.b16 %v36
  %v92 = vunpack.c.l.b16 %v37
  %v93 = vunpack.c.l.b16 %v38
  %v94 = vpack.c.b16 %v79, %v78
  %v95 = vpack.c.b16 %v81, %v80
  %v96 = vpack.c.b16 %v83, %v82
  %v97 = vpack.c.b16 %v85, %v84
  %v98 = vpack.c.b16 %v87, %v86
  %v99 = vpack.c.b16 %v89, %v88
  %v100 = vpack.c.b16 %v91, %v90
  %v101 = vpack.c.b16 %v93, %v92
  %110 = vmatprep.subr.bf16.mxu0 0
  %111 = vmatpush1.bf16.msra.mxu0 %v94
  %112 = vmatprep.subr.bf16.mxu0 0
  %113 = vmatpush1.bf16.msra.mxu0 %v95
  %114 = vmatprep.subr.bf16.mxu0 0
  %115 = vmatpush1.bf16.msra.mxu0 %v96
  %116 = vmatprep.subr.bf16.mxu0 0
  %117 = vmatpush1.bf16.msra.mxu0 %v97
  %118 = vmatprep.subr.bf16.mxu0 0
  %119 = vmatpush1.bf16.msra.mxu0 %v98
  %120 = vmatprep.subr.bf16.mxu0 0
  %121 = vmatpush1.bf16.msra.mxu0 %v99
  %122 = vmatprep.subr.bf16.mxu0 0
  %123 = vmatpush1.bf16.msra.mxu0 %v100
  %124 = vmatprep.subr.bf16.mxu0 0
  %125 = vmatpush1.bf16.msra.mxu0 %v101
  %126 = vmatprep.subr.bf16.mxu0 0
  %127 = vmatpush1.bf16.msra.mxu0 0
  %128 = vmatprep.subr.bf16.mxu0 0
  %129 = vmatpush1.bf16.msra.mxu0 0
  %130 = vmatprep.subr.bf16.mxu0 0
  %131 = vmatpush1.bf16.msra.mxu0 0
  %132 = vmatprep.subr.bf16.mxu0 0
  %133 = vmatpush1.bf16.msra.mxu0 0
  %134 = vmatprep.subr.bf16.mxu0 0
  %135 = vmatpush1.bf16.msra.mxu0 0
  %136 = vmatprep.subr.bf16.mxu0 0
  %137 = vmatpush1.bf16.msra.mxu0 0
  %138 = vmatprep.subr.bf16.mxu0 0
  %139 = vmatpush1.bf16.msra.mxu0 0
  %140 = vmatprep.subr.bf16.mxu0 0
  %141 = vmatpush1.bf16.msra.mxu0 0
  %142 = vmatprep.mubr.bf16.mxu0 0
  %143 = vmatmul.mubr.bf16.gmra.mrb[0].mxu0 %v56
  %v144 = vpop.f32.mrb[0].mxu0
  %v145 = vadd.f32 %v44, %v144
  %v146 = vpop.f32.mrb[0].mxu0
  %v147 = vpop.f32.mrb[0].mxu0
  %v148 = vadd.f32 %v44, %v147
  %v149 = vpop.f32.mrb[0].mxu0
  %150 = vmatprep.mubr.bf16.mxu0 0
  %151 = vmatmul.mubr.bf16.gmra.mrb[0].mxu0 %v57
  %v152 = vpop.f32.mrb[0].mxu0
  %v153 = vadd.f32 %v44, %v152
  %v154 = vpop.f32.mrb[0].mxu0
  %v155 = vpop.f32.mrb[0].mxu0
  %v156 = vadd.f32 %v44, %v155
  %v157 = vpop.f32.mrb[0].mxu0
  %158 = vmatprep.mubr.bf16.mxu0 0
  %159 = vmatmul.mubr.bf16.gmra.mrb[0].mxu0 %v58
  %v160 = vpop.f32.mrb[0].mxu0
  %v161 = vadd.f32 %v44, %v160
  %v162 = vpop.f32.mrb[0].mxu0
  %v163 = vpop.f32.mrb[0].mxu0
  %v164 = vpop.f32.mrb[0].mxu0
  %165 = vdwg.mxu0
  %v166 = vld [vmem:[%s1] sm:$0xff]
  %v167 = vld [vmem:[%s1 + $0x8] sm:$0xff]
  %v168 = vld [vmem:[%s1 + $0x10] sm:$0xff]
  %v169 = vld [vmem:[%s1 + $0x18] sm:$0xff]
  %v170 = vld [vmem:[%s1 + $0x20] sm:$0x3]
  %v171 = vadd.f32 %v166, %v145
  %v172 = vadd.f32 %v167, %v148
  %v173 = vadd.f32 %v168, %v153
  %v174 = vadd.f32 %v169, %v156
  %v175 = vadd.f32 %v170, %v161
  %vm176 = vcmask 261120
  %177 = vst.msk [vmem:[%s4] sm:$0xff] %vm176, %v171
  %178 = vst.msk [vmem:[%s4 + $0x8] sm:$0xff] %vm176, %v172
  %179 = vst.msk [vmem:[%s4 + $0x10] sm:$0xff] %vm176, %v173
  %180 = vst.msk [vmem:[%s4 + $0x18] sm:$0xff] %vm176, %v174
  %vm181 = vcmask 254976
  %182 = vst.msk [vmem:[%s4 + $0x20] sm:$0x3] %vm181, %v175
  // Predicated region
  $region18: #{pmtrans_forward.15} parent=0 // pred_check
    _
  $region19: #{pmtrans_forward.15} parent=0 // pred_check_branch
    %184 = sbr.rel (0) target = $region21
  $region20: #{pmtrans_forward.15} parent=0 // pred_region
    _
  $region21: #{pmtrans_forward.15} parent=0 // pred_fallthru
    _
  // Predicated region
  $region22: #{pmtrans_forward.15} parent=0 // pred_check
    _
  $region23: #{pmtrans_forward.15} parent=0 // pred_check_branch
    %186 = sbr.rel (0) target = $region25
  $region24: #{pmtrans_forward.15} parent=0 // pred_region
    _
  $region25: #{pmtrans_forward.15} parent=0 // pred_fallthru
    _

// kernel: pmtrans_forward.20
$region0: #{pmtrans_forward.20}
  #allocation0 [shape = 'u32[]', space=smem, size = 0x4, offset = 0x4, fixed_abs, tag = 'smem constant byte address 0x4 - core index']
  #allocation1 [shape = 'u32[144,128]{1,0:T(1,128)}', space=vmem, size = 0x12000, scoped, tag = 'internal scratch']
  %s0 = inlined_call_operand.vmem [shape: f32[2,32], index: 0, kind: input, shape index: {}]
  %s1 = inlined_call_operand.vmem [shape: f32[1,32], index: 1, kind: input, shape index: {}]
  %s2 = inlined_call_operand.vmem [shape: f32[1,32], index: 2, kind: input, shape index: {}]
  %s3 = inlined_call_operand.vmem [shape: f32[2,32], index: 3, kind: output, shape index: {}]
  %s4 = sld [smem:[#allocation0]]
  $region22: #{pmtrans_forward.20} parent=0
    _
  %s6 = ssub.s32 1, %s4
  %s7 = scalar_select 0, %s6, %s4
  // Predicated region
  $region2: #{pmtrans_forward.20} parent=0 // pred_check
    _
  $region3: #{pmtrans_forward.20} parent=0 // pred_check_branch
    %9 = sbr.rel (0) target = $region5
  $region4: #{pmtrans_forward.20} parent=0 // pred_region
    _
  $region5: #{pmtrans_forward.20} parent=0 // pred_fallthru
    _
  // Predicated region
  $region6: #{pmtrans_forward.20} parent=0 // pred_check
    _
  $region7: #{pmtrans_forward.20} parent=0 // pred_check_branch
    %11 = sbr.rel (0) target = $region9
  $region8: #{pmtrans_forward.20} parent=0 // pred_region
    _
  $region9: #{pmtrans_forward.20} parent=0 // pred_fallthru
    _
  // Predicated region
  $region10: #{pmtrans_forward.20} parent=0 // pred_check
    _
  $region11: #{pmtrans_forward.20} parent=0 // pred_check_branch
    %13 = sbr.rel (0) target = $region13
  $region12: #{pmtrans_forward.20} parent=0 // pred_region
    _
  $region13: #{pmtrans_forward.20} parent=0 // pred_fallthru
    _
  %v14 = vld [vmem:[%s0] sm:$0x3]
  %vm15 = vcmask 254976
  %v16 = vsel %vm15, %v14, 0.0
  %17 = vadd.xlane.f32.xlu0 %v16
  %v18 = vpop.xlane.xlu0 %17
  %v19 = vrcp.pop 32.0
  %v20 = vmul.f32 %v18, %v19
  %v21 = vsub.f32 %v14, %v20
  %v22 = vmul.f32 %v21, %v21
  %v23 = vsel %vm15, %v22, 0.0
  %24 = vadd.xlane.f32.xlu0 %v23
  %v25 = vpop.xlane.xlu0 %24
  %v26 = vmul.f32 %v25, %v19
  %v27 = vadd.f32 %v26, 1e-06
  %v28 = vrsqrt.pop %v27
  %v29 = vmul.f32 %v21, %v28
  %v30 = vld [vmem:[%s1] sm:$0x1]
  %v32 = vlaneseq
  %v33 = vshrl.u32 %v32, 7
  %v34 = vsub.s32 0, %v33
  %v35 = vrot.slane %v30, %v34
  %v37 = vmul.f32 %v29, %v35
  %v38 = vld [vmem:[%s2] sm:$0x1]
  %v40 = vlaneseq
  %v41 = vshrl.u32 %v40, 7
  %v42 = vsub.s32 0, %v41
  %v43 = vrot.slane %v38, %v42
  %v45 = vadd.f32 %v37, %v43
  %46 = vst.msk [vmem:[%s3] sm:$0x3] %vm15, %v45
  // Predicated region
  $region14: #{pmtrans_forward.20} parent=0 // pred_check
    _
  $region15: #{pmtrans_forward.20} parent=0 // pred_check_branch
    %48 = sbr.rel (0) target = $region17
  $region16: #{pmtrans_forward.20} parent=0 // pred_region
    _
  $region17: #{pmtrans_forward.20} parent=0 // pred_fallthru
    _
  // Predicated region
  $region18: #{pmtrans_forward.20} parent=0 // pred_check
    _
  $region19: #{pmtrans_forward.20} parent=0 // pred_check_branch
    %50 = sbr.rel (0) target = $region21
  $region20: #{pmtrans_forward.20} parent=0 // pred_region
    _
  $region21: #{pmtrans_forward.20} parent=0 // pred_fallthru
    _

// kernel: pmtrans_forward.17
$region0: #{pmtrans_forward.17}
  #allocation0 [shape = 'u32[]', space=smem, size = 0x4, offset = 0x4, fixed_abs, tag = 'smem constant byte address 0x4 - core index']
  #allocation1 [shape = 'u32[144,128]{1,0:T(1,128)}', space=vmem, size = 0x12000, scoped, tag = 'internal scratch']
  %s0 = inlined_call_operand.vmem [shape: bf16[2,17,96], index: 0, kind: input, shape index: {}]
  %s1 = inlined_call_operand.vmem [shape: bf16[2,17,32], index: 1, kind: output, shape index: {0}]
  %s2 = inlined_call_operand.hbm [shape: f32[2,1,16], index: 2, kind: output, shape index: {1}]
  %3 = xla_tuple %s1, %s2
  %s4 = sld [smem:[#allocation0]]
  $region45: #{pmtrans_forward.17} parent=0
    _
  %s6 = ssub.s32 1, %s4
  %s7 = scalar_select 0, %s6, %s4
  $region1: #{pmtrans_forward.17} parent=0
    #allocation2 [shape = 'u8[1024]{0}', space=vmem, size = 0x400, scoped, tag = 'output window, operand 1']
    #allocation3 [shape = 's32[2]{0}', space=sflag, size = 0x8, scoped, tag = 'scoped memory for pmtrans_forward.17']
    %8 = vsyncpa [#allocation3], 0
    %s9 = scalar_lea.sflag [#allocation3], 1
    %10 = vsyncpa %s9, 0
    loop: start=0, step=1, limit=4
    $region2: #{pmtrans_forward.17} parent=1 // loop_pre_header
      _
    $region3: #{pmtrans_forward.17} parent=1 // loop_header
      %s12 = sphi 0, %s16
      %p13 = scmp.ge.s32.totalorder %s12, 4
      %s22 = sphi 0, %s24
      %s25 = sphi 0, %s22
      %s26 = sphi 0, %s25
      %s42 = sphi 0, %s26
      %s48 = sphi 0, %s50
      %s51 = sphi 0, %s48
      %s52 = sphi 0, %s51
      %s68 = sphi 0, %s52
      %s74 = sphi 0, %s76
      %s77 = sphi 0, %s74
      %s78 = sphi 0, %s77
      %s94 = sphi 0, %s78
    $region4: #{pmtrans_forward.17} parent=1 // loop_header_branch
      %15 = sbr.rel (%p13) target = $region8
    $region5: #{pmtrans_forward.17} parent=1 // loop_body
      %s17 = ssub.s32 %s12, 1
      %s18 = ssub.s32 %s12, 2
      %s19 = sadd.s32 %s12, 1
      %s20 = ssub.s32 %s12, %s19
      %p21 = scmp.eq.s32.totalorder %s20, 0
      %s23 = sadd.s32 %s22, 1
      %s24 = scalar_select %p21, %s22, %s23
      %p27 = pneg %p21
      %p28 = scmp.eq.s32.totalorder %s12, 1
      %p29 = por %p27, %p28
      %p30 = scmp.ne.s32.totalorder %s22, %s25
      %p31 = scmp.eq.s32.totalorder %s12, 0
      %p32 = por %p30, %p31
      %p33 = scmp.ne.s32.totalorder %s22, %s25
      %p34 = scmp.eq.s32.totalorder %s17, 1
      %p35 = por %p33, %p34
      %p36 = scmp.ne.s32.totalorder %s25, %s26
      %p37 = scmp.eq.s32.totalorder %s17, 0
      %p38 = por %p36, %p37
      %p39 = scmp.ne.s32.totalorder %s25, %s26
      %p40 = scmp.eq.s32.totalorder %s18, 1
      %p41 = por %p39, %p40
      %p43 = scmp.ne.s32.totalorder %s26, %s42
      %p44 = scmp.eq.s32.totalorder %s18, 0
      %p45 = por %p43, %p44
      %s46 = ssub.s32 %s12, %s19
      %p47 = scmp.eq.s32.totalorder %s46, 0
      %s49 = sadd.s32 %s48, 1
      %s50 = scalar_select %p47, %s48, %s49
      %p53 = pneg %p47
      %p54 = scmp.eq.s32.totalorder %s12, 1
      %p55 = por %p53, %p54
      %p56 = scmp.ne.s32.totalorder %s48, %s51
      %p57 = scmp.eq.s32.totalorder %s12, 0
      %p58 = por %p56, %p57
      %p59 = scmp.ne.s32.totalorder %s48, %s51
      %p60 = scmp.eq.s32.totalorder %s17, 1
      %p61 = por %p59, %p60
      %p62 = scmp.ne.s32.totalorder %s51, %s52
      %p63 = scmp.eq.s32.totalorder %s17, 0
      %p64 = por %p62, %p63
      %p65 = scmp.ne.s32.totalorder %s51, %s52
      %p66 = scmp.eq.s32.totalorder %s18, 1
      %p67 = por %p65, %p66
      %p69 = scmp.ne.s32.totalorder %s52, %s68
      %p70 = scmp.eq.s32.totalorder %s18, 0
      %p71 = por %p69, %p70
      %s72 = ssub.s32 %s12, %s19
      %p73 = scmp.eq.s32.totalorder %s72, 0
      %s75 = sadd.s32 %s74, 1
      %s76 = scalar_select %p73, %s74, %s75
      %p79 = pneg %p73
      %p80 = scmp.eq.s32.totalorder %s12, 1
      %p81 = por %p79, %p80
      %p82 = scmp.ne.s32.totalorder %s74, %s77
      %p83 = scmp.eq.s32.totalorder %s12, 0
      %p84 = por %p82, %p83
      %p85 = scmp.ne.s32.totalorder %s74, %s77
      %p86 = scmp.eq.s32.totalorder %s17, 1
      %p87 = por %p85, %p86
      %p88 = scmp.ne.s32.totalorder %s77, %s78
      %p89 = scmp.eq.s32.totalorder %s17, 0
      %p90 = por %p88, %p89
      %p91 = scmp.ne.s32.totalorder %s77, %s78
      %p92 = scmp.eq.s32.totalorder %s18, 1
      %p93 = por %p91, %p92
      %p95 = scmp.ne.s32.totalorder %s78, %s94
      %p96 = scmp.eq.s32.totalorder %s18, 0
      %p97 = por %p95, %p96
      %p98 = scmp.le.s32.totalorder 1, %s12
      %p99 = scmp.lt.s32.totalorder %s12, 3
      %p100 = pnand %p98, %p99
      %p101 = pneg %p100
      // Predicated region
      $region9: #{pmtrans_forward.17} parent=5 // pred_check
        _
      $region10: #{pmtrans_forward.17} parent=5 // pred_check_branch
        %103 = sbr.rel (%p100) target = $region12
      $region11: #{pmtrans_forward.17} parent=5 // pred_region
        %s104 = ssub.s32 %s12, 1
      $region12: #{pmtrans_forward.17} parent=5 // pred_fallthru
        _
      %p105 = scmp.lt.s32.totalorder %s12, 2
      // Predicated region
      $region13: #{pmtrans_forward.17} parent=5 // pred_check
        %p106 = pneg %p105
      $region14: #{pmtrans_forward.17} parent=5 // pred_check_branch
        %108 = sbr.rel (%p106) target = $region16
      $region15: #{pmtrans_forward.17} parent=5 // pred_region
        // Predicated region
        $region17: #{pmtrans_forward.17} parent=15 // pred_check
          %p109 = pneg %p32
        $region18: #{pmtrans_forward.17} parent=15 // pred_check_branch
          %111 = sbr.rel (%p109) target = $region20
        $region19: #{pmtrans_forward.17} parent=15 // pred_region
          %p112 = scmp.lt.s32.totalorder %s12, 1
          %s113 = scalar_select %p112, %s12, 1
          %s114 = smul.addr %s113, 3
          %s115 = smul.addr %s114, 4
          %s116 = scalar_lea.vmem %s0, %s115
        $region20: #{pmtrans_forward.17} parent=15 // pred_fallthru
          _
      $region16: #{pmtrans_forward.17} parent=5 // pred_fallthru
        _
      %p117 = scmp.le.s32.totalorder 1, %s12
      %p118 = scmp.lt.s32.totalorder %s12, 3
      %p119 = pnand %p117, %p118
      %p120 = pneg %p119
      // Predicated region
      $region21: #{pmtrans_forward.17} parent=5 // pred_check
        _
      $region22: #{pmtrans_forward.17} parent=5 // pred_check_branch
        %122 = sbr.rel (%p119) target = $region24
      $region23: #{pmtrans_forward.17} parent=5 // pred_region
        %s123 = ssub.s32 %s12, 1
        %p124 = scmp.lt.s32.totalorder %s17, 1
        %s125 = scalar_select %p124, %s17, 1
        %s126 = smul.addr %s125, 3
        %s127 = smul.addr %s126, 4
        %s128 = scalar_lea.vmem %s0, %s127
        %p129 = pneg %p38
        %p130 = pneg %p35
        %p131 = pneg %p64
        %p132 = pneg %p61
        %p133 = scmp.lt.s32.totalorder %s17, 1
        %s134 = scalar_select %p133, %s17, 1
        %s135 = smul.addr %s134, 3
        %s136 = smul.addr %s135, 4
        %s137 = scalar_lea.vmem %s1, %s136
        %p138 = pneg %p90
        %p139 = pneg %p87
        %s140 = sand.u32 %s77, 1
        %s141 = scalar_lea.sflag [#allocation3], %s140
        %s142 = sand.u32 %s77, 1
        %s143 = scalar_lea.vmem [#allocation2], %s142
        %p144 = scmp.lt.s32.totalorder %s17, 1
        %s145 = scalar_select %p144, %s17, 1
        %s146 = smul.addr %s145, 3
        %s147 = smul.addr %s146, 4
        %s148 = scalar_lea.vmem %s0, %s147
        %p149 = scmp.lt.s32.totalorder %s17, 1
        %s150 = scalar_select %p149, %s17, 1
        %s151 = smul.addr %s150, 3
        %s152 = smul.addr %s151, 4
        %s153 = scalar_lea.vmem %s1, %s152
        %v156 = vld [vmem:[%s148] sm:$0xf]
        %v157 = vld [vmem:[%s148 + $0x4] sm:$0xf]
        %v158 = vld [vmem:[%s148 + $0x8] sm:$0x1]
        %v159 = vmul.bf16 %v156, 1052065461
        %v160 = vmul.bf16 %v157, 1052065461
        %v161 = vmul.bf16 %v158, 1052065461
        %v165 = vunpack.c.l.b16 %v159
        %v166 = vunpack.c.l.b16 %v160
        %v167 = vunpack.c.l.b16 %v161
        %v168 = vpack.c.b16 %v166, %v165
        %v169 = vpack.c.b16 %v167, %v167
        %v173 = vunpack.c.l.b16 %v156
        %v174 = vunpack.c.l.b16 %v157
        %v175 = vunpack.c.l.b16 %v158
        %v176 = vpack.c.b16 %v174, %v173
        %v177 = vpack.c.b16 %v175, %v175
        %178 = vrot.lane.b32.xlu0 %v176, 96
        %v179 = vpop.permute.xlu0 %178
        %180 = vrot.lane.b32.xlu0 %v177, 96
        %v181 = vpop.permute.xlu0 %180
        %vm182 = vcmask 64512
        %v184 = vsel %vm182, %v168, 0
        %v187 = vsel %vm182, %v169, 0
        %v190 = vsel %vm182, %v179, 0
        %v193 = vsel %vm182, %v181, 0
        %195 = vmatprep.subr.bf16.mxu0 0
        %196 = vmatpush1.bf16.xpose.msra.mxu0 %v190
        %197 = vmatprep.subr.bf16.mxu0 0
        %198 = vmatpush1.bf16.xpose.msra.mxu0 %v193
        %199 = vmatprep.subr.bf16.mxu0 0
        %200 = vmatpush1.bf16.xpose.msra.mxu0 0
        %201 = vmatprep.subr.bf16.mxu0 0
        %202 = vmatpush1.bf16.xpose.msra.mxu0 0
        %203 = vmatprep.subr.bf16.mxu0 0
        %204 = vmatpush1.bf16.xpose.msra.mxu0 0
        %205 = vmatprep.subr.bf16.mxu0 0
        %206 = vmatpush1.bf16.xpose.msra.mxu0 0
        %207 = vmatprep.subr.bf16.mxu0 0
        %208 = vmatpush1.bf16.xpose.msra.mxu0 0
        %209 = vmatprep.subr.bf16.mxu0 0
        %210 = vmatpush1.bf16.xpose.msra.mxu0 0
        %211 = vmatprep.subr.bf16.mxu0 0
        %212 = vmatpush1.bf16.xpose.msra.mxu0 0
        %213 = vmatprep.subr.bf16.mxu0 0
        %214 = vmatpush1.bf16.xpose.msra.mxu0 0
        %215 = vmatprep.subr.bf16.mxu0 0
        %216 = vmatpush1.bf16.xpose.msra.mxu0 0
        %217 = vmatprep.subr.bf16.mxu0 0
        %218 = vmatpush1.bf16.xpose.msra.mxu0 0
        %219 = vmatprep.subr.bf16.mxu0 0
        %220 = vmatpush1.bf16.xpose.msra.mxu0 0
        %221 = vmatprep.subr.bf16.mxu0 0
        %222 = vmatpush1.bf16.xpose.msra.mxu0 0
        %223 = vmatprep.subr.bf16.mxu0 0
        %224 = vmatpush1.bf16.xpose.msra.mxu0 0
        %225 = vmatprep.subr.bf16.mxu0 0
        %226 = vmatpush1.bf16.xpose.msra.mxu0 0
        %227 = vmatprep.mubr.bf16.mxu0 0
        %228 = vmatmul.mubr.bf16.gmra.mrb[0].mxu0 %v184
        %v229 = vpop.f32.mrb[0].mxu0
        %v230 = vadd.f32 0.0, %v229
        %v231 = vpop.f32.mrb[0].mxu0
        %v232 = vpop.f32.mrb[0].mxu0
        %v233 = vadd.f32 0.0, %v232
        %v234 = vpop.f32.mrb[0].mxu0
        %235 = vmatprep.mubr.bf16.mxu0 0
        %236 = vmatmul.mubr.bf16.gmra.mrb[0].mxu0 %v187
        %v237 = vpop.f32.mrb[0].mxu0
        %v238 = vadd.f32 0.0, %v237
        %v239 = vpop.f32.mrb[0].mxu0
        %v240 = vpop.f32.mrb[0].mxu0
        %v241 = vpop.f32.mrb[0].mxu0
        %242 = vdwg.mxu0
        %vm243 = vcmask 138240
        %v244 = vsel %vm243, %v230, -inf
        %245 = vmax.xlane.f32.xlu0 %v244
        %v246 = vpop.xlane.xlu0 %245
        %v247 = vsel %vm243, %v233, -inf
        %248 = vmax.xlane.f32.xlu0 %v247
        %v249 = vpop.xlane.xlu0 %248
        %vm250 = vcmask 131072
        %v251 = vsel %vm250, %v238, -inf
        %252 = vmax.xlane.f32.xlu0 %v251
        %v253 = vpop.xlane.xlu0 %252
        %v254 = vsub.f32 %v230, %v246
        %v255 = vsub.f32 %v233, %v249
        %v256 = vsub.f32 %v238, %v253
        %v257 = vmul.f32 %v254, 1.442695
        %v258 = vpow.pop %v257
        %v259 = vmul.f32 %v255, 1.442695
        %v260 = vpow.pop %v259
        %v261 = vmul.f32 %v256, 1.442695
        %v262 = vpow.pop %v261
        %v263 = vsel %vm243, %v258, 0.0
        %264 = vadd.xlane.f32.xlu0 %v263
        %v265 = vpop.xlane.xlu0 %264
        %v266 = vsel %vm243, %v260, 0.0
        %267 = vadd.xlane.f32.xlu0 %v266
        %v268 = vpop.xlane.xlu0 %267
        %v269 = vsel %vm250, %v262, 0.0
        %270 = vadd.xlane.f32.xlu0 %v269
        %v271 = vpop.xlane.xlu0 %270
        %v272 = vrcp.pop %v265
        %v273 = vrcp.pop %v268
        %v274 = vrcp.pop %v271
        %v275 = vmul.f32 %v258, %v272
        %v276 = vmul.f32 %v260, %v273
        %v277 = vmul.f32 %v262, %v274
        %v278 = vpack.c.bf16 %v276, %v275
        %v279 = vpack.c.bf16 %v277, %v277
        %280 = vrot.lane.b32.xlu0 %v176, 64
        %v281 = vpop.permute.xlu0 %280
        %282 = vrot.lane.b32.xlu0 %v177, 64
        %v283 = vpop.permute.xlu0 %282
        %v286 = vsel %vm243, %v278, 0
        %v289 = vsel %vm243, %v279, 0
        %vm291 = vcmask 1040384
        %v292 = vsel 0, 4294967295, 65535
        %v293 = vsel %vm291, %v292, 0
        %v295 = vand.u32 %v283, %v293
        %297 = vmatprep.subr.bf16.mxu0 0
        %298 = vmatpush1.bf16.msra.mxu0 %v281
        %299 = vmatprep.subr.bf16.mxu0 0
        %300 = vmatpush1.bf16.msra.mxu0 %v295
        %301 = vmatprep.subr.bf16.mxu0 0
        %302 = vmatpush1.bf16.msra.mxu0 0
        %303 = vmatprep.subr.bf16.mxu0 0
        %304 = vmatpush1.bf16.msra.mxu0 0
        %305 = vmatprep.subr.bf16.mxu0 0
        %306 = vmatpush1.bf16.msra.mxu0 0
        %307 = vmatprep.subr.bf16.mxu0 0
        %308 = vmatpush1.bf16.msra.mxu0 0
        %309 = vmatprep.subr.bf16.mxu0 0
        %310 = vmatpush1.bf16.msra.mxu0 0
        %311 = vmatprep.subr.bf16.mxu0 0
        %312 = vmatpush1.bf16.msra.mxu0 0
        %313 = vmatprep.subr.bf16.mxu0 0
        %314 = vmatpush1.bf16.msra.mxu0 0
        %315 = vmatprep.subr.bf16.mxu0 0
        %316 = vmatpush1.bf16.msra.mxu0 0
        %317 = vmatprep.subr.bf16.mxu0 0
        %318 = vmatpush1.bf16.msra.mxu0 0
        %319 = vmatprep.subr.bf16.mxu0 0
        %320 = vmatpush1.bf16.msra.mxu0 0
        %321 = vmatprep.subr.bf16.mxu0 0
        %322 = vmatpush1.bf16.msra.mxu0 0
        %323 = vmatprep.subr.bf16.mxu0 0
        %324 = vmatpush1.bf16.msra.mxu0 0
        %325 = vmatprep.subr.bf16.mxu0 0
        %326 = vmatpush1.bf16.msra.mxu0 0
        %327 = vmatprep.subr.bf16.mxu0 0
        %328 = vmatpush1.bf16.msra.mxu0 0
        %329 = vmatprep.mubr.bf16.mxu0 0
        %330 = vmatmul.mubr.bf16.gmra.mrb[0].mxu0 %v286
        %v331 = vpop.f32.mrb[0].mxu0
        %v332 = vadd.f32 0.0, %v331
        %v333 = vpop.f32.mrb[0].mxu0
        %v334 = vpop.f32.mrb[0].mxu0
        %v335 = vadd.f32 0.0, %v334
        %v336 = vpop.f32.mrb[0].mxu0
        %337 = vmatprep.mubr.bf16.mxu0 0
        %338 = vmatmul.mubr.bf16.gmra.mrb[0].mxu0 %v289
        %v339 = vpop.f32.mrb[0].mxu0
        %v340 = vadd.f32 0.0, %v339
        %v341 = vpop.f32.mrb[0].mxu0
        %v342 = vpop.f32.mrb[0].mxu0
        %v343 = vpop.f32.mrb[0].mxu0
        %344 = vdwg.mxu0
        %v345 = vpack.c.bf16 %v335, %v332
        %v346 = vpack.c.bf16 %v340, %v340
        %v349 = vunpack.c.l.b16 %v345
        %v350 = vunpack.c.h.b16 %v345
        %v351 = vunpack.c.l.b16 %v346
        %v352 = vpack.c.b16 %v349, %v349
        %v353 = vpack.c.b16 %v350, %v350
        %v354 = vpack.c.b16 %v351, %v351
        %vm358 = vcmask 60416
        %359 = vst.msk [vmem:[%s153] sm:$0xf] %vm358, %v352
        %360 = vst.msk [vmem:[%s153 + $0x4] sm:$0xf] %vm358, %v353
        %vm361 = vcmask 57344
        %vm362 = vsmask.f32 256
        %vm363 = vmand %vm361, %vm362
        %v364 = vld [vmem:[%s153 + $0x8] sm:$0x1]
        %v365 = vsel %vm363, %v354, %v364
        %366 = vst [vmem:[%s153 + $0x8] sm:$0x1] %v365
        %v367 = vld [vmem:[%s148] sm:$0xf]
        %v368 = vld [vmem:[%s148 + $0x4] sm:$0xf]
        %v369 = vld [vmem:[%s148 + $0x8] sm:$0x1]
        %v370 = vmul.bf16 %v367, 1052065461
        %v371 = vmul.bf16 %v368, 1052065461
        %v372 = vmul.bf16 %v369, 1052065461
        %v376 = vunpack.c.l.b16 %v370
        %v377 = vunpack.c.l.b16 %v371
        %v378 = vunpack.c.l.b16 %v372
        %v379 = vpack.c.b16 %v377, %v376
        %v380 = vpack.c.b16 %v378, %v378
        %381 = vrot.lane.b32.xlu0 %v379, 120
        %v382 = vpop.permute.xlu0 %381
        %383 = vrot.lane.b32.xlu0 %v380, 120
        %v384 = vpop.permute.xlu0 %383
        %v388 = vunpack.c.l.b16 %v367
        %v389 = vunpack.c.l.b16 %v368
        %v390 = vunpack.c.l.b16 %v369
        %v391 = vpack.c.b16 %v389, %v388
        %v392 = vpack.c.b16 %v390, %v390
        %393 = vrot.lane.b32.xlu0 %v391, 88
        %v394 = vpop.permute.xlu0 %393
        %395 = vrot.lane.b32.xlu0 %v392, 88
        %v396 = vpop.permute.xlu0 %395
        %v398 = vsel %vm182, %v382, 0
        %v401 = vsel %vm182, %v384, 0
        %v404 = vsel %vm182, %v394, 0
        %v407 = vsel %vm182, %v396, 0
        %409 = vmatprep.subr.bf16.mxu0 0
        %410 = vmatpush1.bf16.xpose.msra.mxu0 %v404
        %411 = vmatprep.subr.bf16.mxu0 0
        %412 = vmatpush1.bf16.xpose.msra.mxu0 %v407
        %413 = vmatprep.subr.bf16.mxu0 0
        %414 = vmatpush1.bf16.xpose.msra.mxu0 0
        %415 = vmatprep.subr.bf16.mxu0 0
        %416 = vmatpush1.bf16.xpose.msra.mxu0 0
        %417 = vmatprep.subr.bf16.mxu0 0
        %418 = vmatpush1.bf16.xpose.msra.mxu0 0
        %419 = vmatprep.subr.bf16.mxu0 0
        %420 = vmatpush1.bf16.xpose.msra.mxu0 0
        %421 = vmatprep.subr.bf16.mxu0 0
        %422 = vmatpush1.bf16.xpose.msra.mxu0 0
        %423 = vmatprep.subr.bf16.mxu0 0
        %424 = vmatpush1.bf16.xpose.msra.mxu0 0
        %425 = vmatprep.subr.bf16.mxu0 0
        %426 = vmatpush1.bf16.xpose.msra.mxu0 0
        %427 = vmatprep.subr.bf16.mxu0 0
        %428 = vmatpush1.bf16.xpose.msra.mxu0 0
        %429 = vmatprep.subr.bf16.mxu0 0
        %430 = vmatpush1.bf16.xpose.msra.mxu0 0
        %431 = vmatprep.subr.bf16.mxu0 0
        %432 = vmatpush1.bf16.xpose.msra.mxu0 0
        %433 = vmatprep.subr.bf16.mxu0 0
        %434 = vmatpush1.bf16.xpose.msra.mxu0 0
        %435 = vmatprep.subr.bf16.mxu0 0
        %436 = vmatpush1.bf16.xpose.msra.mxu0 0
        %437 = vmatprep.subr.bf16.mxu0 0
        %438 = vmatpush1.bf16.xpose.msra.mxu0 0
        %439 = vmatprep.subr.bf16.mxu0 0
        %440 = vmatpush1.bf16.xpose.msra.mxu0 0
        %441 = vmatprep.mubr.bf16.mxu0 0
        %442 = vmatmul.mubr.bf16.gmra.mrb[0].mxu0 %v398
        %v443 = vpop.f32.mrb[0].mxu0
        %v444 = vadd.f32 0.0, %v443
        %v445 = vpop.f32.mrb[0].mxu0
        %v446 = vpop.f32.mrb[0].mxu0
        %v447 = vadd.f32 0.0, %v446
        %v448 = vpop.f32.mrb[0].mxu0
        %449 = vmatprep.mubr.bf16.mxu0 0
        %450 = vmatmul.mubr.bf16.gmra.mrb[0].mxu0 %v401
        %v451 = vpop.f32.mrb[0].mxu0
        %v452 = vadd.f32 0.0, %v451
        %v453 = vpop.f32.mrb[0].mxu0
        %v454 = vpop.f32.mrb[0].mxu0
        %v455 = vpop.f32.mrb[0].mxu0
        %456 = vdwg.mxu0
        %v457 = vsel %vm243, %v444, -inf
        %458 = vmax.xlane.f32.xlu0 %v457
        %v459 = vpop.xlane.xlu0 %458
        %v460 = vsel %vm243, %v447, -inf
        %461 = vmax.xlane.f32.xlu0 %v460
        %v462 = vpop.xlane.xlu0 %461
        %v463 = vsel %vm250, %v452, -inf
        %464 = vmax.xlane.f32.xlu0 %v463
        %v465 = vpop.xlane.xlu0 %464
        %v466 = vsub.f32 %v444, %v459
        %v467 = vsub.f32 %v447, %v462
        %v468 = vsub.f32 %v452, %v465
        %v469 = vmul.f32 %v466, 1.442695
        %v470 = vpow.pop %v469
        %v471 = vmul.f32 %v467, 1.442695
        %v472 = vpow.pop %v471
        %v473 = vmul.f32 %v468, 1.442695
        %v474 = vpow.pop %v473
        %v475 = vsel %vm243, %v470, 0.0
        %476 = vadd.xlane.f32.xlu0 %v475
        %v477 = vpop.xlane.xlu0 %476
        %v478 = vsel %vm243, %v472, 0.0
        %479 = vadd.xlane.f32.xlu0 %v478
        %v480 = vpop.xlane.xlu0 %479
        %v481 = vsel %vm250, %v474, 0.0
        %482 = vadd.xlane.f32.xlu0 %v481
        %v483 = vpop.xlane.xlu0 %482
        %v484 = vrcp.pop %v477
        %v485 = vrcp.pop %v480
        %v486 = vrcp.pop %v483
        %v487 = vmul.f32 %v470, %v484
        %v488 = vmul.f32 %v472, %v485
        %v489 = vmul.f32 %v474, %v486
        %v490 = vpack.c.bf16 %v488, %v487
        %v491 = vpack.c.bf16 %v489, %v489
        %492 = vrot.lane.b32.xlu0 %v391, 56
        %v493 = vpop.permute.xlu0 %492
        %494 = vrot.lane.b32.xlu0 %v392, 56
        %v495 = vpop.permute.xlu0 %494
        %v498 = vsel %vm243, %v490, 0
        %v501 = vsel %vm243, %v491, 0
        %v504 = vand.u32 %v495, %v293
        %506 = vmatprep.subr.bf16.mxu0 0
        %507 = vmatpush1.bf16.msra.mxu0 %v493
        %508 = vmatprep.subr.bf16.mxu0 0
        %509 = vmatpush1.bf16.msra.mxu0 %v504
        %510 = vmatprep.subr.bf16.mxu0 0
        %511 = vmatpush1.bf16.msra.mxu0 0
        %512 = vmatprep.subr.bf16.mxu0 0
        %513 = vmatpush1.bf16.msra.mxu0 0
        %514 = vmatprep.subr.bf16.mxu0 0
        %515 = vmatpush1.bf16.msra.mxu0 0
        %516 = vmatprep.subr.bf16.mxu0 0
        %517 = vmatpush1.bf16.msra.mxu0 0
        %518 = vmatprep.subr.bf16.mxu0 0
        %519 = vmatpush1.bf16.msra.mxu0 0
        %520 = vmatprep.subr.bf16.mxu0 0
        %521 = vmatpush1.bf16.msra.mxu0 0
        %522 = vmatprep.subr.bf16.mxu0 0
        %523 = vmatpush1.bf16.msra.mxu0 0
        %524 = vmatprep.subr.bf16.mxu0 0
        %525 = vmatpush1.bf16.msra.mxu0 0
        %526 = vmatprep.subr.bf16.mxu0 0
        %527 = vmatpush1.bf16.msra.mxu0 0
        %528 = vmatprep.subr.bf16.mxu0 0
        %529 = vmatpush1.bf16.msra.mxu0 0
        %530 = vmatprep.subr.bf16.mxu0 0
        %531 = vmatpush1.bf16.msra.mxu0 0
        %532 = vmatprep.subr.bf16.mxu0 0
        %533 = vmatpush1.bf16.msra.mxu0 0
        %534 = vmatprep.subr.bf16.mxu0 0
        %535 = vmatpush1.bf16.msra.mxu0 0
        %536 = vmatprep.subr.bf16.mxu0 0
        %537 = vmatpush1.bf16.msra.mxu0 0
        %538 = vmatprep.mubr.bf16.mxu0 0
        %539 = vmatmul.mubr.bf16.gmra.mrb[0].mxu0 %v498
        %v540 = vpop.f32.mrb[0].mxu0
        %v541 = vadd.f32 0.0, %v540
        %v542 = vpop.f32.mrb[0].mxu0
        %v543 = vpop.f32.mrb[0].mxu0
        %v544 = vadd.f32 0.0, %v543
        %v545 = vpop.f32.mrb[0].mxu0
        %546 = vmatprep.mubr.bf16.mxu0 0
        %547 = vmatmul.mubr.bf16.gmra.mrb[0].mxu0 %v501
        %v548 = vpop.f32.mrb[0].mxu0
        %v549 = vadd.f32 0.0, %v548
        %v550 = vpop.f32.mrb[0].mxu0
        %v551 = vpop.f32.mrb[0].mxu0
        %v552 = vpop.f32.mrb[0].mxu0
        %553 = vdwg.mxu0
        %v554 = vpack.c.bf16 %v544, %v541
        %v555 = vpack.c.bf16 %v549, %v549
        %v558 = vunpack.c.l.b16 %v554
        %v559 = vunpack.c.h.b16 %v554
        %v560 = vunpack.c.l.b16 %v555
        %v561 = vpack.c.b16 %v558, %v558
        %v562 = vpack.c.b16 %v559, %v559
        %v563 = vpack.c.b16 %v560, %v560
        %564 = vrot.lane.b32.xlu0 %v561, 8
        %v565 = vpop.permute.xlu0 %564
        %566 = vrot.lane.b32.xlu0 %v562, 8
        %v567 = vpop.permute.xlu0 %566
        %568 = vrot.lane.b32.xlu0 %v563, 8
        %v569 = vpop.permute.xlu0 %568
        %vm573 = vcmask 126016
        %574 = vst.msk [vmem:[%s153] sm:$0xf] %vm573, %v565
        %575 = vst.msk [vmem:[%s153 + $0x4] sm:$0xf] %vm573, %v567
        %vm576 = vcmask 122944
        %vm577 = vmand %vm576, %vm362
        %v578 = vld [vmem:[%s153 + $0x8] sm:$0x1]
        %v579 = vsel %vm577, %v569, %v578
        %580 = vst [vmem:[%s153 + $0x8] sm:$0x1] %v579
        %v581 = vadd.f32 %v275, %v487
        %v582 = vld [vmem:[%s148] sm:$0xf]
        %v583 = vld [vmem:[%s148 + $0x4] sm:$0xf]
        %v584 = vld [vmem:[%s148 + $0x8] sm:$0x1]
        %v585 = vmul.bf16 %v582, 1052065461
        %v586 = vmul.bf16 %v583, 1052065461
        %v587 = vmul.bf16 %v584, 1052065461
        %v591 = vunpack.c.l.b16 %v585
        %v592 = vunpack.c.l.b16 %v586
        %v593 = vunpack.c.l.b16 %v587
        %v594 = vpack.c.b16 %v592, %v591
        %v595 = vpack.c.b16 %v593, %v593
        %596 = vrot.lane.b32.xlu0 %v594, 112
        %v597 = vpop.permute.xlu0 %596
        %598 = vrot.lane.b32.xlu0 %v595, 112
        %v599 = vpop.permute.xlu0 %598
        %v603 = vunpack.c.l.b16 %v582
        %v604 = vunpack.c.l.b16 %v583
        %v605 = vunpack.c.l.b16 %v584
        %v606 = vpack.c.b16 %v604, %v603
        %v607 = vpack.c.b16 %v605, %v605
        %608 = vrot.lane.b32.xlu0 %v606, 80
        %v609 = vpop.permute.xlu0 %608
        %610 = vrot.lane.b32.xlu0 %v607, 80
        %v611 = vpop.permute.xlu0 %610
        %v613 = vsel %vm182, %v597, 0
        %v616 = vsel %vm182, %v599, 0
        %v619 = vsel %vm182, %v609, 0
        %v622 = vsel %vm182, %v611, 0
        %624 = vmatprep.subr.bf16.mxu0 0
        %625 = vmatpush1.bf16.xpose.msra.mxu0 %v619
        %626 = vmatprep.subr.bf16.mxu0 0
        %627 = vmatpush1.bf16.xpose.msra.mxu0 %v622
        %628 = vmatprep.subr.bf16.mxu0 0
        %629 = vmatpush1.bf16.xpose.msra.mxu0 0
        %630 = vmatprep.subr.bf16.mxu0 0
        %631 = vmatpush1.bf16.xpose.msra.mxu0 0
        %632 = vmatprep.subr.bf16.mxu0 0
        %633 = vmatpush1.bf16.xpose.msra.mxu0 0
        %634 = vmatprep.subr.bf16.mxu0 0
        %635 = vmatpush1.bf16.xpose.msra.mxu0 0
        %636 = vmatprep.subr.bf16.mxu0 0
        %637 = vmatpush1.bf16.xpose.msra.mxu0 0
        %638 = vmatprep.subr.bf16.mxu0 0
        %639 = vmatpush1.bf16.xpose.msra.mxu0 0
        %640 = vmatprep.subr.bf16.mxu0 0
        %641 = vmatpush1.bf16.xpose.msra.mxu0 0
        %642 = vmatprep.subr.bf16.mxu0 0
        %643 = vmatpush1.bf16.xpose.msra.mxu0 0
        %644 = vmatprep.subr.bf16.mxu0 0
        %645 = vmatpush1.bf16.xpose.msra.mxu0 0
        %646 = vmatprep.subr.bf16.mxu0 0
        %647 = vmatpush1.bf16.xpose.msra.mxu0 0
        %648 = vmatprep.subr.bf16.mxu0 0
        %649 = vmatpush1.bf16.xpose.msra.mxu0 0
        %650 = vmatprep.subr.bf16.mxu0 0
        %651 = vmatpush1.bf16.xpose.msra.mxu0 0
        %652 = vmatprep.subr.bf16.mxu0 0
        %653 = vmatpush1.bf16.xpose.msra.mxu0 0
        %654 = vmatprep.subr.bf16.mxu0 0
        %655 = vmatpush1.bf16.xpose.msra.mxu0 0
        %656 = vmatprep.mubr.bf16.mxu0 0
        %657 = vmatmul.mubr.bf16.gmra.mrb[0].mxu0 %v613
        %v658 = vpop.f32.mrb[0].mxu0
        %v659 = vadd.f32 0.0, %v658
        %v660 = vpop.f32.mrb[0].mxu0
        %v661 = vpop.f32.mrb[0].mxu0
        %v662 = vadd.f32 0.0, %v661
        %v663 = vpop.f32.mrb[0].mxu0
        %664 = vmatprep.mubr.bf16.mxu0 0
        %665 = vmatmul.mubr.bf16.gmra.mrb[0].mxu0 %v616
        %v666 = vpop.f32.mrb[0].mxu0
        %v667 = vadd.f32 0.0, %v666
        %v668 = vpop.f32.mrb[0].mxu0
        %v669 = vpop.f32.mrb[0].mxu0
        %v670 = vpop.f32.mrb[0].mxu0
        %671 = vdwg.mxu0
        %v672 = vsel %vm243, %v659, -inf
        %673 = vmax.xlane.f32.xlu0 %v672
        %v674 = vpop.xlane.xlu0 %673
        %v675 = vsel %vm243, %v662, -inf
        %676 = vmax.xlane.f32.xlu0 %v675
        %v677 = vpop.xlane.xlu0 %676
        %v678 = vsel %vm250, %v667, -inf
        %679 = vmax.xlane.f32.xlu0 %v678
        %v680 = vpop.xlane.xlu0 %679
        %v681 = vsub.f32 %v659, %v674
        %v682 = vsub.f32 %v662, %v677
        %v683 = vsub.f32 %v667, %v680
        %v684 = vmul.f32 %v681, 1.442695
        %v685 = vpow.pop %v684
        %v686 = vmul.f32 %v682, 1.442695
        %v687 = vpow.pop %v686
        %v688 = vmul.f32 %v683, 1.442695
        %v689 = vpow.pop %v688
        %v690 = vsel %vm243, %v685, 0.0
        %691 = vadd.xlane.f32.xlu0 %v690
        %v692 = vpop.xlane.xlu0 %691
        %v693 = vsel %vm243, %v687, 0.0
        %694 = vadd.xlane.f32.xlu0 %v693
        %v695 = vpop.xlane.xlu0 %694
        %v696 = vsel %vm250, %v689, 0.0
        %697 = vadd.xlane.f32.xlu0 %v696
        %v698 = vpop.xlane.xlu0 %697
        %v699 = vrcp.pop %v692
        %v700 = vrcp.pop %v695
        %v701 = vrcp.pop %v698
        %v702 = vmul.f32 %v685, %v699
        %v703 = vmul.f32 %v687, %v700
        %v704 = vmul.f32 %v689, %v701
        %v705 = vpack.c.bf16 %v703, %v702
        %v706 = vpack.c.bf16 %v704, %v704
        %707 = vrot.lane.b32.xlu0 %v606, 48
        %v708 = vpop.permute.xlu0 %707
        %709 = vrot.lane.b32.xlu0 %v607, 48
        %v710 = vpop.permute.xlu0 %709
        %v713 = vsel %vm243, %v705, 0
        %v716 = vsel %vm243, %v706, 0
        %v719 = vand.u32 %v710, %v293
        %721 = vmatprep.subr.bf16.mxu0 0
        %722 = vmatpush1.bf16.msra.mxu0 %v708
        %723 = vmatprep.subr.bf16.mxu0 0
        %724 = vmatpush1.bf16.msra.mxu0 %v719
        %725 = vmatprep.subr.bf16.mxu0 0
        %726 = vmatpush1.bf16.msra.mxu0 0
        %727 = vmatprep.subr.bf16.mxu0 0
        %728 = vmatpush1.bf16.msra.mxu0 0
        %729 = vmatprep.subr.bf16.mxu0 0
        %730 = vmatpush1.bf16.msra.mxu0 0
        %731 = vmatprep.subr.bf16.mxu0 0
        %732 = vmatpush1.bf16.msra.mxu0 0
        %733 = vmatprep.subr.bf16.mxu0 0
        %734 = vmatpush1.bf16.msra.mxu0 0
        %735 = vmatprep.subr.bf16.mxu0 0
        %736 = vmatpush1.bf16.msra.mxu0 0
        %737 = vmatprep.subr.bf16.mxu0 0
        %738 = vmatpush1.bf16.msra.mxu0 0
        %739 = vmatprep.subr.bf16.mxu0 0
        %740 = vmatpush1.bf16.msra.mxu0 0
        %741 = vmatprep.subr.bf16.mxu0 0
        %742 = vmatpush1.bf16.msra.mxu0 0
        %743 = vmatprep.subr.bf16.mxu0 0
        %744 = vmatpush1.bf16.msra.mxu0 0
        %745 = vmatprep.subr.bf16.mxu0 0
        %746 = vmatpush1.bf16.msra.mxu0 0
        %747 = vmatprep.subr.bf16.mxu0 0
        %748 = vmatpush1.bf16.msra.mxu0 0
        %749 = vmatprep.subr.bf16.mxu0 0
        %750 = vmatpush1.bf16.msra.mxu0 0
        %751 = vmatprep.subr.bf16.mxu0 0
        %752 = vmatpush1.bf16.msra.mxu0 0
        %753 = vmatprep.mubr.bf16.mxu0 0
        %754 = vmatmul.mubr.bf16.gmra.mrb[0].mxu0 %v713
        %v755 = vpop.f32.mrb[0].mxu0
        %v756 = vadd.f32 0.0, %v755
        %v757 = vpop.f32.mrb[0].mxu0
        %v758 = vpop.f32.mrb[0].mxu0
        %v759 = vadd.f32 0.0, %v758
        %v760 = vpop.f32.mrb[0].mxu0
        %761 = vmatprep.mubr.bf16.mxu0 0
        %762 = vmatmul.mubr.bf16.gmra.mrb[0].mxu0 %v716
        %v763 = vpop.f32.mrb[0].mxu0
        %v764 = vadd.f32 0.0, %v763
        %v765 = vpop.f32.mrb[0].mxu0
        %v766 = vpop.f32.mrb[0].mxu0
        %v767 = vpop.f32.mrb[0].mxu0
        %768 = vdwg.mxu0
        %v769 = vpack.c.bf16 %v759, %v756
        %v770 = vpack.c.bf16 %v764, %v764
        %v773 = vunpack.c.l.b16 %v769
        %v774 = vunpack.c.h.b16 %v769
        %v775 = vunpack.c.l.b16 %v770
        %v776 = vpack.c.b16 %v773, %v773
        %v777 = vpack.c.b16 %v774, %v774
        %v778 = vpack.c.b16 %v775, %v775
        %779 = vrot.lane.b32.xlu0 %v776, 16
        %v780 = vpop.permute.xlu0 %779
        %781 = vrot.lane.b32.xlu0 %v777, 16
        %v782 = vpop.permute.xlu0 %781
        %783 = vrot.lane.b32.xlu0 %v778, 16
        %v784 = vpop.permute.xlu0 %783
        %vm788 = vcmask 191616
        %789 = vst.msk [vmem:[%s153] sm:$0xf] %vm788, %v780
        %790 = vst.msk [vmem:[%s153 + $0x4] sm:$0xf] %vm788, %v782
        %vm791 = vcmask 188544
        %vm792 = vmand %vm791, %vm362
        %v793 = vld [vmem:[%s153 + $0x8] sm:$0x1]
        %v794 = vsel %vm792, %v784, %v793
        %795 = vst [vmem:[%s153 + $0x8] sm:$0x1] %v794
        %v796 = vadd.f32 %v581, %v702
        %v797 = vld [vmem:[%s148] sm:$0xf]
        %v798 = vld [vmem:[%s148 + $0x4] sm:$0xf]
        %v799 = vld [vmem:[%s148 + $0x8] sm:$0x1]
        %v800 = vmul.bf16 %v797, 1052065461
        %v801 = vmul.bf16 %v798, 1052065461
        %v802 = vmul.bf16 %v799, 1052065461
        %v806 = vunpack.c.l.b16 %v800
        %v807 = vunpack.c.l.b16 %v801
        %v808 = vunpack.c.l.b16 %v802
        %v809 = vpack.c.b16 %v807, %v806
        %v810 = vpack.c.b16 %v808, %v808
        %811 = vrot.lane.b32.xlu0 %v809, 104
        %v812 = vpop.permute.xlu0 %811
        %813 = vrot.lane.b32.xlu0 %v810, 104
        %v814 = vpop.permute.xlu0 %813
        %v818 = vunpack.c.l.b16 %v797
        %v819 = vunpack.c.l.b16 %v798
        %v820 = vunpack.c.l.b16 %v799
        %v821 = vpack.c.b16 %v819, %v818
        %v822 = vpack.c.b16 %v820, %v820
        %823 = vrot.lane.b32.xlu0 %v821, 72
        %v824 = vpop.permute.xlu0 %823
        %825 = vrot.lane.b32.xlu0 %v822, 72
        %v826 = vpop.permute.xlu0 %825
        %v828 = vsel %vm182, %v812, 0
        %v831 = vsel %vm182, %v814, 0
        %v834 = vsel %vm182, %v824, 0
        %v837 = vsel %vm182, %v826, 0
        %839 = vmatprep.subr.bf16.mxu0 0
        %840 = vmatpush1.bf16.xpose.msra.mxu0 %v834
        %841 = vmatprep.subr.bf16.mxu0 0
        %842 = vmatpush1.bf16.xpose.msra.mxu0 %v837
        %843 = vmatprep.subr.bf16.mxu0 0
        %844 = vmatpush1.bf16.xpose.msra.mxu0 0
        %845 = vmatprep.subr.bf16.mxu0 0
        %846 = vmatpush1.bf16.xpose.msra.mxu0 0
        %847 = vmatprep.subr.bf16.mxu0 0
        %848 = vmatpush1.bf16.xpose.msra.mxu0 0
        %849 = vmatprep.subr.bf16.mxu0 0
        %850 = vmatpush1.bf16.xpose.msra.mxu0 0
        %851 = vmatprep.subr.bf16.mxu0 0
        %852 = vmatpush1.bf16.xpose.msra.mxu0 0
        %853 = vmatprep.subr.bf16.mxu0 0
        %854 = vmatpush1.bf16.xpose.msra.mxu0 0
        %855 = vmatprep.subr.bf16.mxu0 0
        %856 = vmatpush1.bf16.xpose.msra.mxu0 0
        %857 = vmatprep.subr.bf16.mxu0 0
        %858 = vmatpush1.bf16.xpose.msra.mxu0 0
        %859 = vmatprep.subr.bf16.mxu0 0
        %860 = vmatpush1.bf16.xpose.msra.mxu0 0
        %861 = vmatprep.subr.bf16.mxu0 0
        %862 = vmatpush1.bf16.xpose.msra.mxu0 0
        %863 = vmatprep.subr.bf16.mxu0 0
        %864 = vmatpush1.bf16.xpose.msra.mxu0 0
        %865 = vmatprep.subr.bf16.mxu0 0
        %866 = vmatpush1.bf16.xpose.msra.mxu0 0
        %867 = vmatprep.subr.bf16.mxu0 0
        %868 = vmatpush1.bf16.xpose.msra.mxu0 0
        %869 = vmatprep.subr.bf16.mxu0 0
        %870 = vmatpush1.bf16.xpose.msra.mxu0 0
        %871 = vmatprep.mubr.bf16.mxu0 0
        %872 = vmatmul.mubr.bf16.gmra.mrb[0].mxu0 %v828
        %v873 = vpop.f32.mrb[0].mxu0
        %v874 = vadd.f32 0.0, %v873
        %v875 = vpop.f32.mrb[0].mxu0
        %v876 = vpop.f32.mrb[0].mxu0
        %v877 = vadd.f32 0.0, %v876
        %v878 = vpop.f32.mrb[0].mxu0
        %879 = vmatprep.mubr.bf16.mxu0 0
        %880 = vmatmul.mubr.bf16.gmra.mrb[0].mxu0 %v831
        %v881 = vpop.f32.mrb[0].mxu0
        %v882 = vadd.f32 0.0, %v881
        %v883 = vpop.f32.mrb[0].mxu0
        %v884 = vpop.f32.mrb[0].mxu0
        %v885 = vpop.f32.mrb[0].mxu0
        %886 = vdwg.mxu0
        %v887 = vsel %vm243, %v874, -inf
        %888 = vmax.xlane.f32.xlu0 %v887
        %v889 = vpop.xlane.xlu0 %888
        %v890 = vsel %vm243, %v877, -inf
        %891 = vmax.xlane.f32.xlu0 %v890
        %v892 = vpop.xlane.xlu0 %891
        %v893 = vsel %vm250, %v882, -inf
        %894 = vmax.xlane.f32.xlu0 %v893
        %v895 = vpop.xlane.xlu0 %894
        %v896 = vsub.f32 %v874, %v889
        %v897 = vsub.f32 %v877, %v892
        %v898 = vsub.f32 %v882, %v895
        %v899 = vmul.f32 %v896, 1.442695
        %v900 = vpow.pop %v899
        %v901 = vmul.f32 %v897, 1.442695
        %v902 = vpow.pop %v901
        %v903 = vmul.f32 %v898, 1.442695
        %v904 = vpow.pop %v903
        %v905 = vsel %vm243, %v900, 0.0
        %906 = vadd.xlane.f32.xlu0 %v905
        %v907 = vpop.xlane.xlu0 %906
        %v908 = vsel %vm243, %v902, 0.0
        %909 = vadd.xlane.f32.xlu0 %v908
        %v910 = vpop.xlane.xlu0 %909
        %v911 = vsel %vm250, %v904, 0.0
        %912 = vadd.xlane.f32.xlu0 %v911
        %v913 = vpop.xlane.xlu0 %912
        %v914 = vrcp.pop %v907
        %v915 = vrcp.pop %v910
        %v916 = vrcp.pop %v913
        %v917 = vmul.f32 %v900, %v914
        %v918 = vmul.f32 %v902, %v915
        %v919 = vmul.f32 %v904, %v916
        %v920 = vpack.c.bf16 %v918, %v917
        %v921 = vpack.c.bf16 %v919, %v919
        %922 = vrot.lane.b32.xlu0 %v821, 40
        %v923 = vpop.permute.xlu0 %922
        %924 = vrot.lane.b32.xlu0 %v822, 40
        %v925 = vpop.permute.xlu0 %924
        %v928 = vsel %vm243, %v920, 0
        %v931 = vsel %vm243, %v921, 0
        %v934 = vand.u32 %v925, %v293
        %936 = vmatprep.subr.bf16.mxu0 0
        %937 = vmatpush1.bf16.msra.mxu0 %v923
        %938 = vmatprep.subr.bf16.mxu0 0
        %939 = vmatpush1.bf16.msra.mxu0 %v934
        %940 = vmatprep.subr.bf16.mxu0 0
        %941 = vmatpush1.bf16.msra.mxu0 0
        %942 = vmatprep.subr.bf16.mxu0 0
        %943 = vmatpush1.bf16.msra.mxu0 0
        %944 = vmatprep.subr.bf16.mxu0 0
        %945 = vmatpush1.bf16.msra.mxu0 0
        %946 = vmatprep.subr.bf16.mxu0 0
        %947 = vmatpush1.bf16.msra.mxu0 0
        %948 = vmatprep.subr.bf16.mxu0 0
        %949 = vmatpush1.bf16.msra.mxu0 0
        %950 = vmatprep.subr.bf16.mxu0 0
        %951 = vmatpush1.bf16.msra.mxu0 0
        %952 = vmatprep.subr.bf16.mxu0 0
        %953 = vmatpush1.bf16.msra.mxu0 0
        %954 = vmatprep.subr.bf16.mxu0 0
        %955 = vmatpush1.bf16.msra.mxu0 0
        %956 = vmatprep.subr.bf16.mxu0 0
        %957 = vmatpush1.bf16.msra.mxu0 0
        %958 = vmatprep.subr.bf16.mxu0 0
        %959 = vmatpush1.bf16.msra.mxu0 0
        %960 = vmatprep.subr.bf16.mxu0 0
        %961 = vmatpush1.bf16.msra.mxu0 0
        %962 = vmatprep.subr.bf16.mxu0 0
        %963 = vmatpush1.bf16.msra.mxu0 0
        %964 = vmatprep.subr.bf16.mxu0 0
        %965 = vmatpush1.bf16.msra.mxu0 0
        %966 = vmatprep.subr.bf16.mxu0 0
        %967 = vmatpush1.bf16.msra.mxu0 0
        %968 = vmatprep.mubr.bf16.mxu0 0
        %969 = vmatmul.mubr.bf16.gmra.mrb[0].mxu0 %v928
        %v970 = vpop.f32.mrb[0].mxu0
        %v971 = vadd.f32 0.0, %v970
        %v972 = vpop.f32.mrb[0].mxu0
        %v973 = vpop.f32.mrb[0].mxu0
        %v974 = vadd.f32 0.0, %v973
        %v975 = vpop.f32.mrb[0].mxu0
        %976 = vmatprep.mubr.bf16.mxu0 0
        %977 = vmatmul.mubr.bf16.gmra.mrb[0].mxu0 %v931
        %v978 = vpop.f32.mrb[0].mxu0
        %v979 = vadd.f32 0.0, %v978
        %v980 = vpop.f32.mrb[0].mxu0
        %v981 = vpop.f32.mrb[0].mxu0
        %v982 = vpop.f32.mrb[0].mxu0
        %983 = vdwg.mxu0
        %v984 = vpack.c.bf16 %v974, %v971
        %v985 = vpack.c.bf16 %v979, %v979
        %v988 = vunpack.c.l.b16 %v984
        %v989 = vunpack.c.h.b16 %v984
        %v990 = vunpack.c.l.b16 %v985
        %v991 = vpack.c.b16 %v988, %v988
        %v992 = vpack.c.b16 %v989, %v989
        %v993 = vpack.c.b16 %v990, %v990
        %994 = vrot.lane.b32.xlu0 %v991, 24
        %v995 = vpop.permute.xlu0 %994
        %996 = vrot.lane.b32.xlu0 %v992, 24
        %v997 = vpop.permute.xlu0 %996
        %998 = vrot.lane.b32.xlu0 %v993, 24
        %v999 = vpop.permute.xlu0 %998
        %vm1003 = vcmask 257216
        %1004 = vst.msk [vmem:[%s153] sm:$0xf] %vm1003, %v995
        %1005 = vst.msk [vmem:[%s153 + $0x4] sm:$0xf] %vm1003, %v997
        %vm1006 = vcmask 254144
        %vm1007 = vmand %vm1006, %vm362
        %v1008 = vld [vmem:[%s153 + $0x8] sm:$0x1]
        %v1009 = vsel %vm1007, %v999, %v1008
        %1010 = vst [vmem:[%s153 + $0x8] sm:$0x1] %v1009
        %v1011 = vadd.f32 %v796, %v917
        %v1012 = vmul.f32 %v1011, 0.25
        %1014 = vrot.lane.b32.xlu0 %v1012, 127
        %v1015 = vpop.permute.xlu0 %1014
        %vm1017 = vcmask 122880
        %1018 = vst.msk [vmem:[%s143] sm:$0x1] %vm1017, %v1015
        %p1019 = scmp.lt.s32.totalorder %s17, 1
        %s1020 = scalar_select %p1019, %s17, 1
        %s1021 = smul.addr %s1020, 3
        %s1022 = smul.addr %s1021, 4
        %s1023 = scalar_lea.vmem %s1, %s1022
        %s1024 = sand.u32 %s77, 1
        %s1025 = scalar_lea.sflag [#allocation3], %s1024
        %s1026 = sand.u32 %s77, 1
        %s1027 = scalar_lea.vmem [#allocation2], %s1026
        // Predicated region
        $region25: #{pmtrans_forward.17} parent=23 // pred_check
          %p1028 = pneg %p61
        $region26: #{pmtrans_forward.17} parent=23 // pred_check_branch
          %1030 = sbr.rel (%p1028) target = $region28
        $region27: #{pmtrans_forward.17} parent=23 // pred_region
          _
        $region28: #{pmtrans_forward.17} parent=23 // pred_fallthru
          _
        // Predicated region
        $region29: #{pmtrans_forward.17} parent=23 // pred_check
          %p1031 = pneg %p87
        $region30: #{pmtrans_forward.17} parent=23 // pred_check_branch
          %1033 = sbr.rel (%p1031) target = $region32
        $region31: #{pmtrans_forward.17} parent=23 // pred_region
          %s1035 = ssub.s32 16, 16
          %1036 = vsyncadd %s1025, %s1035
          %s1037 = smul.addr %s17, 16
          %s1038 = scalar_lea.hbm %s2, %s1037
          %s1040 = sshll.u32 %s1027, 4
          %s1041 = int_to_ptr.vmem [resolvable:$true] %s1040
          %1043 = dma.vmem_to_hbm [thread:$0]  %s1041, 16, %s1038, %s1025
        $region32: #{pmtrans_forward.17} parent=23 // pred_fallthru
          _
      $region24: #{pmtrans_forward.17} parent=5 // pred_fallthru
        _
      %p1044 = scmp.le.s32.totalorder 2, %s12
      // Predicated region
      $region33: #{pmtrans_forward.17} parent=5 // pred_check
        %p1045 = pneg %p1044
      $region34: #{pmtrans_forward.17} parent=5 // pred_check_branch
        %1047 = sbr.rel (%p1045) target = $region36
      $region35: #{pmtrans_forward.17} parent=5 // pred_region
        %s1048 = ssub.s32 %s12, 2
        // Predicated region
        $region37: #{pmtrans_forward.17} parent=35 // pred_check
          %p1049 = pneg %p67
        $region38: #{pmtrans_forward.17} parent=35 // pred_check_branch
          %1051 = sbr.rel (%p1049) target = $region40
        $region39: #{pmtrans_forward.17} parent=35 // pred_region
          %p1052 = scmp.lt.s32.totalorder %s18, 1
          %s1053 = scalar_select %p1052, %s18, 1
          %s1054 = smul.addr %s1053, 3
          %s1055 = smul.addr %s1054, 4
          %s1056 = scalar_lea.vmem %s1, %s1055
        $region40: #{pmtrans_forward.17} parent=35 // pred_fallthru
          _
        // Predicated region
        $region41: #{pmtrans_forward.17} parent=35 // pred_check
          %p1057 = pneg %p93
        $region42: #{pmtrans_forward.17} parent=35 // pred_check_branch
          %1059 = sbr.rel (%p1057) target = $region44
        $region43: #{pmtrans_forward.17} parent=35 // pred_region
          %s1060 = sand.u32 %s78, 1
          %s1061 = scalar_lea.sflag [#allocation3], %s1060
          %s1062 = sand.u32 %s78, 1
          %s1063 = scalar_lea.vmem [#allocation2], %s1062
          %1064 = dma.done %s1061, 16
        $region44: #{pmtrans_forward.17} parent=35 // pred_fallthru
          _
      $region36: #{pmtrans_forward.17} parent=5 // pred_fallthru
        _
    $region6: #{pmtrans_forward.17} parent=1 // loop_footer
      %s16 = sadd.s32 1, %s12
    $region7: #{pmtrans_forward.17} parent=1 // loop_footer_branch
      %11 = sbr.rel target = $region3
    $region8: #{pmtrans_forward.17} parent=1 // loop_exit
      _
    %1065 = vsyncpa [#allocation3], 1
    %s1066 = scalar_lea.sflag [#allocation3], 1
    %1067 = vsyncpa %s1066, 1

// kernel: pmtrans_forward.21
$region0: #{pmtrans_forward.21}
  #allocation0 [shape = 'u32[]', space=smem, size = 0x4, offset = 0x4, fixed_abs, tag = 'smem constant byte address 0x4 - core index']
  #allocation1 [shape = 'u32[144,128]{1,0:T(1,128)}', space=vmem, size = 0x12000, scoped, tag = 'internal scratch']
  %s0 = inlined_call_operand.vmem [shape: f32[2,32], index: 0, kind: input, shape index: {}]
  %s1 = inlined_call_operand.vmem [shape: bf16[32,48], index: 1, kind: input, shape index: {}]
  %s2 = inlined_call_operand.vmem [shape: f32[1,48], index: 2, kind: input, shape index: {}]
  %s3 = inlined_call_operand.vmem [shape: bf16[48,48], index: 3, kind: input, shape index: {}]
  %s4 = inlined_call_operand.vmem [shape: f32[1,48], index: 4, kind: input, shape index: {}]
  %s5 = inlined_call_operand.vmem [shape: bf16[48,24], index: 5, kind: input, shape index: {}]
  %s6 = inlined_call_operand.vmem [shape: f32[1,24], index: 6, kind: input, shape index: {}]
  %s7 = inlined_call_operand.vmem [shape: bf16[32,10], index: 7, kind: input, shape index: {}]
  %s8 = inlined_call_operand.hbm [shape: f32[2,24], index: 8, kind: output, shape index: {0}]
  %s9 = inlined_call_operand.hbm [shape: f32[2,10], index: 9, kind: output, shape index: {1}]
  %10 = xla_tuple %s8, %s9
  %s11 = sld [smem:[#allocation0]]
  $region50: #{pmtrans_forward.21} parent=0
    _
  %s13 = ssub.s32 1, %s11
  %s14 = scalar_select 0, %s13, %s11
  $region1: #{pmtrans_forward.21} parent=0
    #allocation2 [shape = 'u8[1024]{0}', space=vmem, size = 0x400, scoped, tag = 'output window, operand 0, single buffered']
    #allocation3 [shape = 's32[1]{0}', space=sflag, size = 0x4, scoped, tag = 'scoped memory for pmtrans_forward.21']
    #allocation4 [shape = 'u8[1024]{0}', space=vmem, size = 0x400, scoped, tag = 'output window, operand 1, single buffered']
    #allocation5 [shape = 's32[1]{0}', space=sflag, size = 0x4, scoped, tag = 'scoped memory for pmtrans_forward.21']
    %15 = vsyncpa [#allocation3], 0
    %16 = vsyncpa [#allocation5], 0
    // Predicated region
    $region2: #{pmtrans_forward.21} parent=1 // pred_check
      _
    $region3: #{pmtrans_forward.21} parent=1 // pred_check_branch
      %18 = sbr.rel (0) target = $region5
    $region4: #{pmtrans_forward.21} parent=1 // pred_region
      _
    $region5: #{pmtrans_forward.21} parent=1 // pred_fallthru
      _
    // Predicated region
    $region6: #{pmtrans_forward.21} parent=1 // pred_check
      _
    $region7: #{pmtrans_forward.21} parent=1 // pred_check_branch
      %20 = sbr.rel (0) target = $region9
    $region8: #{pmtrans_forward.21} parent=1 // pred_region
      _
    $region9: #{pmtrans_forward.21} parent=1 // pred_fallthru
      _
    // Predicated region
    $region10: #{pmtrans_forward.21} parent=1 // pred_check
      _
    $region11: #{pmtrans_forward.21} parent=1 // pred_check_branch
      %22 = sbr.rel (0) target = $region13
    $region12: #{pmtrans_forward.21} parent=1 // pred_region
      _
    $region13: #{pmtrans_forward.21} parent=1 // pred_fallthru
      _
    // Predicated region
    $region14: #{pmtrans_forward.21} parent=1 // pred_check
      _
    $region15: #{pmtrans_forward.21} parent=1 // pred_check_branch
      %24 = sbr.rel (0) target = $region17
    $region16: #{pmtrans_forward.21} parent=1 // pred_region
      _
    $region17: #{pmtrans_forward.21} parent=1 // pred_fallthru
      _
    // Predicated region
    $region18: #{pmtrans_forward.21} parent=1 // pred_check
      _
    $region19: #{pmtrans_forward.21} parent=1 // pred_check_branch
      %26 = sbr.rel (0) target = $region21
    $region20: #{pmtrans_forward.21} parent=1 // pred_region
      _
    $region21: #{pmtrans_forward.21} parent=1 // pred_fallthru
      _
    // Predicated region
    $region22: #{pmtrans_forward.21} parent=1 // pred_check
      _
    $region23: #{pmtrans_forward.21} parent=1 // pred_check_branch
      %28 = sbr.rel (0) target = $region25
    $region24: #{pmtrans_forward.21} parent=1 // pred_region
      _
    $region25: #{pmtrans_forward.21} parent=1 // pred_fallthru
      _
    // Predicated region
    $region26: #{pmtrans_forward.21} parent=1 // pred_check
      _
    $region27: #{pmtrans_forward.21} parent=1 // pred_check_branch
      %30 = sbr.rel (0) target = $region29
    $region28: #{pmtrans_forward.21} parent=1 // pred_region
      _
    $region29: #{pmtrans_forward.21} parent=1 // pred_fallthru
      _
    // Predicated region
    $region30: #{pmtrans_forward.21} parent=1 // pred_check
      _
    $region31: #{pmtrans_forward.21} parent=1 // pred_check_branch
      %32 = sbr.rel (0) target = $region33
    $region32: #{pmtrans_forward.21} parent=1 // pred_region
      _
    $region33: #{pmtrans_forward.21} parent=1 // pred_fallthru
      _
    %v34 = vld [vmem:[%s0] sm:$0x3]
    %v35 = vpack.c.bf16 %v34, %v34
    %v36 = vld [vmem:[%s1] sm:$0xf]
    %v37 = vld [vmem:[%s1 + $0x4] sm:$0xf]
    %v38 = vld [vmem:[%s1 + $0x8] sm:$0xf]
    %v39 = vld [vmem:[%s1 + $0xc] sm:$0xf]
    %v40 = vld [vmem:[%s2] sm:$0x1]
    %v42 = vlaneseq
    %v43 = vshrl.u32 %v42, 7
    %v44 = vsub.s32 0, %v43
    %v45 = vrot.slane %v40, %v44
    %v51 = vunpack.c.l.b16 %v36
    %v52 = vunpack.c.l.b16 %v37
    %v53 = vunpack.c.l.b16 %v38
    %v54 = vunpack.c.l.b16 %v39
    %v55 = vpack.c.b16 %v52, %v51
    %v56 = vpack.c.b16 %v54, %v53
    %vm59 = vcmask 261120
    %v61 = vsel %vm59, %v35, 0
    %63 = vmatprep.subr.bf16.mxu0 0
    %64 = vmatpush1.bf16.msra.mxu0 %v55
    %65 = vmatprep.subr.bf16.mxu0 0
    %66 = vmatpush1.bf16.msra.mxu0 %v56
    %67 = vmatprep.subr.bf16.mxu0 0
    %68 = vmatpush1.bf16.msra.mxu0 0
    %69 = vmatprep.subr.bf16.mxu0 0
    %70 = vmatpush1.bf16.msra.mxu0 0
    %71 = vmatprep.subr.bf16.mxu0 0
    %72 = vmatpush1.bf16.msra.mxu0 0
    %73 = vmatprep.subr.bf16.mxu0 0
    %74 = vmatpush1.bf16.msra.mxu0 0
    %75 = vmatprep.subr.bf16.mxu0 0
    %76 = vmatpush1.bf16.msra.mxu0 0
    %77 = vmatprep.subr.bf16.mxu0 0
    %78 = vmatpush1.bf16.msra.mxu0 0
    %79 = vmatprep.subr.bf16.mxu0 0
    %80 = vmatpush1.bf16.msra.mxu0 0
    %81 = vmatprep.subr.bf16.mxu0 0
    %82 = vmatpush1.bf16.msra.mxu0 0
    %83 = vmatprep.subr.bf16.mxu0 0
    %84 = vmatpush1.bf16.msra.mxu0 0
    %85 = vmatprep.subr.bf16.mxu0 0
    %86 = vmatpush1.bf16.msra.mxu0 0
    %87 = vmatprep.subr.bf16.mxu0 0
    %88 = vmatpush1.bf16.msra.mxu0 0
    %89 = vmatprep.subr.bf16.mxu0 0
    %90 = vmatpush1.bf16.msra.mxu0 0
    %91 = vmatprep.subr.bf16.mxu0 0
    %92 = vmatpush1.bf16.msra.mxu0 0
    %93 = vmatprep.subr.bf16.mxu0 0
    %94 = vmatpush1.bf16.msra.mxu0 0
    %95 = vmatprep.mubr.bf16.mxu0 0
    %96 = vmatmul.mubr.bf16.gmra.mrb[0].mxu0 %v61
    %v97 = vpop.f32.mrb[0].mxu0
    %v98 = vadd.f32 %v45, %v97
    %v99 = vpop.f32.mrb[0].mxu0
    %v100 = vpop.f32.mrb[0].mxu0
    %v101 = vpop.f32.mrb[0].mxu0
    %102 = vdwg.mxu0
    %v103 = vmul.f32 %v98, 0.5
    %v104 = vmul.f32 %v98, %v98
    %v105 = vmul.f32 %v104, %v98
    %v106 = vmul.f32 %v105, 0.044715
    %v107 = vadd.f32 %v98, %v106
    %v108 = vmul.f32 %v107, 0.7978846
    %v109 = vtanh.pop %v108
    %v110 = vadd.f32 %v109, 1.0
    %v111 = vmul.f32 %v103, %v110
    %v112 = vpack.c.bf16 %v111, %v111
    %v113 = vld [vmem:[%s3] sm:$0xf]
    %v114 = vld [vmem:[%s3 + $0x4] sm:$0xf]
    %v115 = vld [vmem:[%s3 + $0x8] sm:$0xf]
    %v116 = vld [vmem:[%s3 + $0xc] sm:$0xf]
    %v117 = vld [vmem:[%s3 + $0x10] sm:$0xf]
    %v118 = vld [vmem:[%s3 + $0x14] sm:$0xf]
    %v119 = vld [vmem:[%s4] sm:$0x1]
    %v121 = vlaneseq
    %v122 = vshrl.u32 %v121, 7
    %v123 = vsub.s32 0, %v122
    %v124 = vrot.slane %v119, %v123
    %v132 = vunpack.c.l.b16 %v113
    %v133 = vunpack.c.l.b16 %v114
    %v134 = vunpack.c.l.b16 %v115
    %v135 = vunpack.c.l.b16 %v116
    %v136 = vunpack.c.l.b16 %v117
    %v137 = vunpack.c.l.b16 %v118
    %v138 = vpack.c.b16 %v133, %v132
    %v139 = vpack.c.b16 %v135, %v134
    %v140 = vpack.c.b16 %v137, %v136
    %vm144 = vcmask 392192
    %v146 = vsel %vm144, %v112, 0
    %148 = vmatprep.subr.bf16.mxu0 0
    %149 = vmatpush1.bf16.msra.mxu0 %v138
    %150 = vmatprep.subr.bf16.mxu0 0
    %151 = vmatpush1.bf16.msra.mxu0 %v139
    %152 = vmatprep.subr.bf16.mxu0 0
    %153 = vmatpush1.bf16.msra.mxu0 %v140
    %154 = vmatprep.subr.bf16.mxu0 0
    %155 = vmatpush1.bf16.msra.mxu0 0
    %156 = vmatprep.subr.bf16.mxu0 0
    %157 = vmatpush1.bf16.msra.mxu0 0
    %158 = vmatprep.subr.bf16.mxu0 0
    %159 = vmatpush1.bf16.msra.mxu0 0
    %160 = vmatprep.subr.bf16.mxu0 0
    %161 = vmatpush1.bf16.msra.mxu0 0
    %162 = vmatprep.subr.bf16.mxu0 0
    %163 = vmatpush1.bf16.msra.mxu0 0
    %164 = vmatprep.subr.bf16.mxu0 0
    %165 = vmatpush1.bf16.msra.mxu0 0
    %166 = vmatprep.subr.bf16.mxu0 0
    %167 = vmatpush1.bf16.msra.mxu0 0
    %168 = vmatprep.subr.bf16.mxu0 0
    %169 = vmatpush1.bf16.msra.mxu0 0
    %170 = vmatprep.subr.bf16.mxu0 0
    %171 = vmatpush1.bf16.msra.mxu0 0
    %172 = vmatprep.subr.bf16.mxu0 0
    %173 = vmatpush1.bf16.msra.mxu0 0
    %174 = vmatprep.subr.bf16.mxu0 0
    %175 = vmatpush1.bf16.msra.mxu0 0
    %176 = vmatprep.subr.bf16.mxu0 0
    %177 = vmatpush1.bf16.msra.mxu0 0
    %178 = vmatprep.subr.bf16.mxu0 0
    %179 = vmatpush1.bf16.msra.mxu0 0
    %180 = vmatprep.mubr.bf16.mxu0 0
    %181 = vmatmul.mubr.bf16.gmra.mrb[0].mxu0 %v146
    %v182 = vpop.f32.mrb[0].mxu0
    %v183 = vadd.f32 %v124, %v182
    %v184 = vpop.f32.mrb[0].mxu0
    %v185 = vpop.f32.mrb[0].mxu0
    %v186 = vpop.f32.mrb[0].mxu0
    %187 = vdwg.mxu0
    %v188 = vmul.f32 %v183, 0.5
    %v189 = vmul.f32 %v183, %v183
    %v190 = vmul.f32 %v189, %v183
    %v191 = vmul.f32 %v190, 0.044715
    %v192 = vadd.f32 %v183, %v191
    %v193 = vmul.f32 %v192, 0.7978846
    %v194 = vtanh.pop %v193
    %v195 = vadd.f32 %v194, 1.0
    %v196 = vmul.f32 %v188, %v195
    %v197 = vpack.c.bf16 %v196, %v196
    %v198 = vld [vmem:[%s5] sm:$0xf]
    %v199 = vld [vmem:[%s5 + $0x4] sm:$0xf]
    %v200 = vld [vmem:[%s5 + $0x8] sm:$0xf]
    %v201 = vld [vmem:[%s5 + $0xc] sm:$0xf]
    %v202 = vld [vmem:[%s5 + $0x10] sm:$0xf]
    %v203 = vld [vmem:[%s5 + $0x14] sm:$0xf]
    %v204 = vld [vmem:[%s6] sm:$0x1]
    %v206 = vlaneseq
    %v207 = vshrl.u32 %v206, 7
    %v208 = vsub.s32 0, %v207
    %v209 = vrot.slane %v204, %v208
    %v217 = vunpack.c.l.b16 %v198
    %v218 = vunpack.c.l.b16 %v199
    %v219 = vunpack.c.l.b16 %v200
    %v220 = vunpack.c.l.b16 %v201
    %v221 = vunpack.c.l.b16 %v202
    %v222 = vunpack.c.l.b16 %v203
    %v223 = vpack.c.b16 %v218, %v217
    %v224 = vpack.c.b16 %v220, %v219
    %v225 = vpack.c.b16 %v222, %v221
    %v230 = vsel %vm144, %v197, 0
    %232 = vmatprep.subr.bf16.mxu0 0
    %233 = vmatpush1.bf16.msra.mxu0 %v223
    %234 = vmatprep.subr.bf16.mxu0 0
    %235 = vmatpush1.bf16.msra.mxu0 %v224
    %236 = vmatprep.subr.bf16.mxu0 0
    %237 = vmatpush1.bf16.msra.mxu0 %v225
    %238 = vmatprep.subr.bf16.mxu0 0
    %239 = vmatpush1.bf16.msra.mxu0 0
    %240 = vmatprep.subr.bf16.mxu0 0
    %241 = vmatpush1.bf16.msra.mxu0 0
    %242 = vmatprep.subr.bf16.mxu0 0
    %243 = vmatpush1.bf16.msra.mxu0 0
    %244 = vmatprep.subr.bf16.mxu0 0
    %245 = vmatpush1.bf16.msra.mxu0 0
    %246 = vmatprep.subr.bf16.mxu0 0
    %247 = vmatpush1.bf16.msra.mxu0 0
    %248 = vmatprep.subr.bf16.mxu0 0
    %249 = vmatpush1.bf16.msra.mxu0 0
    %250 = vmatprep.subr.bf16.mxu0 0
    %251 = vmatpush1.bf16.msra.mxu0 0
    %252 = vmatprep.subr.bf16.mxu0 0
    %253 = vmatpush1.bf16.msra.mxu0 0
    %254 = vmatprep.subr.bf16.mxu0 0
    %255 = vmatpush1.bf16.msra.mxu0 0
    %256 = vmatprep.subr.bf16.mxu0 0
    %257 = vmatpush1.bf16.msra.mxu0 0
    %258 = vmatprep.subr.bf16.mxu0 0
    %259 = vmatpush1.bf16.msra.mxu0 0
    %260 = vmatprep.subr.bf16.mxu0 0
    %261 = vmatpush1.bf16.msra.mxu0 0
    %262 = vmatprep.subr.bf16.mxu0 0
    %263 = vmatpush1.bf16.msra.mxu0 0
    %264 = vmatprep.mubr.bf16.mxu0 0
    %265 = vmatmul.mubr.bf16.gmra.mrb[0].mxu0 %v230
    %v266 = vpop.f32.mrb[0].mxu0
    %v267 = vadd.f32 %v209, %v266
    %v268 = vpop.f32.mrb[0].mxu0
    %v269 = vpop.f32.mrb[0].mxu0
    %v270 = vpop.f32.mrb[0].mxu0
    %271 = vdwg.mxu0
    %vm272 = vcmask 189440
    %273 = vst.msk [vmem:[#allocation2] sm:$0x3] %vm272, %v267
    %v274 = vmul.f32 %v34, %v34
    %vm275 = vcmask 254976
    %v276 = vsel %vm275, %v274, 0.0
    %277 = vadd.xlane.f32.xlu0 %v276
    %v278 = vpop.xlane.xlu0 %277
    %v279 = vrsqrt.pop %v278
    %v280 = vmul.f32 %v278, %v279
    %vm281 = vcmp.eq.f32.partialorder %v278, inf
    %v282 = vsel %vm281, %v278, %v280
    %vm283 = vcmp.eq.f32.partialorder %v278, 0.0
    %v284 = vand.u32 %v278, 2147483648
    %v285 = vsel %vm283, %v284, %v282
    %v286 = vmax.f32 %v285, 1e-12
    %v287 = vrcp.pop %v286
    %v288 = vmul.f32 %v34, %v287
    %v289 = vpack.c.bf16 %v288, %v288
    %v290 = vld [vmem:[%s7] sm:$0xf]
    %v291 = vld [vmem:[%s7 + $0x4] sm:$0xf]
    %v292 = vld [vmem:[%s7 + $0x8] sm:$0xf]
    %v293 = vld [vmem:[%s7 + $0xc] sm:$0xf]
    %v298 = vunpack.c.l.b16 %v290
    %v299 = vunpack.c.l.b16 %v291
    %v300 = vunpack.c.l.b16 %v292
    %v301 = vunpack.c.l.b16 %v293
    %v302 = vpack.c.b16 %v299, %v298
    %v303 = vpack.c.b16 %v301, %v300
    %v307 = vsel %vm59, %v289, 0
    %309 = vmatprep.subr.bf16.mxu0 0
    %310 = vmatpush1.bf16.msra.mxu0 %v302
    %311 = vmatprep.subr.bf16.mxu0 0
    %312 = vmatpush1.bf16.msra.mxu0 %v303
    %313 = vmatprep.subr.bf16.mxu0 0
    %314 = vmatpush1.bf16.msra.mxu0 0
    %315 = vmatprep.subr.bf16.mxu0 0
    %316 = vmatpush1.bf16.msra.mxu0 0
    %317 = vmatprep.subr.bf16.mxu0 0
    %318 = vmatpush1.bf16.msra.mxu0 0
    %319 = vmatprep.subr.bf16.mxu0 0
    %320 = vmatpush1.bf16.msra.mxu0 0
    %321 = vmatprep.subr.bf16.mxu0 0
    %322 = vmatpush1.bf16.msra.mxu0 0
    %323 = vmatprep.subr.bf16.mxu0 0
    %324 = vmatpush1.bf16.msra.mxu0 0
    %325 = vmatprep.subr.bf16.mxu0 0
    %326 = vmatpush1.bf16.msra.mxu0 0
    %327 = vmatprep.subr.bf16.mxu0 0
    %328 = vmatpush1.bf16.msra.mxu0 0
    %329 = vmatprep.subr.bf16.mxu0 0
    %330 = vmatpush1.bf16.msra.mxu0 0
    %331 = vmatprep.subr.bf16.mxu0 0
    %332 = vmatpush1.bf16.msra.mxu0 0
    %333 = vmatprep.subr.bf16.mxu0 0
    %334 = vmatpush1.bf16.msra.mxu0 0
    %335 = vmatprep.subr.bf16.mxu0 0
    %336 = vmatpush1.bf16.msra.mxu0 0
    %337 = vmatprep.subr.bf16.mxu0 0
    %338 = vmatpush1.bf16.msra.mxu0 0
    %339 = vmatprep.subr.bf16.mxu0 0
    %340 = vmatpush1.bf16.msra.mxu0 0
    %341 = vmatprep.mubr.bf16.mxu0 0
    %342 = vmatmul.mubr.bf16.gmra.mrb[0].mxu0 %v307
    %v343 = vpop.f32.mrb[0].mxu0
    %v344 = vadd.f32 0.0, %v343
    %v345 = vpop.f32.mrb[0].mxu0
    %v346 = vpop.f32.mrb[0].mxu0
    %v347 = vpop.f32.mrb[0].mxu0
    %348 = vdwg.mxu0
    %vm349 = vcmask 74752
    %350 = vst.msk [vmem:[#allocation4] sm:$0x3] %vm349, %v344
    // Predicated region
    $region34: #{pmtrans_forward.21} parent=1 // pred_check
      _
    $region35: #{pmtrans_forward.21} parent=1 // pred_check_branch
      %352 = sbr.rel (0) target = $region37
    $region36: #{pmtrans_forward.21} parent=1 // pred_region
      %s354 = ssub.s32 32, 32
      %355 = vsyncadd [#allocation3], %s354
      %s357 = sshll.u32 [#allocation2], 4
      %s358 = int_to_ptr.vmem [resolvable:$true] %s357
      %360 = dma.vmem_to_hbm [thread:$0]  %s358, 32, %s8, [#allocation3]
    $region37: #{pmtrans_forward.21} parent=1 // pred_fallthru
      _
    // Predicated region
    $region38: #{pmtrans_forward.21} parent=1 // pred_check
      _
    $region39: #{pmtrans_forward.21} parent=1 // pred_check_branch
      %362 = sbr.rel (0) target = $region41
    $region40: #{pmtrans_forward.21} parent=1 // pred_region
      %s364 = ssub.s32 32, 32
      %365 = vsyncadd [#allocation5], %s364
      %s367 = sshll.u32 [#allocation4], 4
      %s368 = int_to_ptr.vmem [resolvable:$true] %s367
      %370 = dma.vmem_to_hbm [thread:$0]  %s368, 32, %s9, [#allocation5]
    $region41: #{pmtrans_forward.21} parent=1 // pred_fallthru
      _
    // Predicated region
    $region42: #{pmtrans_forward.21} parent=1 // pred_check
      _
    $region43: #{pmtrans_forward.21} parent=1 // pred_check_branch
      %372 = sbr.rel (0) target = $region45
    $region44: #{pmtrans_forward.21} parent=1 // pred_region
      %373 = dma.done [#allocation3], 32
    $region45: #{pmtrans_forward.21} parent=1 // pred_fallthru
      _
    // Predicated region
    $region46: #{pmtrans_forward.21} parent=1 // pred_check
      _
    $region47: #{pmtrans_forward.21} parent=1 // pred_check_branch
      %375 = sbr.rel (0) target = $region49
    $region48: #{pmtrans_forward.21} parent=1 // pred_region
      %376 = dma.done [#allocation5], 32
    $region49: #{pmtrans_forward.21} parent=1 // pred_fallthru
      _
    %377 = vsyncpa [#allocation3], 1
    %378 = vsyncpa [#allocation5], 1

</llo_original>
